<compile_context>
chip_gen: v6e
topology: v6e:2x2x1
jax: 0.10.0
libtpu: 0.0.40
codegen_flags: <defaults>
</compile_context>

<pallas_src>
import math

import jax
import jax.numpy as jnp
from jax import lax
from jax.experimental import pallas as pl
from jax.experimental.pallas import tpu as pltpu


def _round_up(x, m):
    return ((x + m - 1) // m) * m


def _vmem_capacity_bytes():
    """Physical VMEM per TensorCore, with a conservative fallback."""
    try:
        info = pltpu.get_tpu_info()
        cap = int(getattr(info, "vmem_capacity_bytes", 0) or 0)
        if cap > 0:
            return cap
    except Exception:
        pass
    return 64 * 1024 * 1024  # v7x per-TC size: a safe lower bound for all gens


def _pick_chunk(l, cap, fits):
    """Largest chunk <= cap that divides l, is a multiple of 8 and fits VMEM."""
    cap = max(8, min(cap, l))
    if l <= cap and fits(l):
        return l
    c = (cap // 8) * 8
    while c >= 8:
        if l % c == 0 and fits(c):
            return c
        c -= 8
    return l  # fall back to a single whole-sequence chunk


def _make_mamba_kernel(*, chunk, n_chunks, slab, d_inner, d_state, dt_rank,
                       d_conv, carry, res_off, c_off, dt_off):
    n_slabs = chunk // slab
    use_mxu_dt = dt_rank >= 8

    def sigmoid(v):
        # exact reciprocal (approx=False): keeps the SiLU gate accurate
        return pl.reciprocal(1.0 + jnp.exp(-v), approx=False)

    def kernel(x_ref, w_in_ref, conv_w_ref, conv_b_ref, w_x_ref, w_dt_ref,
               b_dt_ref, neg_a_t_ref, d_ref, w_out_ref, o_ref,
               hist_scr, state_scr, y_scr, delta_scr, du_scr, b_scr, c_scr):
        ci = pl.program_id(1)

        # Reset the cross-chunk carries at the start of every batch element.
        @pl.when(ci == 0)
        def _init():
            hist_scr[0:carry, :] = jnp.zeros((carry, d_inner), jnp.float32)
            state_scr[...] = jnp.zeros_like(state_scr)

        # ---- fused in_proj: [xz | pad | res] in one bf16 MXU matmul ----
        x_bf = x_ref[0].astype(jnp.bfloat16)                      # (chunk, d_model)
        xz_res = jnp.dot(x_bf, w_in_ref[...],
                         preferred_element_type=jnp.float32)
        xz = xz_res[:, :d_inner]                                  # (chunk, d_inner)
        res = xz_res[:, res_off:res_off + d_inner]

        # ---- causal depthwise conv1d via shifted reads of a VMEM history ----
        # hist rows [0, carry) hold the previous chunk's tail (zeros at ci==0);
        # rows [carry, carry+chunk) hold the current chunk.
        hist_scr[carry:, :] = xz
        base = carry - (d_conv - 1)
        conv = xz * conv_w_ref[d_conv - 1:d_conv, :]              # aligned current tap
        for k in range(d_conv - 1):                               # shifted taps
            conv = conv + (hist_scr[base + k:base + k + chunk, :]
                           * conv_w_ref[k:k + 1, :])
        conv = conv + conv_b_ref[...]
        if n_chunks > 1:                                          # carry the tail
            hist_scr[0:carry, :] = xz[chunk - carry:, :]
        u = conv * sigmoid(conv)                                  # SiLU

        # ---- fused x_proj: [B | pad | C | pad | dt] (lane-aligned segments) ----
        x_dbl = jnp.dot(u.astype(jnp.bfloat16), w_x_ref[...],
                        preferred_element_type=jnp.float32)
        Bm = x_dbl[:, :d_state]                                   # (chunk, d_state)
        Cm = x_dbl[:, c_off:c_off + d_state]

        # ---- dt_proj + softplus ----
        if use_mxu_dt:
            dlr = x_dbl[:, dt_off:dt_off + dt_rank].astype(jnp.bfloat16)
            dt = jnp.dot(dlr, w_dt_ref[...], preferred_element_type=jnp.float32)
        else:
            # K < 8 matmul wastes an MXU pass; do the outer product on the VPU.
            dt = x_dbl[:, dt_off:dt_off + 1] * w_dt_ref[0:1, :]
            for k in range(1, dt_rank):
                dt = dt + x_dbl[:, dt_off + k:dt_off + k + 1] * w_dt_ref[k:k + 1, :]
        dt = dt + b_dt_ref[...]
        delta = jnp.maximum(dt, 0.0) + jnp.log(1.0 + jnp.exp(-jnp.abs(dt)))

        # Stage the per-chunk scan operands in VMEM so slabs can be sliced with
        # dynamic (pl.ds) starts inside the fori_loop.
        delta_scr[...] = delta
        du_scr[...] = delta * u
        b_scr[...] = Bm
        c_scr[...] = Cm

        neg_a_t = neg_a_t_ref[...]                                # (d_state, d_inner)

        # ---- selective scan: fori over slabs, slab precompute off the chain ----
        def slab_step(row0, state):
            delta_s = delta_scr[pl.ds(row0, slab), :]             # (slab, d_inner)
            du_s = du_scr[pl.ds(row0, slab), :]
            b_s = b_scr[pl.ds(row0, slab), :]                     # (slab, d_state)
            c_s = c_scr[pl.ds(row0, slab), :]
            # EUP exp + lane->sublane B/C relayouts happen once per slab, not
            # once per timestep, so they overlap the serial FMA chain.
            dA = jnp.exp(delta_s[:, None, :] * neg_a_t[None, :, :])   # (slab,n,d)
            dBu = b_s[:, :, None] * du_s[:, None, :]                  # (slab,n,d)
            c_b = jnp.broadcast_to(c_s[:, :, None], (slab, d_state, d_inner))
            rows = []
            for i in range(slab):                                 # bounded unroll
                state = dA[i] * state + dBu[i]                    # VPU FMA only
                rows.append(jnp.sum(state * c_b[i], axis=0, keepdims=True))
            y_scr[pl.ds(row0, slab), :] = jnp.concatenate(rows, axis=0)
            return state

        state0 = state_scr[...]
        if n_slabs <= 2:
            state = state0
            for s in range(n_slabs):
                state = slab_step(s * slab, state)
        else:
            state = lax.fori_loop(
                0, n_slabs,
                lambda s, st: slab_step(pl.multiple_of(s * slab, slab), st),
                state0)
        if n_chunks > 1:
            state_scr[...] = state

        # ---- D skip, SiLU(res) gate, out_proj ----
        y = y_scr[...] + u * d_ref[...]
        gate = res * sigmoid(res)
        out = jnp.dot((y * gate).astype(jnp.bfloat16), w_out_ref[...],
                      preferred_element_type=jnp.float32)
        o_ref[0] = out.astype(o_ref.dtype)

    return kernel


def mamba_block_forward(x, params, chunk_cap=256, slab_cap=16):
    b, l, d_model = x.shape
    d_inner = params["w_in_x"].shape[1]
    d_state = params["a_log"].shape[1]
    dt_rank = params["w_x_dt"].shape[1]
    d_conv = params["conv_w"].shape[0]

    carry = max(8, _round_up(d_conv - 1, 8))     # conv history rows (tile aligned)

    # ---- one-time weight layout work: fuse, 128-lane pad, bf16 cast ----
    res_off = _round_up(d_inner, 128)
    in_cols = _round_up(res_off + d_inner, 128)
    w_in = jnp.zeros((d_model, in_cols), jnp.float32)
    w_in = w_in.at[:, :d_inner].set(params["w_in_x"])
    w_in = w_in.at[:, res_off:res_off + d_inner].set(params["w_in_res"])
    w_in = w_in.astype(jnp.bfloat16)

    c_off = _round_up(d_state, 128)
    dt_off = c_off + _round_up(d_state, 128)
    wx_cols = dt_off + _round_up(dt_rank, 128)
    w_x = jnp.zeros((d_inner, wx_cols), jnp.float32)
    w_x = w_x.at[:, :d_state].set(params["w_x_b"])
    w_x = w_x.at[:, c_off:c_off + d_state].set(params["w_x_c"])
    w_x = w_x.at[:, dt_off:dt_off + dt_rank].set(params["w_x_dt"])
    w_x = w_x.astype(jnp.bfloat16)

    use_mxu_dt = dt_rank >= 8
    w_dt = params["w_dt"].astype(jnp.bfloat16 if use_mxu_dt else jnp.float32)
    w_out = params["w_out"].astype(jnp.bfloat16)
    neg_a_t = -jnp.exp(params["a_log"]).T        # A^T = -exp(A_log)^T, (d_state, d_inner)

    weights = [w_in, params["conv_w"], params["conv_b"], w_x, w_dt,
               params["b_dt"], neg_a_t, params["d"], w_out]

    # ---- VMEM-budgeted chunk selection (v7x 64 MiB/TC, v5e/v6e 128 MiB) ----
    vmem_cap = _vmem_capacity_bytes()
    vmem_budget = int(vmem_cap * 0.70)
    weight_bytes = 2 * sum(int(w.size) * w.dtype.itemsize for w in weights)

    def fits(chunk):
        slab = max(1, min(slab_cap, chunk))
        est = weight_bytes
        est += 2 * 2 * chunk * d_model * 4              # in/out blocks, double-buffered
        est += (carry + chunk) * d_inner * 4            # conv history scratch
        est += d_state * d_inner * 4                    # state scratch
        est += 4 * chunk * d_inner * 4                  # y/delta/du scratch + u temp
        est += 2 * chunk * d_state * 4                  # B/C scratch
        est += chunk * (in_cols + wx_cols) * 4          # matmul result temporaries
        est += 3 * chunk * d_inner * 4                  # conv / gate / y*gate temps
        est += 3 * slab * d_state * d_inner * 4         # dA / dBu / C-bcast slabs
        return est <= vmem_budget

    chunk = _pick_chunk(l, chunk_cap, fits)
    if l % chunk != 0:
        chunk = l
    n_chunks = l // chunk
    slab = max(1, min(slab_cap, chunk))
    while slab > 1 and chunk % slab != 0:
        slab -= 1
    assert chunk * n_chunks == l
    assert n_chunks == 1 or (chunk % 8 == 0 and chunk >= carry)

    kernel = _make_mamba_kernel(
        chunk=chunk, n_chunks=n_chunks, slab=slab, d_inner=d_inner,
        d_state=d_state, dt_rank=dt_rank, d_conv=d_conv, carry=carry,
        res_off=res_off, c_off=c_off, dt_off=dt_off)

    def _const_spec(shape):
        nd = len(shape)
        return pl.BlockSpec(shape, lambda bi, ci, _nd=nd: (0,) * _nd)

    in_specs = [pl.BlockSpec((1, chunk, d_model), lambda bi, ci: (bi, ci, 0))]
    in_specs += [_const_spec(w.shape) for w in weights]

    grid_spec = pltpu.PrefetchScalarGridSpec(
        num_scalar_prefetch=0,
        grid=(b, n_chunks),
        in_specs=in_specs,
        out_specs=pl.BlockSpec((1, chunk, d_model), lambda bi, ci: (bi, ci, 0)),
        scratch_shapes=[
            pltpu.VMEM((carry + chunk, d_inner), jnp.float32),   # conv history + chunk
            pltpu.VMEM((d_state, d_inner), jnp.float32),         # SSM state carry
            pltpu.VMEM((chunk, d_inner), jnp.float32),           # scan output y
            pltpu.VMEM((chunk, d_inner), jnp.float32),           # delta
            pltpu.VMEM((chunk, d_inner), jnp.float32),           # delta * u
            pltpu.VMEM((chunk, d_state), jnp.float32),           # B
            pltpu.VMEM((chunk, d_state), jnp.float32),           # C
        ],
    )

    vmem_limit = int(min(max(vmem_cap * 0.85, 32 * 1024 * 1024),
                         128 * 1024 * 1024))

    return pl.pallas_call(
        kernel,
        out_shape=jax.ShapeDtypeStruct((b, l, d_model), jnp.float32),
        grid_spec=grid_spec,
        compiler_params=pltpu.CompilerParams(
            dimension_semantics=("parallel", "arbitrary"),
            vmem_limit_bytes=vmem_limit),
    )(x, *weights)


def init_params(key, d_model, d_state=64, expand=2, d_conv=4):
    """Deterministic synthetic parameters, shapes per MambaBlock.__init__."""
    d_inner = int(expand * d_model)
    dt_rank = math.ceil(d_model / 16)
    ks = jax.random.split(key, 7)

    def lin(k, fan_in, shape):
        bound = 1.0 / math.sqrt(fan_in)
        return jax.random.uniform(k, shape, jnp.float32, -bound, bound)

    w_in = lin(ks[0], d_model, (d_model, 2 * d_inner))          # in_proj.weight^T
    conv_w = lin(ks[1], d_conv, (d_conv, d_inner))              # depthwise taps, (tap, ch)
    conv_b = lin(ks[2], d_conv, (1, d_inner))                   # conv1d.bias
    w_x = lin(ks[3], d_inner, (d_inner, dt_rank + 2 * d_state)) # x_proj.weight^T
    w_dt = lin(ks[4], dt_rank, (dt_rank, d_inner))              # dt_proj.weight^T
    b_dt = lin(ks[5], dt_rank, (1, d_inner))                    # dt_proj.bias
    w_out = lin(ks[6], d_inner, (d_inner, d_model))             # out_proj.weight^T
    a_log = jnp.log(jnp.tile(jnp.arange(1, d_state + 1, dtype=jnp.float32)[None, :],
                             (d_inner, 1)))                     # A_log = log(repeat(1..n))
    d_param = jnp.ones((1, d_inner), jnp.float32)               # D

    return {
        "w_in_x": w_in[:, :d_inner], "w_in_res": w_in[:, d_inner:],
        "conv_w": conv_w, "conv_b": conv_b,
        "w_x_dt": w_x[:, :dt_rank],
        "w_x_b": w_x[:, dt_rank:dt_rank + d_state],
        "w_x_c": w_x[:, dt_rank + d_state:],
        "w_dt": w_dt, "b_dt": b_dt,
        "a_log": a_log, "d": d_param, "w_out": w_out,
    }


def mamba_reference(x, params):
    """Pure-JAX reference matching the PyTorch forward pass semantics."""
    hp = jax.lax.Precision.HIGHEST
    b, l, d_model = x.shape
    d_conv = params["conv_w"].shape[0]
    d_inner = params["w_in_x"].shape[1]

    xz = jnp.dot(x, params["w_in_x"], precision=hp)
    res = jnp.dot(x, params["w_in_res"], precision=hp)

    xz_pad = jnp.pad(xz, ((0, 0), (d_conv - 1, 0), (0, 0)))
    conv = sum(xz_pad[:, k:k + l, :] * params["conv_w"][k][None, None, :]
               for k in range(d_conv)) + params["conv_b"][None]
    u = jax.nn.silu(conv)

    delta_lr = jnp.dot(u, params["w_x_dt"], precision=hp)
    Bm = jnp.dot(u, params["w_x_b"], precision=hp)
    Cm = jnp.dot(u, params["w_x_c"], precision=hp)
    delta = jax.nn.softplus(jnp.dot(delta_lr, params["w_dt"], precision=hp)
                            + params["b_dt"][None])
    A = -jnp.exp(params["a_log"])

    dA = jnp.exp(jnp.einsum("bld,dn->bldn", delta, A))
    dBu = jnp.einsum("bld,bln,bld->bldn", delta, Bm, u)

    def step(state, inputs):
        dA_i, dBu_i, C_i = inputs
        state = dA_i * state + dBu_i
        y_i = jnp.einsum("bdn,bn->bd", state, C_i, precision=hp)
        return state, y_i

    state0 = jnp.zeros((b, d_inner, params["a_log"].shape[1]), jnp.float32)
    _, ys = jax.lax.scan(step, state0,
                         (dA.transpose(1, 0, 2, 3), dBu.transpose(1, 0, 2, 3),
                          Cm.transpose(1, 0, 2)))
    y = ys.transpose(1, 0, 2) + u * params["d"][None]
    out = jnp.dot(y * jax.nn.silu(res), params["w_out"], precision=hp)
    return out


if __name__ == "__main__":
    d_model = 16        # -> d_inner = 32, dt_rank = 1, d_state = 64, d_conv = 4
    batch, seq = 2, 384  # -> 2 chunks of 192 (carried conv/SSM state) x 12 slabs of 16

    key = jax.random.PRNGKey(0)
    pkey, xkey = jax.random.split(key)
    params = init_params(pkey, d_model)
    x = jax.random.normal(xkey, (batch, seq, d_model), jnp.float32)

    out = mamba_block_forward(x, params)
    out = jax.block_until_ready(out)
    assert out.shape == (batch, seq, d_model)

    ref = mamba_reference(x, params)
    scale = float(jnp.max(jnp.abs(ref)))
    max_err = float(jnp.max(jnp.abs(out - ref)))
    # bf16 MXU operands with f32 accumulation -> ~1% relative error budget
    assert max_err <= 1e-4 + 2e-2 * scale, (max_err, scale)

    print("KERNEL_OK")
</pallas_src>

<mosaic_0001>
module attributes {stable_mosaic.version = 11 : i64} {
  func.func @kernel(%arg0: i32, %arg1: i32, %arg2: memref<1x192x16xf32, #tpu.memory_space<vmem>>, %arg3: memref<16x256xbf16, #tpu.memory_space<vmem>>, %arg4: memref<4x32xf32, #tpu.memory_space<vmem>>, %arg5: memref<1x32xf32, #tpu.memory_space<vmem>>, %arg6: memref<32x384xbf16, #tpu.memory_space<vmem>>, %arg7: memref<1x32xf32, #tpu.memory_space<vmem>>, %arg8: memref<1x32xf32, #tpu.memory_space<vmem>>, %arg9: memref<64x32xf32, #tpu.memory_space<vmem>>, %arg10: memref<1x32xf32, #tpu.memory_space<vmem>>, %arg11: memref<32x16xbf16, #tpu.memory_space<vmem>>, %arg12: memref<1x192x16xf32, #tpu.memory_space<vmem>>, %arg13: memref<200x32xf32, #tpu.memory_space<vmem>>, %arg14: memref<64x32xf32, #tpu.memory_space<vmem>>, %arg15: memref<192x32xf32, #tpu.memory_space<vmem>>, %arg16: memref<192x32xf32, #tpu.memory_space<vmem>>, %arg17: memref<192x32xf32, #tpu.memory_space<vmem>>, %arg18: memref<192x64xf32, #tpu.memory_space<vmem>>, %arg19: memref<192x64xf32, #tpu.memory_space<vmem>>) attributes {dimension_semantics = [#tpu.dimension_semantics<parallel>, #tpu.dimension_semantics<arbitrary>], iteration_bounds = array<i64: 2, 2>, scalar_prefetch = 0 : i64, scratch_operands = 7 : i64, tpu.core_type = #tpu.core_type<tc>, window_params = [{transform_indices = @transform_0, window_bounds = array<i64: 1, 192, 16>}, {pipeline_mode = #tpu.pipeline_mode<synchronous>, transform_indices = @transform_1, window_bounds = array<i64: 16, 256>}, {pipeline_mode = #tpu.pipeline_mode<synchronous>, transform_indices = @transform_2, window_bounds = array<i64: 4, 32>}, {pipeline_mode = #tpu.pipeline_mode<synchronous>, transform_indices = @transform_3, window_bounds = array<i64: 1, 32>}, {pipeline_mode = #tpu.pipeline_mode<synchronous>, transform_indices = @transform_4, window_bounds = array<i64: 32, 384>}, {pipeline_mode = #tpu.pipeline_mode<synchronous>, transform_indices = @transform_5, window_bounds = array<i64: 1, 32>}, {pipeline_mode = #tpu.pipeline_mode<synchronous>, transform_indices = @transform_6, window_bounds = array<i64: 1, 32>}, {pipeline_mode = #tpu.pipeline_mode<synchronous>, transform_indices = @transform_7, window_bounds = array<i64: 64, 32>}, {pipeline_mode = #tpu.pipeline_mode<synchronous>, transform_indices = @transform_8, window_bounds = array<i64: 1, 32>}, {pipeline_mode = #tpu.pipeline_mode<synchronous>, transform_indices = @transform_9, window_bounds = array<i64: 32, 16>}, {transform_indices = @transform_10, window_bounds = array<i64: 1, 192, 16>}]} {
    %c0_i32 = arith.constant 0 : i32
    %0 = arith.cmpi eq, %arg1, %c0_i32 : i32
    %1 = arith.extui %0 : i1 to i32
    %c0_i32_0 = arith.constant 0 : i32
    %2 = arith.cmpi ne, %1, %c0_i32_0 : i32
    scf.if %2 {
      %cst_58 = arith.constant 0.000000e+00 : f32
      %93 = vector.broadcast %cst_58 : f32 to vector<8x32xf32>
      %c0_59 = arith.constant 0 : index
      %c0_60 = arith.constant 0 : index
      %94 = vector.load %arg13[%c0_59, %c0_60] : memref<200x32xf32, #tpu.memory_space<vmem>>, vector<8x32xf32>
      tpu.vector_store %arg13[%c0_59, %c0_60], %93 {strides = array<i32>} : memref<200x32xf32, #tpu.memory_space<vmem>>, vector<8x32xf32>,
      %cst_61 = arith.constant 0.000000e+00 : f32
      %95 = vector.broadcast %cst_61 : f32 to vector<64x32xf32>
      %c0_62 = arith.constant 0 : index
      %c0_63 = arith.constant 0 : index
      %96 = vector.load %arg14[%c0_62, %c0_63] : memref<64x32xf32, #tpu.memory_space<vmem>>, vector<64x32xf32>
      tpu.vector_store %arg14[%c0_62, %c0_63], %95 {strides = array<i32>} : memref<64x32xf32, #tpu.memory_space<vmem>>, vector<64x32xf32>,
    } else {
    }
    %c0 = arith.constant 0 : index
    %c0_1 = arith.constant 0 : index
    %c0_2 = arith.constant 0 : index
    %3 = vector.load %arg2[%c0, %c0_1, %c0_2] : memref<1x192x16xf32, #tpu.memory_space<vmem>>, vector<1x192x16xf32>
    %4 = vector.shape_cast %3 : vector<1x192x16xf32> to vector<192x16xf32>
    %5 = arith.truncf %4 : vector<192x16xf32> to vector<192x16xbf16>
    %c0_3 = arith.constant 0 : index
    %c0_4 = arith.constant 0 : index
    %6 = vector.load %arg3[%c0_3, %c0_4] : memref<16x256xbf16, #tpu.memory_space<vmem>>, vector<16x256xbf16>
    %cst = arith.constant dense<0.000000e+00> : vector<192x256xf32>
    %7 = tpu.matmul %5, %6, %cst {dimension_numbers = #tpu.dot_dimension_numbers<[1], [0], [0], [1], [0, 0, 1, 1], [], []>} : vector<192x16xbf16>, vector<16x256xbf16>, vector<192x256xf32> -> vector<192x256xf32>
    %8 = vector.extract_strided_slice %7 {offsets = [0, 0], sizes = [192, 32], strides = [1, 1]} : vector<192x256xf32> to vector<192x32xf32>
    %9 = vector.extract_strided_slice %7 {offsets = [0, 128], sizes = [192, 32], strides = [1, 1]} : vector<192x256xf32> to vector<192x32xf32>
    %c8 = arith.constant 8 : index
    %c0_5 = arith.constant 0 : index
    %10 = vector.load %arg13[%c8, %c0_5] : memref<200x32xf32, #tpu.memory_space<vmem>>, vector<192x32xf32>
    tpu.vector_store %arg13[%c8, %c0_5], %8 {strides = array<i32>} : memref<200x32xf32, #tpu.memory_space<vmem>>, vector<192x32xf32>,
    %c3 = arith.constant 3 : index
    %c0_6 = arith.constant 0 : index
    %11 = vector.load %arg4[%c3, %c0_6] : memref<4x32xf32, #tpu.memory_space<vmem>>, vector<1x32xf32>
    %12 = vector.broadcast %11 : vector<1x32xf32> to vector<192x32xf32>
    %13 = arith.mulf %8, %12 : vector<192x32xf32>
    %c5 = arith.constant 5 : index
    %c0_7 = arith.constant 0 : index
    %14 = vector.load %arg13[%c5, %c0_7] : memref<200x32xf32, #tpu.memory_space<vmem>>, vector<192x32xf32>
    %c0_8 = arith.constant 0 : index
    %c0_9 = arith.constant 0 : index
    %15 = vector.load %arg4[%c0_8, %c0_9] : memref<4x32xf32, #tpu.memory_space<vmem>>, vector<1x32xf32>
    %16 = vector.broadcast %15 : vector<1x32xf32> to vector<192x32xf32>
    %17 = arith.mulf %14, %16 : vector<192x32xf32>
    %18 = arith.addf %13, %17 : vector<192x32xf32>
    %c6 = arith.constant 6 : index
    %c0_10 = arith.constant 0 : index
    %19 = vector.load %arg13[%c6, %c0_10] : memref<200x32xf32, #tpu.memory_space<vmem>>, vector<192x32xf32>
    %c1 = arith.constant 1 : index
    %c0_11 = arith.constant 0 : index
    %20 = vector.load %arg4[%c1, %c0_11] : memref<4x32xf32, #tpu.memory_space<vmem>>, vector<1x32xf32>
    %21 = vector.broadcast %20 : vector<1x32xf32> to vector<192x32xf32>
    %22 = arith.mulf %19, %21 : vector<192x32xf32>
    %23 = arith.addf %18, %22 : vector<192x32xf32>
    %c7 = arith.constant 7 : index
    %c0_12 = arith.constant 0 : index
    %24 = vector.load %arg13[%c7, %c0_12] : memref<200x32xf32, #tpu.memory_space<vmem>>, vector<192x32xf32>
    %c2 = arith.constant 2 : index
    %c0_13 = arith.constant 0 : index
    %25 = vector.load %arg4[%c2, %c0_13] : memref<4x32xf32, #tpu.memory_space<vmem>>, vector<1x32xf32>
    %26 = vector.broadcast %25 : vector<1x32xf32> to vector<192x32xf32>
    %27 = arith.mulf %24, %26 : vector<192x32xf32>
    %28 = arith.addf %23, %27 : vector<192x32xf32>
    %c0_14 = arith.constant 0 : index
    %c0_15 = arith.constant 0 : index
    %29 = vector.load %arg5[%c0_14, %c0_15] : memref<1x32xf32, #tpu.memory_space<vmem>>, vector<1x32xf32>
    %30 = vector.broadcast %29 : vector<1x32xf32> to vector<192x32xf32>
    %31 = arith.addf %28, %30 : vector<192x32xf32>
    %32 = vector.extract_strided_slice %8 {offsets = [184, 0], sizes = [8, 32], strides = [1, 1]} : vector<192x32xf32> to vector<8x32xf32>
    %c0_16 = arith.constant 0 : index
    %c0_17 = arith.constant 0 : index
    %33 = vector.load %arg13[%c0_16, %c0_17] : memref<200x32xf32, #tpu.memory_space<vmem>>, vector<8x32xf32>
    tpu.vector_store %arg13[%c0_16, %c0_17], %32 {strides = array<i32>} : memref<200x32xf32, #tpu.memory_space<vmem>>, vector<8x32xf32>,
    %cst_18 = arith.constant 0.000000e+00 : f32
    %34 = vector.broadcast %cst_18 : f32 to vector<192x32xf32>
    %35 = arith.subf %34, %31 : vector<192x32xf32>
    %36 = math.exp %35 : vector<192x32xf32>
    %cst_19 = arith.constant 1.000000e+00 : f32
    %37 = vector.broadcast %cst_19 : f32 to vector<192x32xf32>
    %38 = arith.addf %37, %36 : vector<192x32xf32>
    %39 = tpu.reciprocal %38 : vector<192x32xf32> -> vector<192x32xf32>
    %40 = arith.mulf %31, %39 : vector<192x32xf32>
    %41 = arith.truncf %40 : vector<192x32xf32> to vector<192x32xbf16>
    %c0_20 = arith.constant 0 : index
    %c0_21 = arith.constant 0 : index
    %42 = vector.load %arg6[%c0_20, %c0_21] : memref<32x384xbf16, #tpu.memory_space<vmem>>, vector<32x384xbf16>
    %cst_22 = arith.constant dense<0.000000e+00> : vector<192x384xf32>
    %43 = tpu.matmul %41, %42, %cst_22 {dimension_numbers = #tpu.dot_dimension_numbers<[1], [0], [0], [1], [0, 0, 1, 1], [], []>} : vector<192x32xbf16>, vector<32x384xbf16>, vector<192x384xf32> -> vector<192x384xf32>
    %44 = vector.extract_strided_slice %43 {offsets = [0, 0], sizes = [192, 64], strides = [1, 1]} : vector<192x384xf32> to vector<192x64xf32>
    %45 = vector.extract_strided_slice %43 {offsets = [0, 128], sizes = [192, 64], strides = [1, 1]} : vector<192x384xf32> to vector<192x64xf32>
    %46 = vector.extract_strided_slice %43 {offsets = [0, 256], sizes = [192, 1], strides = [1, 1]} : vector<192x384xf32> to vector<192x1xf32>
    %c0_23 = arith.constant 0 : index
    %c0_24 = arith.constant 0 : index
    %47 = vector.load %arg7[%c0_23, %c0_24] : memref<1x32xf32, #tpu.memory_space<vmem>>, vector<1x32xf32>
    %48 = vector.broadcast %46 : vector<192x1xf32> to vector<192x32xf32>
    %49 = vector.broadcast %47 : vector<1x32xf32> to vector<192x32xf32>
    %50 = arith.mulf %48, %49 : vector<192x32xf32>
    %c0_25 = arith.constant 0 : index
    %c0_26 = arith.constant 0 : index
    %51 = vector.load %arg8[%c0_25, %c0_26] : memref<1x32xf32, #tpu.memory_space<vmem>>, vector<1x32xf32>
    %52 = vector.broadcast %51 : vector<1x32xf32> to vector<192x32xf32>
    %53 = arith.addf %50, %52 : vector<192x32xf32>
    %cst_27 = arith.constant 0.000000e+00 : f32
    %54 = vector.broadcast %cst_27 : f32 to vector<192x32xf32>
    %55 = arith.maximumf %53, %54 : vector<192x32xf32>
    %56 = math.absf %53 : vector<192x32xf32>
    %cst_28 = arith.constant 0.000000e+00 : f32
    %57 = vector.broadcast %cst_28 : f32 to vector<192x32xf32>
    %58 = arith.subf %57, %56 : vector<192x32xf32>
    %59 = math.exp %58 : vector<192x32xf32>
    %cst_29 = arith.constant 1.000000e+00 : f32
    %60 = vector.broadcast %cst_29 : f32 to vector<192x32xf32>
    %61 = arith.addf %60, %59 : vector<192x32xf32>
    %62 = math.log %61 : vector<192x32xf32>
    %63 = arith.addf %55, %62 : vector<192x32xf32>
    %c0_30 = arith.constant 0 : index
    %c0_31 = arith.constant 0 : index
    %64 = vector.load %arg16[%c0_30, %c0_31] : memref<192x32xf32, #tpu.memory_space<vmem>>, vector<192x32xf32>
    tpu.vector_store %arg16[%c0_30, %c0_31], %63 {strides = array<i32>} : memref<192x32xf32, #tpu.memory_space<vmem>>, vector<192x32xf32>,
    %65 = arith.mulf %63, %40 : vector<192x32xf32>
    %c0_32 = arith.constant 0 : index
    %c0_33 = arith.constant 0 : index
    %66 = vector.load %arg17[%c0_32, %c0_33] : memref<192x32xf32, #tpu.memory_space<vmem>>, vector<192x32xf32>
    tpu.vector_store %arg17[%c0_32, %c0_33], %65 {strides = array<i32>} : memref<192x32xf32, #tpu.memory_space<vmem>>, vector<192x32xf32>,
    %c0_34 = arith.constant 0 : index
    %c0_35 = arith.constant 0 : index
    %67 = vector.load %arg18[%c0_34, %c0_35] : memref<192x64xf32, #tpu.memory_space<vmem>>, vector<192x64xf32>
    tpu.vector_store %arg18[%c0_34, %c0_35], %44 {strides = array<i32>} : memref<192x64xf32, #tpu.memory_space<vmem>>, vector<192x64xf32>,
    %c0_36 = arith.constant 0 : index
    %c0_37 = arith.constant 0 : index
    %68 = vector.load %arg19[%c0_36, %c0_37] : memref<192x64xf32, #tpu.memory_space<vmem>>, vector<192x64xf32>
    tpu.vector_store %arg19[%c0_36, %c0_37], %45 {strides = array<i32>} : memref<192x64xf32, #tpu.memory_space<vmem>>, vector<192x64xf32>,
    %c0_38 = arith.constant 0 : index
    %c0_39 = arith.constant 0 : index
    %69 = vector.load %arg9[%c0_38, %c0_39] : memref<64x32xf32, #tpu.memory_space<vmem>>, vector<64x32xf32>
    %c0_40 = arith.constant 0 : index
    %c0_41 = arith.constant 0 : index
    %70 = vector.load %arg14[%c0_40, %c0_41] : memref<64x32xf32, #tpu.memory_space<vmem>>, vector<64x32xf32>
    %c0_i32_42 = arith.constant 0 : i32
    %c12_i32 = arith.constant 12 : i32
    %71 = arith.addi %c0_i32_42, %c12_i32 : i32
    %c1_i32 = arith.constant 1 : i32
    %72 = scf.for %arg20 = %c0_i32_42 to %71 step %c1_i32 iter_args(%arg21 = %70) -> (vector<64x32xf32>)  : i32 {
      %c16_i32 = arith.constant 16 : i32
      %93 = arith.muli %arg20, %c16_i32 : i32
      %94 = tpu.assume_multiple %93, 16 : i32
      %95 = arith.index_cast %94 : i32 to index
      %c0_58 = arith.constant 0 : index
      %96 = vector.load %arg16[%95, %c0_58] : memref<192x32xf32, #tpu.memory_space<vmem>>, vector<16x32xf32>
      %97 = arith.index_cast %94 : i32 to index
      %c0_59 = arith.constant 0 : index
      %98 = vector.load %arg17[%97, %c0_59] : memref<192x32xf32, #tpu.memory_space<vmem>>, vector<16x32xf32>
      %99 = arith.index_cast %94 : i32 to index
      %c0_60 = arith.constant 0 : index
      %100 = vector.load %arg18[%99, %c0_60] : memref<192x64xf32, #tpu.memory_space<vmem>>, vector<16x64xf32>
      %101 = arith.index_cast %94 : i32 to index
      %c0_61 = arith.constant 0 : index
      %102 = vector.load %arg19[%101, %c0_61] : memref<192x64xf32, #tpu.memory_space<vmem>>, vector<16x64xf32>
      %103 = vector.shape_cast %96 : vector<16x32xf32> to vector<16x1x32xf32>
      %104 = vector.shape_cast %69 : vector<64x32xf32> to vector<1x64x32xf32>
      %105 = vector.broadcast %103 : vector<16x1x32xf32> to vector<16x64x32xf32>
      %106 = vector.broadcast %104 : vector<1x64x32xf32> to vector<16x64x32xf32>
      %107 = arith.mulf %105, %106 : vector<16x64x32xf32>
      %108 = math.exp %107 : vector<16x64x32xf32>
      %109 = vector.shape_cast %100 : vector<16x64xf32> to vector<16x64x1xf32>
      %110 = vector.shape_cast %98 : vector<16x32xf32> to vector<16x1x32xf32>
      %111 = vector.broadcast %109 : vector<16x64x1xf32> to vector<16x64x32xf32>
      %112 = vector.broadcast %110 : vector<16x1x32xf32> to vector<16x64x32xf32>
      %113 = arith.mulf %111, %112 : vector<16x64x32xf32>
      %114 = vector.shape_cast %102 : vector<16x64xf32> to vector<16x64x1xf32>
      %115 = vector.shape_cast %114 : vector<16x64x1xf32> to vector<16x64x1xf32>
      %116 = vector.broadcast %115 : vector<16x64x1xf32> to vector<16x64x32xf32>
      %117 = vector.extract_strided_slice %108 {offsets = [0, 0, 0], sizes = [1, 64, 32], strides = [1, 1, 1]} : vector<16x64x32xf32> to vector<1x64x32xf32>
      %118 = vector.shape_cast %117 : vector<1x64x32xf32> to vector<64x32xf32>
      %119 = arith.mulf %118, %arg21 : vector<64x32xf32>
      %120 = vector.extract_strided_slice %113 {offsets = [0, 0, 0], sizes = [1, 64, 32], strides = [1, 1, 1]} : vector<16x64x32xf32> to vector<1x64x32xf32>
      %121 = vector.shape_cast %120 : vector<1x64x32xf32> to vector<64x32xf32>
      %122 = arith.addf %119, %121 : vector<64x32xf32>
      %123 = vector.extract_strided_slice %116 {offsets = [0, 0, 0], sizes = [1, 64, 32], strides = [1, 1, 1]} : vector<16x64x32xf32> to vector<1x64x32xf32>
      %124 = vector.shape_cast %123 : vector<1x64x32xf32> to vector<64x32xf32>
      %125 = arith.mulf %122, %124 : vector<64x32xf32>
      %cst_62 = arith.constant dense<0.000000e+00> : vector<32xf32>
      %126 = vector.multi_reduction <add>, %125, %cst_62 [0] : vector<64x32xf32> to vector<32xf32>
      %127 = vector.shape_cast %126 : vector<32xf32> to vector<1x32xf32>
      %128 = vector.extract_strided_slice %108 {offsets = [1, 0, 0], sizes = [1, 64, 32], strides = [1, 1, 1]} : vector<16x64x32xf32> to vector<1x64x32xf32>
      %129 = vector.shape_cast %128 : vector<1x64x32xf32> to vector<64x32xf32>
      %130 = arith.mulf %129, %122 : vector<64x32xf32>
      %131 = vector.extract_strided_slice %113 {offsets = [1, 0, 0], sizes = [1, 64, 32], strides = [1, 1, 1]} : vector<16x64x32xf32> to vector<1x64x32xf32>
      %132 = vector.shape_cast %131 : vector<1x64x32xf32> to vector<64x32xf32>
      %133 = arith.addf %130, %132 : vector<64x32xf32>
      %134 = vector.extract_strided_slice %116 {offsets = [1, 0, 0], sizes = [1, 64, 32], strides = [1, 1, 1]} : vector<16x64x32xf32> to vector<1x64x32xf32>
      %135 = vector.shape_cast %134 : vector<1x64x32xf32> to vector<64x32xf32>
      %136 = arith.mulf %133, %135 : vector<64x32xf32>
      %cst_63 = arith.constant dense<0.000000e+00> : vector<32xf32>
      %137 = vector.multi_reduction <add>, %136, %cst_63 [0] : vector<64x32xf32> to vector<32xf32>
      %138 = vector.shape_cast %137 : vector<32xf32> to vector<1x32xf32>
      %139 = vector.extract_strided_slice %108 {offsets = [2, 0, 0], sizes = [1, 64, 32], strides = [1, 1, 1]} : vector<16x64x32xf32> to vector<1x64x32xf32>
      %140 = vector.shape_cast %139 : vector<1x64x32xf32> to vector<64x32xf32>
      %141 = arith.mulf %140, %133 : vector<64x32xf32>
      %142 = vector.extract_strided_slice %113 {offsets = [2, 0, 0], sizes = [1, 64, 32], strides = [1, 1, 1]} : vector<16x64x32xf32> to vector<1x64x32xf32>
      %143 = vector.shape_cast %142 : vector<1x64x32xf32> to vector<64x32xf32>
      %144 = arith.addf %141, %143 : vector<64x32xf32>
      %145 = vector.extract_strided_slice %116 {offsets = [2, 0, 0], sizes = [1, 64, 32], strides = [1, 1, 1]} : vector<16x64x32xf32> to vector<1x64x32xf32>
      %146 = vector.shape_cast %145 : vector<1x64x32xf32> to vector<64x32xf32>
      %147 = arith.mulf %144, %146 : vector<64x32xf32>
      %cst_64 = arith.constant dense<0.000000e+00> : vector<32xf32>
      %148 = vector.multi_reduction <add>, %147, %cst_64 [0] : vector<64x32xf32> to vector<32xf32>
      %149 = vector.shape_cast %148 : vector<32xf32> to vector<1x32xf32>
      %150 = vector.extract_strided_slice %108 {offsets = [3, 0, 0], sizes = [1, 64, 32], strides = [1, 1, 1]} : vector<16x64x32xf32> to vector<1x64x32xf32>
      %151 = vector.shape_cast %150 : vector<1x64x32xf32> to vector<64x32xf32>
      %152 = arith.mulf %151, %144 : vector<64x32xf32>
      %153 = vector.extract_strided_slice %113 {offsets = [3, 0, 0], sizes = [1, 64, 32], strides = [1, 1, 1]} : vector<16x64x32xf32> to vector<1x64x32xf32>
      %154 = vector.shape_cast %153 : vector<1x64x32xf32> to vector<64x32xf32>
      %155 = arith.addf %152, %154 : vector<64x32xf32>
      %156 = vector.extract_strided_slice %116 {offsets = [3, 0, 0], sizes = [1, 64, 32], strides = [1, 1, 1]} : vector<16x64x32xf32> to vector<1x64x32xf32>
      %157 = vector.shape_cast %156 : vector<1x64x32xf32> to vector<64x32xf32>
      %158 = arith.mulf %155, %157 : vector<64x32xf32>
      %cst_65 = arith.constant dense<0.000000e+00> : vector<32xf32>
      %159 = vector.multi_reduction <add>, %158, %cst_65 [0] : vector<64x32xf32> to vector<32xf32>
      %160 = vector.shape_cast %159 : vector<32xf32> to vector<1x32xf32>
      %161 = vector.extract_strided_slice %108 {offsets = [4, 0, 0], sizes = [1, 64, 32], strides = [1, 1, 1]} : vector<16x64x32xf32> to vector<1x64x32xf32>
      %162 = vector.shape_cast %161 : vector<1x64x32xf32> to vector<64x32xf32>
      %163 = arith.mulf %162, %155 : vector<64x32xf32>
      %164 = vector.extract_strided_slice %113 {offsets = [4, 0, 0], sizes = [1, 64, 32], strides = [1, 1, 1]} : vector<16x64x32xf32> to vector<1x64x32xf32>
      %165 = vector.shape_cast %164 : vector<1x64x32xf32> to vector<64x32xf32>
      %166 = arith.addf %163, %165 : vector<64x32xf32>
      %167 = vector.extract_strided_slice %116 {offsets = [4, 0, 0], sizes = [1, 64, 32], strides = [1, 1, 1]} : vector<16x64x32xf32> to vector<1x64x32xf32>
      %168 = vector.shape_cast %167 : vector<1x64x32xf32> to vector<64x32xf32>
      %169 = arith.mulf %166, %168 : vector<64x32xf32>
      %cst_66 = arith.constant dense<0.000000e+00> : vector<32xf32>
      %170 = vector.multi_reduction <add>, %169, %cst_66 [0] : vector<64x32xf32> to vector<32xf32>
      %171 = vector.shape_cast %170 : vector<32xf32> to vector<1x32xf32>
      %172 = vector.extract_strided_slice %108 {offsets = [5, 0, 0], sizes = [1, 64, 32], strides = [1, 1, 1]} : vector<16x64x32xf32> to vector<1x64x32xf32>
      %173 = vector.shape_cast %172 : vector<1x64x32xf32> to vector<64x32xf32>
      %174 = arith.mulf %173, %166 : vector<64x32xf32>
      %175 = vector.extract_strided_slice %113 {offsets = [5, 0, 0], sizes = [1, 64, 32], strides = [1, 1, 1]} : vector<16x64x32xf32> to vector<1x64x32xf32>
      %176 = vector.shape_cast %175 : vector<1x64x32xf32> to vector<64x32xf32>
      %177 = arith.addf %174, %176 : vector<64x32xf32>
      %178 = vector.extract_strided_slice %116 {offsets = [5, 0, 0], sizes = [1, 64, 32], strides = [1, 1, 1]} : vector<16x64x32xf32> to vector<1x64x32xf32>
      %179 = vector.shape_cast %178 : vector<1x64x32xf32> to vector<64x32xf32>
      %180 = arith.mulf %177, %179 : vector<64x32xf32>
      %cst_67 = arith.constant dense<0.000000e+00> : vector<32xf32>
      %181 = vector.multi_reduction <add>, %180, %cst_67 [0] : vector<64x32xf32> to vector<32xf32>
      %182 = vector.shape_cast %181 : vector<32xf32> to vector<1x32xf32>
      %183 = vector.extract_strided_slice %108 {offsets = [6, 0, 0], sizes = [1, 64, 32], strides = [1, 1, 1]} : vector<16x64x32xf32> to vector<1x64x32xf32>
      %184 = vector.shape_cast %183 : vector<1x64x32xf32> to vector<64x32xf32>
      %185 = arith.mulf %184, %177 : vector<64x32xf32>
      %186 = vector.extract_strided_slice %113 {offsets = [6, 0, 0], sizes = [1, 64, 32], strides = [1, 1, 1]} : vector<16x64x32xf32> to vector<1x64x32xf32>
      %187 = vector.shape_cast %186 : vector<1x64x32xf32> to vector<64x32xf32>
      %188 = arith.addf %185, %187 : vector<64x32xf32>
      %189 = vector.extract_strided_slice %116 {offsets = [6, 0, 0], sizes = [1, 64, 32], strides = [1, 1, 1]} : vector<16x64x32xf32> to vector<1x64x32xf32>
      %190 = vector.shape_cast %189 : vector<1x64x32xf32> to vector<64x32xf32>
      %191 = arith.mulf %188, %190 : vector<64x32xf32>
      %cst_68 = arith.constant dense<0.000000e+00> : vector<32xf32>
      %192 = vector.multi_reduction <add>, %191, %cst_68 [0] : vector<64x32xf32> to vector<32xf32>
      %193 = vector.shape_cast %192 : vector<32xf32> to vector<1x32xf32>
      %194 = vector.extract_strided_slice %108 {offsets = [7, 0, 0], sizes = [1, 64, 32], strides = [1, 1, 1]} : vector<16x64x32xf32> to vector<1x64x32xf32>
      %195 = vector.shape_cast %194 : vector<1x64x32xf32> to vector<64x32xf32>
      %196 = arith.mulf %195, %188 : vector<64x32xf32>
      %197 = vector.extract_strided_slice %113 {offsets = [7, 0, 0], sizes = [1, 64, 32], strides = [1, 1, 1]} : vector<16x64x32xf32> to vector<1x64x32xf32>
      %198 = vector.shape_cast %197 : vector<1x64x32xf32> to vector<64x32xf32>
      %199 = arith.addf %196, %198 : vector<64x32xf32>
      %200 = vector.extract_strided_slice %116 {offsets = [7, 0, 0], sizes = [1, 64, 32], strides = [1, 1, 1]} : vector<16x64x32xf32> to vector<1x64x32xf32>
      %201 = vector.shape_cast %200 : vector<1x64x32xf32> to vector<64x32xf32>
      %202 = arith.mulf %199, %201 : vector<64x32xf32>
      %cst_69 = arith.constant dense<0.000000e+00> : vector<32xf32>
      %203 = vector.multi_reduction <add>, %202, %cst_69 [0] : vector<64x32xf32> to vector<32xf32>
      %204 = vector.shape_cast %203 : vector<32xf32> to vector<1x32xf32>
      %205 = vector.extract_strided_slice %108 {offsets = [8, 0, 0], sizes = [1, 64, 32], strides = [1, 1, 1]} : vector<16x64x32xf32> to vector<1x64x32xf32>
      %206 = vector.shape_cast %205 : vector<1x64x32xf32> to vector<64x32xf32>
      %207 = arith.mulf %206, %199 : vector<64x32xf32>
      %208 = vector.extract_strided_slice %113 {offsets = [8, 0, 0], sizes = [1, 64, 32], strides = [1, 1, 1]} : vector<16x64x32xf32> to vector<1x64x32xf32>
      %209 = vector.shape_cast %208 : vector<1x64x32xf32> to vector<64x32xf32>
      %210 = arith.addf %207, %209 : vector<64x32xf32>
      %211 = vector.extract_strided_slice %116 {offsets = [8, 0, 0], sizes = [1, 64, 32], strides = [1, 1, 1]} : vector<16x64x32xf32> to vector<1x64x32xf32>
      %212 = vector.shape_cast %211 : vector<1x64x32xf32> to vector<64x32xf32>
      %213 = arith.mulf %210, %212 : vector<64x32xf32>
      %cst_70 = arith.constant dense<0.000000e+00> : vector<32xf32>
      %214 = vector.multi_reduction <add>, %213, %cst_70 [0] : vector<64x32xf32> to vector<32xf32>
      %215 = vector.shape_cast %214 : vector<32xf32> to vector<1x32xf32>
      %216 = vector.extract_strided_slice %108 {offsets = [9, 0, 0], sizes = [1, 64, 32], strides = [1, 1, 1]} : vector<16x64x32xf32> to vector<1x64x32xf32>
      %217 = vector.shape_cast %216 : vector<1x64x32xf32> to vector<64x32xf32>
      %218 = arith.mulf %217, %210 : vector<64x32xf32>
      %219 = vector.extract_strided_slice %113 {offsets = [9, 0, 0], sizes = [1, 64, 32], strides = [1, 1, 1]} : vector<16x64x32xf32> to vector<1x64x32xf32>
      %220 = vector.shape_cast %219 : vector<1x64x32xf32> to vector<64x32xf32>
      %221 = arith.addf %218, %220 : vector<64x32xf32>
      %222 = vector.extract_strided_slice %116 {offsets = [9, 0, 0], sizes = [1, 64, 32], strides = [1, 1, 1]} : vector<16x64x32xf32> to vector<1x64x32xf32>
      %223 = vector.shape_cast %222 : vector<1x64x32xf32> to vector<64x32xf32>
      %224 = arith.mulf %221, %223 : vector<64x32xf32>
      %cst_71 = arith.constant dense<0.000000e+00> : vector<32xf32>
      %225 = vector.multi_reduction <add>, %224, %cst_71 [0] : vector<64x32xf32> to vector<32xf32>
      %226 = vector.shape_cast %225 : vector<32xf32> to vector<1x32xf32>
      %227 = vector.extract_strided_slice %108 {offsets = [10, 0, 0], sizes = [1, 64, 32], strides = [1, 1, 1]} : vector<16x64x32xf32> to vector<1x64x32xf32>
      %228 = vector.shape_cast %227 : vector<1x64x32xf32> to vector<64x32xf32>
      %229 = arith.mulf %228, %221 : vector<64x32xf32>
      %230 = vector.extract_strided_slice %113 {offsets = [10, 0, 0], sizes = [1, 64, 32], strides = [1, 1, 1]} : vector<16x64x32xf32> to vector<1x64x32xf32>
      %231 = vector.shape_cast %230 : vector<1x64x32xf32> to vector<64x32xf32>
      %232 = arith.addf %229, %231 : vector<64x32xf32>
      %233 = vector.extract_strided_slice %116 {offsets = [10, 0, 0], sizes = [1, 64, 32], strides = [1, 1, 1]} : vector<16x64x32xf32> to vector<1x64x32xf32>
      %234 = vector.shape_cast %233 : vector<1x64x32xf32> to vector<64x32xf32>
      %235 = arith.mulf %232, %234 : vector<64x32xf32>
      %cst_72 = arith.constant dense<0.000000e+00> : vector<32xf32>
      %236 = vector.multi_reduction <add>, %235, %cst_72 [0] : vector<64x32xf32> to vector<32xf32>
      %237 = vector.shape_cast %236 : vector<32xf32> to vector<1x32xf32>
      %238 = vector.extract_strided_slice %108 {offsets = [11, 0, 0], sizes = [1, 64, 32], strides = [1, 1, 1]} : vector<16x64x32xf32> to vector<1x64x32xf32>
      %239 = vector.shape_cast %238 : vector<1x64x32xf32> to vector<64x32xf32>
      %240 = arith.mulf %239, %232 : vector<64x32xf32>
      %241 = vector.extract_strided_slice %113 {offsets = [11, 0, 0], sizes = [1, 64, 32], strides = [1, 1, 1]} : vector<16x64x32xf32> to vector<1x64x32xf32>
      %242 = vector.shape_cast %241 : vector<1x64x32xf32> to vector<64x32xf32>
      %243 = arith.addf %240, %242 : vector<64x32xf32>
      %244 = vector.extract_strided_slice %116 {offsets = [11, 0, 0], sizes = [1, 64, 32], strides = [1, 1, 1]} : vector<16x64x32xf32> to vector<1x64x32xf32>
      %245 = vector.shape_cast %244 : vector<1x64x32xf32> to vector<64x32xf32>
      %246 = arith.mulf %243, %245 : vector<64x32xf32>
      %cst_73 = arith.constant dense<0.000000e+00> : vector<32xf32>
      %247 = vector.multi_reduction <add>, %246, %cst_73 [0] : vector<64x32xf32> to vector<32xf32>
      %248 = vector.shape_cast %247 : vector<32xf32> to vector<1x32xf32>
      %249 = vector.extract_strided_slice %108 {offsets = [12, 0, 0], sizes = [1, 64, 32], strides = [1, 1, 1]} : vector<16x64x32xf32> to vector<1x64x32xf32>
      %250 = vector.shape_cast %249 : vector<1x64x32xf32> to vector<64x32xf32>
      %251 = arith.mulf %250, %243 : vector<64x32xf32>
      %252 = vector.extract_strided_slice %113 {offsets = [12, 0, 0], sizes = [1, 64, 32], strides = [1, 1, 1]} : vector<16x64x32xf32> to vector<1x64x32xf32>
      %253 = vector.shape_cast %252 : vector<1x64x32xf32> to vector<64x32xf32>
      %254 = arith.addf %251, %253 : vector<64x32xf32>
      %255 = vector.extract_strided_slice %116 {offsets = [12, 0, 0], sizes = [1, 64, 32], strides = [1, 1, 1]} : vector<16x64x32xf32> to vector<1x64x32xf32>
      %256 = vector.shape_cast %255 : vector<1x64x32xf32> to vector<64x32xf32>
      %257 = arith.mulf %254, %256 : vector<64x32xf32>
      %cst_74 = arith.constant dense<0.000000e+00> : vector<32xf32>
      %258 = vector.multi_reduction <add>, %257, %cst_74 [0] : vector<64x32xf32> to vector<32xf32>
      %259 = vector.shape_cast %258 : vector<32xf32> to vector<1x32xf32>
      %260 = vector.extract_strided_slice %108 {offsets = [13, 0, 0], sizes = [1, 64, 32], strides = [1, 1, 1]} : vector<16x64x32xf32> to vector<1x64x32xf32>
      %261 = vector.shape_cast %260 : vector<1x64x32xf32> to vector<64x32xf32>
      %262 = arith.mulf %261, %254 : vector<64x32xf32>
      %263 = vector.extract_strided_slice %113 {offsets = [13, 0, 0], sizes = [1, 64, 32], strides = [1, 1, 1]} : vector<16x64x32xf32> to vector<1x64x32xf32>
      %264 = vector.shape_cast %263 : vector<1x64x32xf32> to vector<64x32xf32>
      %265 = arith.addf %262, %264 : vector<64x32xf32>
      %266 = vector.extract_strided_slice %116 {offsets = [13, 0, 0], sizes = [1, 64, 32], strides = [1, 1, 1]} : vector<16x64x32xf32> to vector<1x64x32xf32>
      %267 = vector.shape_cast %266 : vector<1x64x32xf32> to vector<64x32xf32>
      %268 = arith.mulf %265, %267 : vector<64x32xf32>
      %cst_75 = arith.constant dense<0.000000e+00> : vector<32xf32>
      %269 = vector.multi_reduction <add>, %268, %cst_75 [0] : vector<64x32xf32> to vector<32xf32>
      %270 = vector.shape_cast %269 : vector<32xf32> to vector<1x32xf32>
      %271 = vector.extract_strided_slice %108 {offsets = [14, 0, 0], sizes = [1, 64, 32], strides = [1, 1, 1]} : vector<16x64x32xf32> to vector<1x64x32xf32>
      %272 = vector.shape_cast %271 : vector<1x64x32xf32> to vector<64x32xf32>
      %273 = arith.mulf %272, %265 : vector<64x32xf32>
      %274 = vector.extract_strided_slice %113 {offsets = [14, 0, 0], sizes = [1, 64, 32], strides = [1, 1, 1]} : vector<16x64x32xf32> to vector<1x64x32xf32>
      %275 = vector.shape_cast %274 : vector<1x64x32xf32> to vector<64x32xf32>
      %276 = arith.addf %273, %275 : vector<64x32xf32>
      %277 = vector.extract_strided_slice %116 {offsets = [14, 0, 0], sizes = [1, 64, 32], strides = [1, 1, 1]} : vector<16x64x32xf32> to vector<1x64x32xf32>
      %278 = vector.shape_cast %277 : vector<1x64x32xf32> to vector<64x32xf32>
      %279 = arith.mulf %276, %278 : vector<64x32xf32>
      %cst_76 = arith.constant dense<0.000000e+00> : vector<32xf32>
      %280 = vector.multi_reduction <add>, %279, %cst_76 [0] : vector<64x32xf32> to vector<32xf32>
      %281 = vector.shape_cast %280 : vector<32xf32> to vector<1x32xf32>
      %282 = vector.extract_strided_slice %108 {offsets = [15, 0, 0], sizes = [1, 64, 32], strides = [1, 1, 1]} : vector<16x64x32xf32> to vector<1x64x32xf32>
      %283 = vector.shape_cast %282 : vector<1x64x32xf32> to vector<64x32xf32>
      %284 = arith.mulf %283, %276 : vector<64x32xf32>
      %285 = vector.extract_strided_slice %113 {offsets = [15, 0, 0], sizes = [1, 64, 32], strides = [1, 1, 1]} : vector<16x64x32xf32> to vector<1x64x32xf32>
      %286 = vector.shape_cast %285 : vector<1x64x32xf32> to vector<64x32xf32>
      %287 = arith.addf %284, %286 : vector<64x32xf32>
      %288 = vector.extract_strided_slice %116 {offsets = [15, 0, 0], sizes = [1, 64, 32], strides = [1, 1, 1]} : vector<16x64x32xf32> to vector<1x64x32xf32>
      %289 = vector.shape_cast %288 : vector<1x64x32xf32> to vector<64x32xf32>
      %290 = arith.mulf %287, %289 : vector<64x32xf32>
      %cst_77 = arith.constant dense<0.000000e+00> : vector<32xf32>
      %291 = vector.multi_reduction <add>, %290, %cst_77 [0] : vector<64x32xf32> to vector<32xf32>
      %292 = vector.shape_cast %291 : vector<32xf32> to vector<1x32xf32>
      %293 = tpu.concatenate %127, %138, %149, %160, %171, %182, %193, %204, %215, %226, %237, %248, %259, %270, %281, %292 in 0 : vector<1x32xf32>, vector<1x32xf32>, vector<1x32xf32>, vector<1x32xf32>, vector<1x32xf32>, vector<1x32xf32>, vector<1x32xf32>, vector<1x32xf32>, vector<1x32xf32>, vector<1x32xf32>, vector<1x32xf32>, vector<1x32xf32>, vector<1x32xf32>, vector<1x32xf32>, vector<1x32xf32>, vector<1x32xf32> -> vector<16x32xf32>
      %294 = arith.index_cast %94 : i32 to index
      %c0_78 = arith.constant 0 : index
      %295 = vector.load %arg15[%294, %c0_78] : memref<192x32xf32, #tpu.memory_space<vmem>>, vector<16x32xf32>
      tpu.vector_store %arg15[%294, %c0_78], %293 {strides = array<i32>} : memref<192x32xf32, #tpu.memory_space<vmem>>, vector<16x32xf32>,
      scf.yield %287 : vector<64x32xf32>
    }
    %c12_i32_43 = arith.constant 12 : i32
    %c0_44 = arith.constant 0 : index
    %c0_45 = arith.constant 0 : index
    %73 = vector.load %arg14[%c0_44, %c0_45] : memref<64x32xf32, #tpu.memory_space<vmem>>, vector<64x32xf32>
    tpu.vector_store %arg14[%c0_44, %c0_45], %72 {strides = array<i32>} : memref<64x32xf32, #tpu.memory_space<vmem>>, vector<64x32xf32>,
    %c0_46 = arith.constant 0 : index
    %c0_47 = arith.constant 0 : index
    %74 = vector.load %arg15[%c0_46, %c0_47] : memref<192x32xf32, #tpu.memory_space<vmem>>, vector<192x32xf32>
    %c0_48 = arith.constant 0 : index
    %c0_49 = arith.constant 0 : index
    %75 = vector.load %arg10[%c0_48, %c0_49] : memref<1x32xf32, #tpu.memory_space<vmem>>, vector<1x32xf32>
    %76 = vector.broadcast %75 : vector<1x32xf32> to vector<192x32xf32>
    %77 = arith.mulf %40, %76 : vector<192x32xf32>
    %78 = arith.addf %74, %77 : vector<192x32xf32>
    %cst_50 = arith.constant 0.000000e+00 : f32
    %79 = vector.broadcast %cst_50 : f32 to vector<192x32xf32>
    %80 = arith.subf %79, %9 : vector<192x32xf32>
    %81 = math.exp %80 : vector<192x32xf32>
    %cst_51 = arith.constant 1.000000e+00 : f32
    %82 = vector.broadcast %cst_51 : f32 to vector<192x32xf32>
    %83 = arith.addf %82, %81 : vector<192x32xf32>
    %84 = tpu.reciprocal %83 : vector<192x32xf32> -> vector<192x32xf32>
    %85 = arith.mulf %9, %84 : vector<192x32xf32>
    %86 = arith.mulf %78, %85 : vector<192x32xf32>
    %87 = arith.truncf %86 : vector<192x32xf32> to vector<192x32xbf16>
    %c0_52 = arith.constant 0 : index
    %c0_53 = arith.constant 0 : index
    %88 = vector.load %arg11[%c0_52, %c0_53] : memref<32x16xbf16, #tpu.memory_space<vmem>>, vector<32x16xbf16>
    %cst_54 = arith.constant dense<0.000000e+00> : vector<192x16xf32>
    %89 = tpu.matmul %87, %88, %cst_54 {dimension_numbers = #tpu.dot_dimension_numbers<[1], [0], [0], [1], [0, 0, 1, 1], [], []>} : vector<192x32xbf16>, vector<32x16xbf16>, vector<192x16xf32> -> vector<192x16xf32>
    %c0_55 = arith.constant 0 : index
    %c0_56 = arith.constant 0 : index
    %c0_57 = arith.constant 0 : index
    %90 = vector.load %arg12[%c0_55, %c0_56, %c0_57] : memref<1x192x16xf32, #tpu.memory_space<vmem>>, vector<1x192x16xf32>
    %91 = vector.shape_cast %90 : vector<1x192x16xf32> to vector<192x16xf32>
    %92 = vector.shape_cast %89 : vector<192x16xf32> to vector<1x192x16xf32>
    tpu.vector_store %arg12[%c0_55, %c0_56, %c0_57], %92 {strides = array<i32>} : memref<1x192x16xf32, #tpu.memory_space<vmem>>, vector<1x192x16xf32>,
    return
  }
  func.func @transform_0(%arg0: i32, %arg1: i32) -> (i32, i32, i32) {
    %c0_i32 = arith.constant 0 : i32
    %c0_i32_0 = arith.constant 0 : i32
    return %arg0, %arg1, %c0_i32 : i32, i32, i32
  }
  func.func @transform_1(%arg0: i32, %arg1: i32) -> (i32, i32) {
    %c0_i32 = arith.constant 0 : i32
    %c0_i32_0 = arith.constant 0 : i32
    %c0_i32_1 = arith.constant 0 : i32
    return %c0_i32, %c0_i32_0 : i32, i32
  }
  func.func @transform_2(%arg0: i32, %arg1: i32) -> (i32, i32) {
    %c0_i32 = arith.constant 0 : i32
    %c0_i32_0 = arith.constant 0 : i32
    %c0_i32_1 = arith.constant 0 : i32
    return %c0_i32, %c0_i32_0 : i32, i32
  }
  func.func @transform_3(%arg0: i32, %arg1: i32) -> (i32, i32) {
    %c0_i32 = arith.constant 0 : i32
    %c0_i32_0 = arith.constant 0 : i32
    %c0_i32_1 = arith.constant 0 : i32
    return %c0_i32, %c0_i32_0 : i32, i32
  }
  func.func @transform_4(%arg0: i32, %arg1: i32) -> (i32, i32) {
    %c0_i32 = arith.constant 0 : i32
    %c0_i32_0 = arith.constant 0 : i32
    %c0_i32_1 = arith.constant 0 : i32
    return %c0_i32, %c0_i32_0 : i32, i32
  }
  func.func @transform_5(%arg0: i32, %arg1: i32) -> (i32, i32) {
    %c0_i32 = arith.constant 0 : i32
    %c0_i32_0 = arith.constant 0 : i32
    %c0_i32_1 = arith.constant 0 : i32
    return %c0_i32, %c0_i32_0 : i32, i32
  }
  func.func @transform_6(%arg0: i32, %arg1: i32) -> (i32, i32) {
    %c0_i32 = arith.constant 0 : i32
    %c0_i32_0 = arith.constant 0 : i32
    %c0_i32_1 = arith.constant 0 : i32
    return %c0_i32, %c0_i32_0 : i32, i32
  }
  func.func @transform_7(%arg0: i32, %arg1: i32) -> (i32, i32) {
    %c0_i32 = arith.constant 0 : i32
    %c0_i32_0 = arith.constant 0 : i32
    %c0_i32_1 = arith.constant 0 : i32
    return %c0_i32, %c0_i32_0 : i32, i32
  }
  func.func @transform_8(%arg0: i32, %arg1: i32) -> (i32, i32) {
    %c0_i32 = arith.constant 0 : i32
    %c0_i32_0 = arith.constant 0 : i32
    %c0_i32_1 = arith.constant 0 : i32
    return %c0_i32, %c0_i32_0 : i32, i32
  }
  func.func @transform_9(%arg0: i32, %arg1: i32) -> (i32, i32) {
    %c0_i32 = arith.constant 0 : i32
    %c0_i32_0 = arith.constant 0 : i32
    %c0_i32_1 = arith.constant 0 : i32
    return %c0_i32, %c0_i32_0 : i32, i32
  }
  func.func @transform_10(%arg0: i32, %arg1: i32) -> (i32, i32, i32) {
    %c0_i32 = arith.constant 0 : i32
    %c0_i32_0 = arith.constant 0 : i32
    return %arg0, %arg1, %c0_i32 : i32, i32, i32
  }
}

</mosaic_0001>

<llo_original>
// kernel: tpu_custom_call.1
$region0: #{tpu_custom_call.1}
  #allocation0 [shape = 'u32[]', space=smem, size = 0x4, offset = 0x4, fixed_abs, tag = 'smem constant byte address 0x4 - core index']
  #allocation1 [shape = 'u32[144,128]{1,0:T(1,128)}', space=vmem, size = 0x12000, scoped, tag = 'internal scratch']
  #allocation2 [shape = 'f32[200,32]{1,0:T(8,128)}', space=vmem, size = 0x19000, scoped, tag = 'scratch operand']
  #allocation3 [shape = 'f32[64,32]{1,0:T(8,128)}', space=vmem, size = 0x8000, scoped, tag = 'scratch operand']
  #allocation4 [shape = 'f32[192,32]{1,0:T(8,128)}', space=vmem, size = 0x18000, scoped, tag = 'scratch operand']
  #allocation5 [shape = 'f32[192,32]{1,0:T(8,128)}', space=vmem, size = 0x18000, scoped, tag = 'scratch operand']
  #allocation6 [shape = 'f32[192,32]{1,0:T(8,128)}', space=vmem, size = 0x18000, scoped, tag = 'scratch operand']
  #allocation7 [shape = 'f32[192,64]{1,0:T(8,128)}', space=vmem, size = 0x18000, scoped, tag = 'scratch operand']
  #allocation8 [shape = 'f32[192,64]{1,0:T(8,128)}', space=vmem, size = 0x18000, scoped, tag = 'scratch operand']
  %s0 = inlined_call_operand.vmem [shape: f32[2,384,16], index: 0, kind: input, shape index: {}]
  %s1 = inlined_call_operand.vmem [shape: bf16[16,256], index: 1, kind: input, shape index: {}]
  %s2 = inlined_call_operand.vmem [shape: f32[4,32], index: 2, kind: input, shape index: {}]
  %s3 = inlined_call_operand.vmem [shape: f32[1,32], index: 3, kind: input, shape index: {}]
  %s4 = inlined_call_operand.vmem [shape: bf16[32,384], index: 4, kind: input, shape index: {}]
  %s5 = inlined_call_operand.vmem [shape: f32[1,32], index: 5, kind: input, shape index: {}]
  %s6 = inlined_call_operand.vmem [shape: f32[1,32], index: 6, kind: input, shape index: {}]
  %s7 = inlined_call_operand.vmem [shape: f32[64,32], index: 7, kind: input, shape index: {}]
  %s8 = inlined_call_operand.vmem [shape: f32[1,32], index: 8, kind: input, shape index: {}]
  %s9 = inlined_call_operand.vmem [shape: bf16[32,16], index: 9, kind: input, shape index: {}]
  %s10 = inlined_call_operand.vmem [shape: f32[2,384,16], index: 10, kind: output, shape index: {}]
  %s11 = sld [smem:[#allocation0]]
  $region84: #{tpu_custom_call.1} parent=0
    _
  %s13 = ssub.s32 1, %s11
  %s14 = scalar_select 0, %s13, %s11
  loop: start=0, step=1, limit=6
  $region2: #{tpu_custom_call.1} parent=0 // loop_pre_header
    _
  $region3: #{tpu_custom_call.1} parent=0 // loop_header
    %s16 = sphi 0, %s20
    %p17 = scmp.ge.s32.totalorder %s16, 6
    %s23 = sphi 0, %s35
    %s24 = sphi 0, %s31
    %s25 = sphi 0, %s23
    %s26 = sphi 0, %s24
    %s27 = sphi 0, %s25
    %s28 = sphi 0, %s26
    %s40 = sphi 0, %s42
    %s43 = sphi 0, %s40
    %s44 = sphi 0, %s43
    %s60 = sphi 0, %s44
    %s64 = sphi 0, %s64
    %s66 = sphi 0, %s64
    %s67 = sphi 0, %s66
    %s81 = sphi 0, %s67
    %s85 = sphi 0, %s85
    %s87 = sphi 0, %s85
    %s88 = sphi 0, %s87
    %s102 = sphi 0, %s88
    %s106 = sphi 0, %s106
    %s108 = sphi 0, %s106
    %s109 = sphi 0, %s108
    %s123 = sphi 0, %s109
    %s127 = sphi 0, %s127
    %s129 = sphi 0, %s127
    %s130 = sphi 0, %s129
    %s144 = sphi 0, %s130
    %s148 = sphi 0, %s148
    %s150 = sphi 0, %s148
    %s151 = sphi 0, %s150
    %s165 = sphi 0, %s151
    %s169 = sphi 0, %s169
    %s171 = sphi 0, %s169
    %s172 = sphi 0, %s171
    %s186 = sphi 0, %s172
    %s190 = sphi 0, %s190
    %s192 = sphi 0, %s190
    %s193 = sphi 0, %s192
    %s207 = sphi 0, %s193
    %s211 = sphi 0, %s211
    %s213 = sphi 0, %s211
    %s214 = sphi 0, %s213
    %s228 = sphi 0, %s214
    %s232 = sphi 0, %s232
    %s234 = sphi 0, %s232
    %s235 = sphi 0, %s234
    %s249 = sphi 0, %s235
    %s257 = sphi 0, %s259
    %s260 = sphi 0, %s257
    %s261 = sphi 0, %s260
    %s277 = sphi 0, %s261
  $region4: #{tpu_custom_call.1} parent=0 // loop_header_branch
    %19 = sbr.rel (%p17) target = $region8
  $region5: #{tpu_custom_call.1} parent=0 // loop_body
    %s21 = ssub.s32 %s16, 1
    %s22 = ssub.s32 %s16, 2
    %s29 = sadd.s32 1, %s24
    %p30 = scmp.ge.s32.totalorder %s29, 2
    %s31 = scalar_select %p30, 0, %s29
    %s32 = sadd.s32 1, %s23
    %s33 = scalar_select %p30, %s32, %s23
    %p34 = scmp.ge.s32.totalorder %s33, 2
    %s35 = scalar_select %p34, 0, %s33
    %s36 = ssub.s32 %s23, %s35
    %s37 = ssub.s32 %s24, %s31
    %s38 = sor.u32 %s36, %s37
    %p39 = scmp.eq.s32.totalorder %s38, 0
    %s41 = sadd.s32 %s40, 1
    %s42 = scalar_select %p39, %s40, %s41
    %p45 = pneg %p39
    %p46 = scmp.eq.s32.totalorder %s16, 3
    %p47 = por %p45, %p46
    %p48 = scmp.ne.s32.totalorder %s40, %s43
    %p49 = scmp.eq.s32.totalorder %s16, 0
    %p50 = por %p48, %p49
    %p51 = scmp.ne.s32.totalorder %s40, %s43
    %p52 = scmp.eq.s32.totalorder %s21, 3
    %p53 = por %p51, %p52
    %p54 = scmp.ne.s32.totalorder %s43, %s44
    %p55 = scmp.eq.s32.totalorder %s21, 0
    %p56 = por %p54, %p55
    %p57 = scmp.ne.s32.totalorder %s43, %s44
    %p58 = scmp.eq.s32.totalorder %s22, 3
    %p59 = por %p57, %p58
    %p61 = scmp.ne.s32.totalorder %s44, %s60
    %p62 = scmp.eq.s32.totalorder %s22, 0
    %p63 = por %p61, %p62
    %s65 = sadd.s32 %s64, 1
    %p68 = scmp.eq.s32.totalorder %s16, 3
    %p69 = scmp.ne.s32.totalorder %s64, %s66
    %p70 = scmp.eq.s32.totalorder %s16, 0
    %p71 = por %p69, %p70
    %p72 = scmp.ne.s32.totalorder %s64, %s66
    %p73 = scmp.eq.s32.totalorder %s21, 3
    %p74 = por %p72, %p73
    %p75 = scmp.ne.s32.totalorder %s66, %s67
    %p76 = scmp.eq.s32.totalorder %s21, 0
    %p77 = por %p75, %p76
    %p78 = scmp.ne.s32.totalorder %s66, %s67
    %p79 = scmp.eq.s32.totalorder %s22, 3
    %p80 = por %p78, %p79
    %p82 = scmp.ne.s32.totalorder %s67, %s81
    %p83 = scmp.eq.s32.totalorder %s22, 0
    %p84 = por %p82, %p83
    %s86 = sadd.s32 %s85, 1
    %p89 = scmp.eq.s32.totalorder %s16, 3
    %p90 = scmp.ne.s32.totalorder %s85, %s87
    %p91 = scmp.eq.s32.totalorder %s16, 0
    %p92 = por %p90, %p91
    %p93 = scmp.ne.s32.totalorder %s85, %s87
    %p94 = scmp.eq.s32.totalorder %s21, 3
    %p95 = por %p93, %p94
    %p96 = scmp.ne.s32.totalorder %s87, %s88
    %p97 = scmp.eq.s32.totalorder %s21, 0
    %p98 = por %p96, %p97
    %p99 = scmp.ne.s32.totalorder %s87, %s88
    %p100 = scmp.eq.s32.totalorder %s22, 3
    %p101 = por %p99, %p100
    %p103 = scmp.ne.s32.totalorder %s88, %s102
    %p104 = scmp.eq.s32.totalorder %s22, 0
    %p105 = por %p103, %p104
    %s107 = sadd.s32 %s106, 1
    %p110 = scmp.eq.s32.totalorder %s16, 3
    %p111 = scmp.ne.s32.totalorder %s106, %s108
    %p112 = scmp.eq.s32.totalorder %s16, 0
    %p113 = por %p111, %p112
    %p114 = scmp.ne.s32.totalorder %s106, %s108
    %p115 = scmp.eq.s32.totalorder %s21, 3
    %p116 = por %p114, %p115
    %p117 = scmp.ne.s32.totalorder %s108, %s109
    %p118 = scmp.eq.s32.totalorder %s21, 0
    %p119 = por %p117, %p118
    %p120 = scmp.ne.s32.totalorder %s108, %s109
    %p121 = scmp.eq.s32.totalorder %s22, 3
    %p122 = por %p120, %p121
    %p124 = scmp.ne.s32.totalorder %s109, %s123
    %p125 = scmp.eq.s32.totalorder %s22, 0
    %p126 = por %p124, %p125
    %s128 = sadd.s32 %s127, 1
    %p131 = scmp.eq.s32.totalorder %s16, 3
    %p132 = scmp.ne.s32.totalorder %s127, %s129
    %p133 = scmp.eq.s32.totalorder %s16, 0
    %p134 = por %p132, %p133
    %p135 = scmp.ne.s32.totalorder %s127, %s129
    %p136 = scmp.eq.s32.totalorder %s21, 3
    %p137 = por %p135, %p136
    %p138 = scmp.ne.s32.totalorder %s129, %s130
    %p139 = scmp.eq.s32.totalorder %s21, 0
    %p140 = por %p138, %p139
    %p141 = scmp.ne.s32.totalorder %s129, %s130
    %p142 = scmp.eq.s32.totalorder %s22, 3
    %p143 = por %p141, %p142
    %p145 = scmp.ne.s32.totalorder %s130, %s144
    %p146 = scmp.eq.s32.totalorder %s22, 0
    %p147 = por %p145, %p146
    %s149 = sadd.s32 %s148, 1
    %p152 = scmp.eq.s32.totalorder %s16, 3
    %p153 = scmp.ne.s32.totalorder %s148, %s150
    %p154 = scmp.eq.s32.totalorder %s16, 0
    %p155 = por %p153, %p154
    %p156 = scmp.ne.s32.totalorder %s148, %s150
    %p157 = scmp.eq.s32.totalorder %s21, 3
    %p158 = por %p156, %p157
    %p159 = scmp.ne.s32.totalorder %s150, %s151
    %p160 = scmp.eq.s32.totalorder %s21, 0
    %p161 = por %p159, %p160
    %p162 = scmp.ne.s32.totalorder %s150, %s151
    %p163 = scmp.eq.s32.totalorder %s22, 3
    %p164 = por %p162, %p163
    %p166 = scmp.ne.s32.totalorder %s151, %s165
    %p167 = scmp.eq.s32.totalorder %s22, 0
    %p168 = por %p166, %p167
    %s170 = sadd.s32 %s169, 1
    %p173 = scmp.eq.s32.totalorder %s16, 3
    %p174 = scmp.ne.s32.totalorder %s169, %s171
    %p175 = scmp.eq.s32.totalorder %s16, 0
    %p176 = por %p174, %p175
    %p177 = scmp.ne.s32.totalorder %s169, %s171
    %p178 = scmp.eq.s32.totalorder %s21, 3
    %p179 = por %p177, %p178
    %p180 = scmp.ne.s32.totalorder %s171, %s172
    %p181 = scmp.eq.s32.totalorder %s21, 0
    %p182 = por %p180, %p181
    %p183 = scmp.ne.s32.totalorder %s171, %s172
    %p184 = scmp.eq.s32.totalorder %s22, 3
    %p185 = por %p183, %p184
    %p187 = scmp.ne.s32.totalorder %s172, %s186
    %p188 = scmp.eq.s32.totalorder %s22, 0
    %p189 = por %p187, %p188
    %s191 = sadd.s32 %s190, 1
    %p194 = scmp.eq.s32.totalorder %s16, 3
    %p195 = scmp.ne.s32.totalorder %s190, %s192
    %p196 = scmp.eq.s32.totalorder %s16, 0
    %p197 = por %p195, %p196
    %p198 = scmp.ne.s32.totalorder %s190, %s192
    %p199 = scmp.eq.s32.totalorder %s21, 3
    %p200 = por %p198, %p199
    %p201 = scmp.ne.s32.totalorder %s192, %s193
    %p202 = scmp.eq.s32.totalorder %s21, 0
    %p203 = por %p201, %p202
    %p204 = scmp.ne.s32.totalorder %s192, %s193
    %p205 = scmp.eq.s32.totalorder %s22, 3
    %p206 = por %p204, %p205
    %p208 = scmp.ne.s32.totalorder %s193, %s207
    %p209 = scmp.eq.s32.totalorder %s22, 0
    %p210 = por %p208, %p209
    %s212 = sadd.s32 %s211, 1
    %p215 = scmp.eq.s32.totalorder %s16, 3
    %p216 = scmp.ne.s32.totalorder %s211, %s213
    %p217 = scmp.eq.s32.totalorder %s16, 0
    %p218 = por %p216, %p217
    %p219 = scmp.ne.s32.totalorder %s211, %s213
    %p220 = scmp.eq.s32.totalorder %s21, 3
    %p221 = por %p219, %p220
    %p222 = scmp.ne.s32.totalorder %s213, %s214
    %p223 = scmp.eq.s32.totalorder %s21, 0
    %p224 = por %p222, %p223
    %p225 = scmp.ne.s32.totalorder %s213, %s214
    %p226 = scmp.eq.s32.totalorder %s22, 3
    %p227 = por %p225, %p226
    %p229 = scmp.ne.s32.totalorder %s214, %s228
    %p230 = scmp.eq.s32.totalorder %s22, 0
    %p231 = por %p229, %p230
    %s233 = sadd.s32 %s232, 1
    %p236 = scmp.eq.s32.totalorder %s16, 3
    %p237 = scmp.ne.s32.totalorder %s232, %s234
    %p238 = scmp.eq.s32.totalorder %s16, 0
    %p239 = por %p237, %p238
    %p240 = scmp.ne.s32.totalorder %s232, %s234
    %p241 = scmp.eq.s32.totalorder %s21, 3
    %p242 = por %p240, %p241
    %p243 = scmp.ne.s32.totalorder %s234, %s235
    %p244 = scmp.eq.s32.totalorder %s21, 0
    %p245 = por %p243, %p244
    %p246 = scmp.ne.s32.totalorder %s234, %s235
    %p247 = scmp.eq.s32.totalorder %s22, 3
    %p248 = por %p246, %p247
    %p250 = scmp.ne.s32.totalorder %s235, %s249
    %p251 = scmp.eq.s32.totalorder %s22, 0
    %p252 = por %p250, %p251
    %s253 = ssub.s32 %s23, %s35
    %s254 = ssub.s32 %s24, %s31
    %s255 = sor.u32 %s253, %s254
    %p256 = scmp.eq.s32.totalorder %s255, 0
    %s258 = sadd.s32 %s257, 1
    %s259 = scalar_select %p256, %s257, %s258
    %p262 = pneg %p256
    %p263 = scmp.eq.s32.totalorder %s16, 3
    %p264 = por %p262, %p263
    %p265 = scmp.ne.s32.totalorder %s257, %s260
    %p266 = scmp.eq.s32.totalorder %s16, 0
    %p267 = por %p265, %p266
    %p268 = scmp.ne.s32.totalorder %s257, %s260
    %p269 = scmp.eq.s32.totalorder %s21, 3
    %p270 = por %p268, %p269
    %p271 = scmp.ne.s32.totalorder %s260, %s261
    %p272 = scmp.eq.s32.totalorder %s21, 0
    %p273 = por %p271, %p272
    %p274 = scmp.ne.s32.totalorder %s260, %s261
    %p275 = scmp.eq.s32.totalorder %s22, 3
    %p276 = por %p274, %p275
    %p278 = scmp.ne.s32.totalorder %s261, %s277
    %p279 = scmp.eq.s32.totalorder %s22, 0
    %p280 = por %p278, %p279
    %p281 = scmp.le.s32.totalorder 1, %s16
    %p282 = scmp.lt.s32.totalorder %s16, 5
    %p283 = pnand %p281, %p282
    %p284 = pneg %p283
    // Predicated region
    $region9: #{tpu_custom_call.1} parent=5 // pred_check
      _
    $region10: #{tpu_custom_call.1} parent=5 // pred_check_branch
      %286 = sbr.rel (%p283) target = $region12
    $region11: #{tpu_custom_call.1} parent=5 // pred_region
      %s287 = ssub.s32 %s16, 1
      // Predicated region
      $region13: #{tpu_custom_call.1} parent=11 // pred_check
        %p288 = pneg %p77
      $region14: #{tpu_custom_call.1} parent=11 // pred_check_branch
        %290 = sbr.rel (%p288) target = $region16
      $region15: #{tpu_custom_call.1} parent=11 // pred_region
        _
      $region16: #{tpu_custom_call.1} parent=11 // pred_fallthru
        _
      // Predicated region
      $region17: #{tpu_custom_call.1} parent=11 // pred_check
        %p291 = pneg %p98
      $region18: #{tpu_custom_call.1} parent=11 // pred_check_branch
        %293 = sbr.rel (%p291) target = $region20
      $region19: #{tpu_custom_call.1} parent=11 // pred_region
        _
      $region20: #{tpu_custom_call.1} parent=11 // pred_fallthru
        _
      // Predicated region
      $region21: #{tpu_custom_call.1} parent=11 // pred_check
        %p294 = pneg %p119
      $region22: #{tpu_custom_call.1} parent=11 // pred_check_branch
        %296 = sbr.rel (%p294) target = $region24
      $region23: #{tpu_custom_call.1} parent=11 // pred_region
        _
      $region24: #{tpu_custom_call.1} parent=11 // pred_fallthru
        _
      // Predicated region
      $region25: #{tpu_custom_call.1} parent=11 // pred_check
        %p297 = pneg %p140
      $region26: #{tpu_custom_call.1} parent=11 // pred_check_branch
        %299 = sbr.rel (%p297) target = $region28
      $region27: #{tpu_custom_call.1} parent=11 // pred_region
        _
      $region28: #{tpu_custom_call.1} parent=11 // pred_fallthru
        _
      // Predicated region
      $region29: #{tpu_custom_call.1} parent=11 // pred_check
        %p300 = pneg %p161
      $region30: #{tpu_custom_call.1} parent=11 // pred_check_branch
        %302 = sbr.rel (%p300) target = $region32
      $region31: #{tpu_custom_call.1} parent=11 // pred_region
        _
      $region32: #{tpu_custom_call.1} parent=11 // pred_fallthru
        _
      // Predicated region
      $region33: #{tpu_custom_call.1} parent=11 // pred_check
        %p303 = pneg %p182
      $region34: #{tpu_custom_call.1} parent=11 // pred_check_branch
        %305 = sbr.rel (%p303) target = $region36
      $region35: #{tpu_custom_call.1} parent=11 // pred_region
        _
      $region36: #{tpu_custom_call.1} parent=11 // pred_fallthru
        _
      // Predicated region
      $region37: #{tpu_custom_call.1} parent=11 // pred_check
        %p306 = pneg %p203
      $region38: #{tpu_custom_call.1} parent=11 // pred_check_branch
        %308 = sbr.rel (%p306) target = $region40
      $region39: #{tpu_custom_call.1} parent=11 // pred_region
        _
      $region40: #{tpu_custom_call.1} parent=11 // pred_fallthru
        _
      // Predicated region
      $region41: #{tpu_custom_call.1} parent=11 // pred_check
        %p309 = pneg %p224
      $region42: #{tpu_custom_call.1} parent=11 // pred_check_branch
        %311 = sbr.rel (%p309) target = $region44
      $region43: #{tpu_custom_call.1} parent=11 // pred_region
        _
      $region44: #{tpu_custom_call.1} parent=11 // pred_fallthru
        _
      // Predicated region
      $region45: #{tpu_custom_call.1} parent=11 // pred_check
        %p312 = pneg %p245
      $region46: #{tpu_custom_call.1} parent=11 // pred_check_branch
        %314 = sbr.rel (%p312) target = $region48
      $region47: #{tpu_custom_call.1} parent=11 // pred_region
        _
      $region48: #{tpu_custom_call.1} parent=11 // pred_fallthru
        _
    $region12: #{tpu_custom_call.1} parent=5 // pred_fallthru
      _
    %p315 = scmp.lt.s32.totalorder %s16, 4
    // Predicated region
    $region49: #{tpu_custom_call.1} parent=5 // pred_check
      %p316 = pneg %p315
    $region50: #{tpu_custom_call.1} parent=5 // pred_check_branch
      %318 = sbr.rel (%p316) target = $region52
    $region51: #{tpu_custom_call.1} parent=5 // pred_region
      // Predicated region
      $region53: #{tpu_custom_call.1} parent=51 // pred_check
        %p319 = pneg %p50
      $region54: #{tpu_custom_call.1} parent=51 // pred_check_branch
        %321 = sbr.rel (%p319) target = $region56
      $region55: #{tpu_custom_call.1} parent=51 // pred_region
        %s322 = smul.u32 24, %s24
        %p323 = scmp.lt.s32.totalorder %s23, 1
        %s324 = scalar_select %p323, %s23, 1
        %p325 = scmp.lt.s32.totalorder %s322, 47
        %s326 = scalar_select %p325, %s322, 47
        %s327 = smul.addr %s324, 48
        %s328 = sadd.s32 %s326, %s327
        %s329 = smul.addr %s328, 8
        %s330 = scalar_lea.vmem %s0, %s329
        %s331 = smul.u32 24, %s24
      $region56: #{tpu_custom_call.1} parent=51 // pred_fallthru
        _
    $region52: #{tpu_custom_call.1} parent=5 // pred_fallthru
      _
    %p332 = scmp.le.s32.totalorder 1, %s16
    %p333 = scmp.lt.s32.totalorder %s16, 5
    %p334 = pnand %p332, %p333
    %p335 = pneg %p334
    // Predicated region
    $region57: #{tpu_custom_call.1} parent=5 // pred_check
      _
    $region58: #{tpu_custom_call.1} parent=5 // pred_check_branch
      %337 = sbr.rel (%p334) target = $region60
    $region59: #{tpu_custom_call.1} parent=5 // pred_region
      %s338 = ssub.s32 %s16, 1
      %s339 = smul.u32 24, %s26
      %p340 = scmp.lt.s32.totalorder %s25, 1
      %s341 = scalar_select %p340, %s25, 1
      %p342 = scmp.lt.s32.totalorder %s339, 47
      %s343 = scalar_select %p342, %s339, 47
      %s344 = smul.addr %s341, 48
      %s345 = sadd.s32 %s343, %s344
      %s346 = smul.addr %s345, 8
      %s347 = scalar_lea.vmem %s0, %s346
      %p348 = pneg %p56
      %p349 = pneg %p53
      %p350 = pneg %p77
      %p351 = pneg %p74
      %p352 = pneg %p98
      %p353 = pneg %p95
      %p354 = pneg %p119
      %p355 = pneg %p116
      %p356 = pneg %p140
      %p357 = pneg %p137
      %p358 = pneg %p161
      %p359 = pneg %p158
      %p360 = pneg %p182
      %p361 = pneg %p179
      %p362 = pneg %p203
      %p363 = pneg %p200
      %p364 = pneg %p224
      %p365 = pneg %p221
      %p366 = pneg %p245
      %p367 = pneg %p242
      %p368 = pneg %p273
      %p369 = pneg %p270
      %s370 = smul.u32 24, %s26
      %p371 = scmp.lt.s32.totalorder %s25, 1
      %s372 = scalar_select %p371, %s25, 1
      %p373 = scmp.lt.s32.totalorder %s370, 47
      %s374 = scalar_select %p373, %s370, 47
      %s375 = smul.addr %s372, 48
      %s376 = sadd.s32 %s374, %s375
      %s377 = smul.addr %s376, 8
      %s378 = scalar_lea.vmem %s10, %s377
      %s379 = smul.u32 24, %s26
      %p380 = scmp.lt.s32.totalorder %s25, 1
      %s381 = scalar_select %p380, %s25, 1
      %p382 = scmp.lt.s32.totalorder %s379, 47
      %s383 = scalar_select %p382, %s379, 47
      %s384 = smul.addr %s381, 48
      %s385 = sadd.s32 %s383, %s384
      %s386 = smul.addr %s385, 8
      %s387 = scalar_lea.vmem %s0, %s386
      %s388 = smul.u32 24, %s26
      %s389 = smul.u32 24, %s26
      %p390 = scmp.lt.s32.totalorder %s25, 1
      %s391 = scalar_select %p390, %s25, 1
      %p392 = scmp.lt.s32.totalorder %s389, 47
      %s393 = scalar_select %p392, %s389, 47
      %s394 = smul.addr %s391, 48
      %s395 = sadd.s32 %s393, %s394
      %s396 = smul.addr %s395, 8
      %s397 = scalar_lea.vmem %s10, %s396
      %s398 = smul.u32 24, %s26
      %p400 = scmp.eq.s32.totalorder %s26, 0
      // Predicated region
      $region61: #{tpu_custom_call.1} parent=59 // pred_check
        %p401 = pneg %p400
      $region62: #{tpu_custom_call.1} parent=59 // pred_check_branch
        %403 = sbr.rel (%p401) target = $region64
      $region63: #{tpu_custom_call.1} parent=59 // pred_region
        %vm404 = vcmask 261120
        %405 = vst.msk [vmem:[#allocation2] sm:$0xff] %vm404, 0.0
        %406 = vst.msk [vmem:[#allocation3] sm:$0xff] %vm404, 0.0
        %407 = vst.msk [vmem:[#allocation3 + $0x8] sm:$0xff] %vm404, 0.0
        %408 = vst.msk [vmem:[#allocation3 + $0x10] sm:$0xff] %vm404, 0.0
        %409 = vst.msk [vmem:[#allocation3 + $0x18] sm:$0xff] %vm404, 0.0
        %410 = vst.msk [vmem:[#allocation3 + $0x20] sm:$0xff] %vm404, 0.0
        %411 = vst.msk [vmem:[#allocation3 + $0x28] sm:$0xff] %vm404, 0.0
        %412 = vst.msk [vmem:[#allocation3 + $0x30] sm:$0xff] %vm404, 0.0
        %413 = vst.msk [vmem:[#allocation3 + $0x38] sm:$0xff] %vm404, 0.0
      $region64: #{tpu_custom_call.1} parent=59 // pred_fallthru
        _
      %v414 = vld [vmem:[%s387] sm:$0xff]
      %v415 = vld [vmem:[%s387 + $0x8] sm:$0xff]
      %v416 = vld [vmem:[%s387 + $0x10] sm:$0xff]
      %v417 = vld [vmem:[%s387 + $0x18] sm:$0xff]
      %v418 = vld [vmem:[%s387 + $0x20] sm:$0xff]
      %v419 = vld [vmem:[%s387 + $0x28] sm:$0xff]
      %v420 = vld [vmem:[%s387 + $0x30] sm:$0xff]
      %v421 = vld [vmem:[%s387 + $0x38] sm:$0xff]
      %v422 = vld [vmem:[%s387 + $0x40] sm:$0xff]
      %v423 = vld [vmem:[%s387 + $0x48] sm:$0xff]
      %v424 = vld [vmem:[%s387 + $0x50] sm:$0xff]
      %v425 = vld [vmem:[%s387 + $0x58] sm:$0xff]
      %v426 = vld [vmem:[%s387 + $0x60] sm:$0xff]
      %v427 = vld [vmem:[%s387 + $0x68] sm:$0xff]
      %v428 = vld [vmem:[%s387 + $0x70] sm:$0xff]
      %v429 = vld [vmem:[%s387 + $0x78] sm:$0xff]
      %v430 = vld [vmem:[%s387 + $0x80] sm:$0xff]
      %v431 = vld [vmem:[%s387 + $0x88] sm:$0xff]
      %v432 = vld [vmem:[%s387 + $0x90] sm:$0xff]
      %v433 = vld [vmem:[%s387 + $0x98] sm:$0xff]
      %v434 = vld [vmem:[%s387 + $0xa0] sm:$0xff]
      %v435 = vld [vmem:[%s387 + $0xa8] sm:$0xff]
      %v436 = vld [vmem:[%s387 + $0xb0] sm:$0xff]
      %v437 = vld [vmem:[%s387 + $0xb8] sm:$0xff]
      %v438 = vpack.c.bf16 %v415, %v414
      %v439 = vpack.c.bf16 %v417, %v416
      %v440 = vpack.c.bf16 %v419, %v418
      %v441 = vpack.c.bf16 %v421, %v420
      %v442 = vpack.c.bf16 %v423, %v422
      %v443 = vpack.c.bf16 %v425, %v424
      %v444 = vpack.c.bf16 %v427, %v426
      %v445 = vpack.c.bf16 %v429, %v428
      %v446 = vpack.c.bf16 %v431, %v430
      %v447 = vpack.c.bf16 %v433, %v432
      %v448 = vpack.c.bf16 %v435, %v434
      %v449 = vpack.c.bf16 %v437, %v436
      %v450 = vld [vmem:[%s1] sm:$0xff]
      %v451 = vld [vmem:[%s1 + $0x8] sm:$0xff]
      %v454 = vunpack.c.l.b16 %v450
      %v455 = vunpack.c.h.b16 %v450
      %v456 = vunpack.c.l.b16 %v451
      %v457 = vunpack.c.h.b16 %v451
      %v458 = vpack.c.b16 %v456, %v454
      %v459 = vpack.c.b16 %v457, %v455
      %vm462 = vcmask 130048
      %v464 = vsel %vm462, %v438, 0
      %v467 = vsel %vm462, %v439, 0
      %v470 = vsel %vm462, %v440, 0
      %v473 = vsel %vm462, %v441, 0
      %v476 = vsel %vm462, %v442, 0
      %v479 = vsel %vm462, %v443, 0
      %v482 = vsel %vm462, %v444, 0
      %v485 = vsel %vm462, %v445, 0
      %v488 = vsel %vm462, %v446, 0
      %v491 = vsel %vm462, %v447, 0
      %v494 = vsel %vm462, %v448, 0
      %v497 = vsel %vm462, %v449, 0
      %499 = vmatprep.subr.bf16.mxu0 0
      %500 = vmatpush1.bf16.msra.mxu0 0
      %501 = vmatprep.subr.bf16.mxu0 0
      %502 = vmatpush1.bf16.msra.mxu0 0
      %503 = vmatprep.subr.bf16.mxu0 0
      %504 = vmatpush1.bf16.msra.mxu0 0
      %505 = vmatprep.subr.bf16.mxu0 0
      %506 = vmatpush1.bf16.msra.mxu0 0
      %507 = vmatprep.subr.bf16.mxu0 0
      %508 = vmatpush1.bf16.msra.mxu0 0
      %509 = vmatprep.subr.bf16.mxu0 0
      %510 = vmatpush1.bf16.msra.mxu0 0
      %511 = vmatprep.subr.bf16.mxu0 0
      %512 = vmatpush1.bf16.msra.mxu0 0
      %513 = vmatprep.subr.bf16.mxu0 %v459
      %514 = vmatpush1.bf16.msra.mxu0 %v458
      %515 = vmatprep.subr.bf16.mxu0 0
      %516 = vmatpush2.bf16.msra.mxu0 0
      %517 = vmatprep.subr.bf16.mxu0 0
      %518 = vmatpush2.bf16.msra.mxu0 0
      %519 = vmatprep.subr.bf16.mxu0 0
      %520 = vmatpush2.bf16.msra.mxu0 0
      %521 = vmatprep.subr.bf16.mxu0 0
      %522 = vmatpush2.bf16.msra.mxu0 0
      %523 = vmatprep.subr.bf16.mxu0 0
      %524 = vmatpush2.bf16.msra.mxu0 0
      %525 = vmatprep.subr.bf16.mxu0 0
      %526 = vmatpush2.bf16.msra.mxu0 0
      %527 = vmatprep.subr.bf16.mxu0 0
      %528 = vmatpush2.bf16.msra.mxu0 0
      %529 = vmatprep.subr.bf16.mxu0 0
      %530 = vmatpush2.bf16.msra.mxu0 0
      %531 = vmatprep.mubr.bf16.mxu0 0
      %532 = vmatmul.mubr.bf16.gmra.mxu0 %v464
      %v533 = vpop.f32.mrf.mxu0
      %v534 = vadd.f32 0.0, %v533
      %v535 = vpop.f32.mrf.mxu0
      %v536 = vadd.f32 0.0, %v535
      %v537 = vpop.f32.mrf.mxu0
      %v538 = vadd.f32 0.0, %v537
      %v539 = vpop.f32.mrf.mxu0
      %v540 = vadd.f32 0.0, %v539
      %541 = vmatprep.mubr.bf16.mxu0 0
      %542 = vmatmul.mubr.bf16.gmra.mxu0 %v467
      %v543 = vpop.f32.mrf.mxu0
      %v544 = vadd.f32 0.0, %v543
      %v545 = vpop.f32.mrf.mxu0
      %v546 = vadd.f32 0.0, %v545
      %v547 = vpop.f32.mrf.mxu0
      %v548 = vadd.f32 0.0, %v547
      %v549 = vpop.f32.mrf.mxu0
      %v550 = vadd.f32 0.0, %v549
      %551 = vmatprep.mubr.bf16.mxu0 0
      %552 = vmatmul.mubr.bf16.gmra.mxu0 %v470
      %v553 = vpop.f32.mrf.mxu0
      %v554 = vadd.f32 0.0, %v553
      %v555 = vpop.f32.mrf.mxu0
      %v556 = vadd.f32 0.0, %v555
      %v557 = vpop.f32.mrf.mxu0
      %v558 = vadd.f32 0.0, %v557
      %v559 = vpop.f32.mrf.mxu0
      %v560 = vadd.f32 0.0, %v559
      %561 = vmatprep.mubr.bf16.mxu0 0
      %562 = vmatmul.mubr.bf16.gmra.mxu0 %v473
      %v563 = vpop.f32.mrf.mxu0
      %v564 = vadd.f32 0.0, %v563
      %v565 = vpop.f32.mrf.mxu0
      %v566 = vadd.f32 0.0, %v565
      %v567 = vpop.f32.mrf.mxu0
      %v568 = vadd.f32 0.0, %v567
      %v569 = vpop.f32.mrf.mxu0
      %v570 = vadd.f32 0.0, %v569
      %571 = vmatprep.mubr.bf16.mxu0 0
      %572 = vmatmul.mubr.bf16.gmra.mxu0 %v476
      %v573 = vpop.f32.mrf.mxu0
      %v574 = vadd.f32 0.0, %v573
      %v575 = vpop.f32.mrf.mxu0
      %v576 = vadd.f32 0.0, %v575
      %v577 = vpop.f32.mrf.mxu0
      %v578 = vadd.f32 0.0, %v577
      %v579 = vpop.f32.mrf.mxu0
      %v580 = vadd.f32 0.0, %v579
      %581 = vmatprep.mubr.bf16.mxu0 0
      %582 = vmatmul.mubr.bf16.gmra.mxu0 %v479
      %v583 = vpop.f32.mrf.mxu0
      %v584 = vadd.f32 0.0, %v583
      %v585 = vpop.f32.mrf.mxu0
      %v586 = vadd.f32 0.0, %v585
      %v587 = vpop.f32.mrf.mxu0
      %v588 = vadd.f32 0.0, %v587
      %v589 = vpop.f32.mrf.mxu0
      %v590 = vadd.f32 0.0, %v589
      %591 = vmatprep.mubr.bf16.mxu0 0
      %592 = vmatmul.mubr.bf16.gmra.mxu0 %v482
      %v593 = vpop.f32.mrf.mxu0
      %v594 = vadd.f32 0.0, %v593
      %v595 = vpop.f32.mrf.mxu0
      %v596 = vadd.f32 0.0, %v595
      %v597 = vpop.f32.mrf.mxu0
      %v598 = vadd.f32 0.0, %v597
      %v599 = vpop.f32.mrf.mxu0
      %v600 = vadd.f32 0.0, %v599
      %601 = vmatprep.mubr.bf16.mxu0 0
      %602 = vmatmul.mubr.bf16.gmra.mxu0 %v485
      %v603 = vpop.f32.mrf.mxu0
      %v604 = vadd.f32 0.0, %v603
      %v605 = vpop.f32.mrf.mxu0
      %v606 = vadd.f32 0.0, %v605
      %v607 = vpop.f32.mrf.mxu0
      %v608 = vadd.f32 0.0, %v607
      %v609 = vpop.f32.mrf.mxu0
      %v610 = vadd.f32 0.0, %v609
      %611 = vmatprep.mubr.bf16.mxu0 0
      %612 = vmatmul.mubr.bf16.gmra.mxu0 %v488
      %v613 = vpop.f32.mrf.mxu0
      %v614 = vadd.f32 0.0, %v613
      %v615 = vpop.f32.mrf.mxu0
      %v616 = vadd.f32 0.0, %v615
      %v617 = vpop.f32.mrf.mxu0
      %v618 = vadd.f32 0.0, %v617
      %v619 = vpop.f32.mrf.mxu0
      %v620 = vadd.f32 0.0, %v619
      %621 = vmatprep.mubr.bf16.mxu0 0
      %622 = vmatmul.mubr.bf16.gmra.mxu0 %v491
      %v623 = vpop.f32.mrf.mxu0
      %v624 = vadd.f32 0.0, %v623
      %v625 = vpop.f32.mrf.mxu0
      %v626 = vadd.f32 0.0, %v625
      %v627 = vpop.f32.mrf.mxu0
      %v628 = vadd.f32 0.0, %v627
      %v629 = vpop.f32.mrf.mxu0
      %v630 = vadd.f32 0.0, %v629
      %631 = vmatprep.mubr.bf16.mxu0 0
      %632 = vmatmul.mubr.bf16.gmra.mxu0 %v494
      %v633 = vpop.f32.mrf.mxu0
      %v634 = vadd.f32 0.0, %v633
      %v635 = vpop.f32.mrf.mxu0
      %v636 = vadd.f32 0.0, %v635
      %v637 = vpop.f32.mrf.mxu0
      %v638 = vadd.f32 0.0, %v637
      %v639 = vpop.f32.mrf.mxu0
      %v640 = vadd.f32 0.0, %v639
      %641 = vmatprep.mubr.bf16.mxu0 0
      %642 = vmatmul.mubr.bf16.gmra.mxu0 %v497
      %v643 = vpop.f32.mrf.mxu0
      %v644 = vadd.f32 0.0, %v643
      %v645 = vpop.f32.mrf.mxu0
      %v646 = vadd.f32 0.0, %v645
      %v647 = vpop.f32.mrf.mxu0
      %v648 = vadd.f32 0.0, %v647
      %v649 = vpop.f32.mrf.mxu0
      %v650 = vadd.f32 0.0, %v649
      %651 = vdwg.mxu0
      %vm652 = vcmask 261120
      %653 = vst.msk [vmem:[#allocation2 + $0x8] sm:$0xff] %vm652, %v534
      %654 = vst.msk [vmem:[#allocation2 + $0x10] sm:$0xff] %vm652, %v538
      %655 = vst.msk [vmem:[#allocation2 + $0x18] sm:$0xff] %vm652, %v544
      %656 = vst.msk [vmem:[#allocation2 + $0x20] sm:$0xff] %vm652, %v548
      %657 = vst.msk [vmem:[#allocation2 + $0x28] sm:$0xff] %vm652, %v554
      %658 = vst.msk [vmem:[#allocation2 + $0x30] sm:$0xff] %vm652, %v558
      %659 = vst.msk [vmem:[#allocation2 + $0x38] sm:$0xff] %vm652, %v564
      %660 = vst.msk [vmem:[#allocation2 + $0x40] sm:$0xff] %vm652, %v568
      %661 = vst.msk [vmem:[#allocation2 + $0x48] sm:$0xff] %vm652, %v574
      %662 = vst.msk [vmem:[#allocation2 + $0x50] sm:$0xff] %vm652, %v578
      %663 = vst.msk [vmem:[#allocation2 + $0x58] sm:$0xff] %vm652, %v584
      %664 = vst.msk [vmem:[#allocation2 + $0x60] sm:$0xff] %vm652, %v588
      %665 = vst.msk [vmem:[#allocation2 + $0x68] sm:$0xff] %vm652, %v594
      %666 = vst.msk [vmem:[#allocation2 + $0x70] sm:$0xff] %vm652, %v598
      %667 = vst.msk [vmem:[#allocation2 + $0x78] sm:$0xff] %vm652, %v604
      %668 = vst.msk [vmem:[#allocation2 + $0x80] sm:$0xff] %vm652, %v608
      %669 = vst.msk [vmem:[#allocation2 + $0x88] sm:$0xff] %vm652, %v614
      %670 = vst.msk [vmem:[#allocation2 + $0x90] sm:$0xff] %vm652, %v618
      %671 = vst.msk [vmem:[#allocation2 + $0x98] sm:$0xff] %vm652, %v624
      %672 = vst.msk [vmem:[#allocation2 + $0xa0] sm:$0xff] %vm652, %v628
      %673 = vst.msk [vmem:[#allocation2 + $0xa8] sm:$0xff] %vm652, %v634
      %674 = vst.msk [vmem:[#allocation2 + $0xb0] sm:$0xff] %vm652, %v638
      %675 = vst.msk [vmem:[#allocation2 + $0xb8] sm:$0xff] %vm652, %v644
      %676 = vst.msk [vmem:[#allocation2 + $0xc0] sm:$0xff] %vm652, %v648
      %v677 = vld [vmem:[%s2 + $0x3] sm:$0x1]
      %v678 = vlaneseq
      %v679 = vshrl.u32 %v678, 7
      %v680 = vsub.s32 0, %v679
      %v681 = vrot.slane %v677, %v680
      %v682 = vmul.f32 %v534, %v681
      %v683 = vmul.f32 %v538, %v681
      %v684 = vmul.f32 %v544, %v681
      %v685 = vmul.f32 %v548, %v681
      %v686 = vmul.f32 %v554, %v681
      %v687 = vmul.f32 %v558, %v681
      %v688 = vmul.f32 %v564, %v681
      %v689 = vmul.f32 %v568, %v681
      %v690 = vmul.f32 %v574, %v681
      %v691 = vmul.f32 %v578, %v681
      %v692 = vmul.f32 %v584, %v681
      %v693 = vmul.f32 %v588, %v681
      %v694 = vmul.f32 %v594, %v681
      %v695 = vmul.f32 %v598, %v681
      %v696 = vmul.f32 %v604, %v681
      %v697 = vmul.f32 %v608, %v681
      %v698 = vmul.f32 %v614, %v681
      %v699 = vmul.f32 %v618, %v681
      %v700 = vmul.f32 %v624, %v681
      %v701 = vmul.f32 %v628, %v681
      %v702 = vmul.f32 %v634, %v681
      %v703 = vmul.f32 %v638, %v681
      %v704 = vmul.f32 %v644, %v681
      %v705 = vmul.f32 %v648, %v681
      %v706 = vld [vmem:[#allocation2 + $0x5] sm:$0xff]
      %v707 = vld [vmem:[#allocation2 + $0xd] sm:$0xff]
      %v708 = vld [vmem:[#allocation2 + $0x15] sm:$0xff]
      %v709 = vld [vmem:[#allocation2 + $0x1d] sm:$0xff]
      %v710 = vld [vmem:[#allocation2 + $0x25] sm:$0xff]
      %v711 = vld [vmem:[#allocation2 + $0x2d] sm:$0xff]
      %v712 = vld [vmem:[#allocation2 + $0x35] sm:$0xff]
      %v713 = vld [vmem:[#allocation2 + $0x3d] sm:$0xff]
      %v714 = vld [vmem:[#allocation2 + $0x45] sm:$0xff]
      %v715 = vld [vmem:[#allocation2 + $0x4d] sm:$0xff]
      %v716 = vld [vmem:[#allocation2 + $0x55] sm:$0xff]
      %v717 = vld [vmem:[#allocation2 + $0x5d] sm:$0xff]
      %v718 = vld [vmem:[#allocation2 + $0x65] sm:$0xff]
      %v719 = vld [vmem:[#allocation2 + $0x6d] sm:$0xff]
      %v720 = vld [vmem:[#allocation2 + $0x75] sm:$0xff]
      %v721 = vld [vmem:[#allocation2 + $0x7d] sm:$0xff]
      %v722 = vld [vmem:[#allocation2 + $0x85] sm:$0xff]
      %v723 = vld [vmem:[#allocation2 + $0x8d] sm:$0xff]
      %v724 = vld [vmem:[#allocation2 + $0x95] sm:$0xff]
      %v725 = vld [vmem:[#allocation2 + $0x9d] sm:$0xff]
      %v726 = vld [vmem:[#allocation2 + $0xa5] sm:$0xff]
      %v727 = vld [vmem:[#allocation2 + $0xad] sm:$0xff]
      %v728 = vld [vmem:[#allocation2 + $0xb5] sm:$0xff]
      %v729 = vld [vmem:[#allocation2 + $0xbd] sm:$0xff]
      %v730 = vld [vmem:[%s2] sm:$0x1]
      %v731 = vlaneseq
      %v732 = vshrl.u32 %v731, 7
      %v733 = vsub.s32 0, %v732
      %v734 = vrot.slane %v730, %v733
      %v735 = vmul.f32 %v706, %v734
      %v736 = vmul.f32 %v707, %v734
      %v737 = vmul.f32 %v708, %v734
      %v738 = vmul.f32 %v709, %v734
      %v739 = vmul.f32 %v710, %v734
      %v740 = vmul.f32 %v711, %v734
      %v741 = vmul.f32 %v712, %v734
      %v742 = vmul.f32 %v713, %v734
      %v743 = vmul.f32 %v714, %v734
      %v744 = vmul.f32 %v715, %v734
      %v745 = vmul.f32 %v716, %v734
      %v746 = vmul.f32 %v717, %v734
      %v747 = vmul.f32 %v718, %v734
      %v748 = vmul.f32 %v719, %v734
      %v749 = vmul.f32 %v720, %v734
      %v750 = vmul.f32 %v721, %v734
      %v751 = vmul.f32 %v722, %v734
      %v752 = vmul.f32 %v723, %v734
      %v753 = vmul.f32 %v724, %v734
      %v754 = vmul.f32 %v725, %v734
      %v755 = vmul.f32 %v726, %v734
      %v756 = vmul.f32 %v727, %v734
      %v757 = vmul.f32 %v728, %v734
      %v758 = vmul.f32 %v729, %v734
      %v759 = vadd.f32 %v682, %v735
      %v760 = vadd.f32 %v683, %v736
      %v761 = vadd.f32 %v684, %v737
      %v762 = vadd.f32 %v685, %v738
      %v763 = vadd.f32 %v686, %v739
      %v764 = vadd.f32 %v687, %v740
      %v765 = vadd.f32 %v688, %v741
      %v766 = vadd.f32 %v689, %v742
      %v767 = vadd.f32 %v690, %v743
      %v768 = vadd.f32 %v691, %v744
      %v769 = vadd.f32 %v692, %v745
      %v770 = vadd.f32 %v693, %v746
      %v771 = vadd.f32 %v694, %v747
      %v772 = vadd.f32 %v695, %v748
      %v773 = vadd.f32 %v696, %v749
      %v774 = vadd.f32 %v697, %v750
      %v775 = vadd.f32 %v698, %v751
      %v776 = vadd.f32 %v699, %v752
      %v777 = vadd.f32 %v700, %v753
      %v778 = vadd.f32 %v701, %v754
      %v779 = vadd.f32 %v702, %v755
      %v780 = vadd.f32 %v703, %v756
      %v781 = vadd.f32 %v704, %v757
      %v782 = vadd.f32 %v705, %v758
      %v783 = vld [vmem:[#allocation2 + $0x6] sm:$0xff]
      %v784 = vld [vmem:[#allocation2 + $0xe] sm:$0xff]
      %v785 = vld [vmem:[#allocation2 + $0x16] sm:$0xff]
      %v786 = vld [vmem:[#allocation2 + $0x1e] sm:$0xff]
      %v787 = vld [vmem:[#allocation2 + $0x26] sm:$0xff]
      %v788 = vld [vmem:[#allocation2 + $0x2e] sm:$0xff]
      %v789 = vld [vmem:[#allocation2 + $0x36] sm:$0xff]
      %v790 = vld [vmem:[#allocation2 + $0x3e] sm:$0xff]
      %v791 = vld [vmem:[#allocation2 + $0x46] sm:$0xff]
      %v792 = vld [vmem:[#allocation2 + $0x4e] sm:$0xff]
      %v793 = vld [vmem:[#allocation2 + $0x56] sm:$0xff]
      %v794 = vld [vmem:[#allocation2 + $0x5e] sm:$0xff]
      %v795 = vld [vmem:[#allocation2 + $0x66] sm:$0xff]
      %v796 = vld [vmem:[#allocation2 + $0x6e] sm:$0xff]
      %v797 = vld [vmem:[#allocation2 + $0x76] sm:$0xff]
      %v798 = vld [vmem:[#allocation2 + $0x7e] sm:$0xff]
      %v799 = vld [vmem:[#allocation2 + $0x86] sm:$0xff]
      %v800 = vld [vmem:[#allocation2 + $0x8e] sm:$0xff]
      %v801 = vld [vmem:[#allocation2 + $0x96] sm:$0xff]
      %v802 = vld [vmem:[#allocation2 + $0x9e] sm:$0xff]
      %v803 = vld [vmem:[#allocation2 + $0xa6] sm:$0xff]
      %v804 = vld [vmem:[#allocation2 + $0xae] sm:$0xff]
      %v805 = vld [vmem:[#allocation2 + $0xb6] sm:$0xff]
      %v806 = vld [vmem:[#allocation2 + $0xbe] sm:$0xff]
      %v807 = vld [vmem:[%s2 + $0x1] sm:$0x1]
      %v808 = vlaneseq
      %v809 = vshrl.u32 %v808, 7
      %v810 = vsub.s32 0, %v809
      %v811 = vrot.slane %v807, %v810
      %v812 = vmul.f32 %v783, %v811
      %v813 = vmul.f32 %v784, %v811
      %v814 = vmul.f32 %v785, %v811
      %v815 = vmul.f32 %v786, %v811
      %v816 = vmul.f32 %v787, %v811
      %v817 = vmul.f32 %v788, %v811
      %v818 = vmul.f32 %v789, %v811
      %v819 = vmul.f32 %v790, %v811
      %v820 = vmul.f32 %v791, %v811
      %v821 = vmul.f32 %v792, %v811
      %v822 = vmul.f32 %v793, %v811
      %v823 = vmul.f32 %v794, %v811
      %v824 = vmul.f32 %v795, %v811
      %v825 = vmul.f32 %v796, %v811
      %v826 = vmul.f32 %v797, %v811
      %v827 = vmul.f32 %v798, %v811
      %v828 = vmul.f32 %v799, %v811
      %v829 = vmul.f32 %v800, %v811
      %v830 = vmul.f32 %v801, %v811
      %v831 = vmul.f32 %v802, %v811
      %v832 = vmul.f32 %v803, %v811
      %v833 = vmul.f32 %v804, %v811
      %v834 = vmul.f32 %v805, %v811
      %v835 = vmul.f32 %v806, %v811
      %v836 = vadd.f32 %v759, %v812
      %v837 = vadd.f32 %v760, %v813
      %v838 = vadd.f32 %v761, %v814
      %v839 = vadd.f32 %v762, %v815
      %v840 = vadd.f32 %v763, %v816
      %v841 = vadd.f32 %v764, %v817
      %v842 = vadd.f32 %v765, %v818
      %v843 = vadd.f32 %v766, %v819
      %v844 = vadd.f32 %v767, %v820
      %v845 = vadd.f32 %v768, %v821
      %v846 = vadd.f32 %v769, %v822
      %v847 = vadd.f32 %v770, %v823
      %v848 = vadd.f32 %v771, %v824
      %v849 = vadd.f32 %v772, %v825
      %v850 = vadd.f32 %v773, %v826
      %v851 = vadd.f32 %v774, %v827
      %v852 = vadd.f32 %v775, %v828
      %v853 = vadd.f32 %v776, %v829
      %v854 = vadd.f32 %v777, %v830
      %v855 = vadd.f32 %v778, %v831
      %v856 = vadd.f32 %v779, %v832
      %v857 = vadd.f32 %v780, %v833
      %v858 = vadd.f32 %v781, %v834
      %v859 = vadd.f32 %v782, %v835
      %v860 = vld [vmem:[#allocation2 + $0x7] sm:$0xff]
      %v861 = vld [vmem:[#allocation2 + $0xf] sm:$0xff]
      %v862 = vld [vmem:[#allocation2 + $0x17] sm:$0xff]
      %v863 = vld [vmem:[#allocation2 + $0x1f] sm:$0xff]
      %v864 = vld [vmem:[#allocation2 + $0x27] sm:$0xff]
      %v865 = vld [vmem:[#allocation2 + $0x2f] sm:$0xff]
      %v866 = vld [vmem:[#allocation2 + $0x37] sm:$0xff]
      %v867 = vld [vmem:[#allocation2 + $0x3f] sm:$0xff]
      %v868 = vld [vmem:[#allocation2 + $0x47] sm:$0xff]
      %v869 = vld [vmem:[#allocation2 + $0x4f] sm:$0xff]
      %v870 = vld [vmem:[#allocation2 + $0x57] sm:$0xff]
      %v871 = vld [vmem:[#allocation2 + $0x5f] sm:$0xff]
      %v872 = vld [vmem:[#allocation2 + $0x67] sm:$0xff]
      %v873 = vld [vmem:[#allocation2 + $0x6f] sm:$0xff]
      %v874 = vld [vmem:[#allocation2 + $0x77] sm:$0xff]
      %v875 = vld [vmem:[#allocation2 + $0x7f] sm:$0xff]
      %v876 = vld [vmem:[#allocation2 + $0x87] sm:$0xff]
      %v877 = vld [vmem:[#allocation2 + $0x8f] sm:$0xff]
      %v878 = vld [vmem:[#allocation2 + $0x97] sm:$0xff]
      %v879 = vld [vmem:[#allocation2 + $0x9f] sm:$0xff]
      %v880 = vld [vmem:[#allocation2 + $0xa7] sm:$0xff]
      %v881 = vld [vmem:[#allocation2 + $0xaf] sm:$0xff]
      %v882 = vld [vmem:[#allocation2 + $0xb7] sm:$0xff]
      %v883 = vld [vmem:[#allocation2 + $0xbf] sm:$0xff]
      %v884 = vld [vmem:[%s2 + $0x2] sm:$0x1]
      %v885 = vlaneseq
      %v886 = vshrl.u32 %v885, 7
      %v887 = vsub.s32 0, %v886
      %v888 = vrot.slane %v884, %v887
      %v889 = vmul.f32 %v860, %v888
      %v890 = vmul.f32 %v861, %v888
      %v891 = vmul.f32 %v862, %v888
      %v892 = vmul.f32 %v863, %v888
      %v893 = vmul.f32 %v864, %v888
      %v894 = vmul.f32 %v865, %v888
      %v895 = vmul.f32 %v866, %v888
      %v896 = vmul.f32 %v867, %v888
      %v897 = vmul.f32 %v868, %v888
      %v898 = vmul.f32 %v869, %v888
      %v899 = vmul.f32 %v870, %v888
      %v900 = vmul.f32 %v871, %v888
      %v901 = vmul.f32 %v872, %v888
      %v902 = vmul.f32 %v873, %v888
      %v903 = vmul.f32 %v874, %v888
      %v904 = vmul.f32 %v875, %v888
      %v905 = vmul.f32 %v876, %v888
      %v906 = vmul.f32 %v877, %v888
      %v907 = vmul.f32 %v878, %v888
      %v908 = vmul.f32 %v879, %v888
      %v909 = vmul.f32 %v880, %v888
      %v910 = vmul.f32 %v881, %v888
      %v911 = vmul.f32 %v882, %v888
      %v912 = vmul.f32 %v883, %v888
      %v913 = vadd.f32 %v836, %v889
      %v914 = vadd.f32 %v837, %v890
      %v915 = vadd.f32 %v838, %v891
      %v916 = vadd.f32 %v839, %v892
      %v917 = vadd.f32 %v840, %v893
      %v918 = vadd.f32 %v841, %v894
      %v919 = vadd.f32 %v842, %v895
      %v920 = vadd.f32 %v843, %v896
      %v921 = vadd.f32 %v844, %v897
      %v922 = vadd.f32 %v845, %v898
      %v923 = vadd.f32 %v846, %v899
      %v924 = vadd.f32 %v847, %v900
      %v925 = vadd.f32 %v848, %v901
      %v926 = vadd.f32 %v849, %v902
      %v927 = vadd.f32 %v850, %v903
      %v928 = vadd.f32 %v851, %v904
      %v929 = vadd.f32 %v852, %v905
      %v930 = vadd.f32 %v853, %v906
      %v931 = vadd.f32 %v854, %v907
      %v932 = vadd.f32 %v855, %v908
      %v933 = vadd.f32 %v856, %v909
      %v934 = vadd.f32 %v857, %v910
      %v935 = vadd.f32 %v858, %v911
      %v936 = vadd.f32 %v859, %v912
      %v937 = vld [vmem:[%s3] sm:$0x1]
      %v939 = vlaneseq
      %v940 = vshrl.u32 %v939, 7
      %v941 = vsub.s32 0, %v940
      %v942 = vrot.slane %v937, %v941
      %v944 = vadd.f32 %v913, %v942
      %v945 = vadd.f32 %v914, %v942
      %v946 = vadd.f32 %v915, %v942
      %v947 = vadd.f32 %v916, %v942
      %v948 = vadd.f32 %v917, %v942
      %v949 = vadd.f32 %v918, %v942
      %v950 = vadd.f32 %v919, %v942
      %v951 = vadd.f32 %v920, %v942
      %v952 = vadd.f32 %v921, %v942
      %v953 = vadd.f32 %v922, %v942
      %v954 = vadd.f32 %v923, %v942
      %v955 = vadd.f32 %v924, %v942
      %v956 = vadd.f32 %v925, %v942
      %v957 = vadd.f32 %v926, %v942
      %v958 = vadd.f32 %v927, %v942
      %v959 = vadd.f32 %v928, %v942
      %v960 = vadd.f32 %v929, %v942
      %v961 = vadd.f32 %v930, %v942
      %v962 = vadd.f32 %v931, %v942
      %v963 = vadd.f32 %v932, %v942
      %v964 = vadd.f32 %v933, %v942
      %v965 = vadd.f32 %v934, %v942
      %v966 = vadd.f32 %v935, %v942
      %v967 = vadd.f32 %v936, %v942
      %968 = vst.msk [vmem:[#allocation2] sm:$0xff] %vm652, %v648
      %v969 = vsub.f32 0.0, %v944
      %v970 = vsub.f32 0.0, %v945
      %v971 = vsub.f32 0.0, %v946
      %v972 = vsub.f32 0.0, %v947
      %v973 = vsub.f32 0.0, %v948
      %v974 = vsub.f32 0.0, %v949
      %v975 = vsub.f32 0.0, %v950
      %v976 = vsub.f32 0.0, %v951
      %v977 = vsub.f32 0.0, %v952
      %v978 = vsub.f32 0.0, %v953
      %v979 = vsub.f32 0.0, %v954
      %v980 = vsub.f32 0.0, %v955
      %v981 = vsub.f32 0.0, %v956
      %v982 = vsub.f32 0.0, %v957
      %v983 = vsub.f32 0.0, %v958
      %v984 = vsub.f32 0.0, %v959
      %v985 = vsub.f32 0.0, %v960
      %v986 = vsub.f32 0.0, %v961
      %v987 = vsub.f32 0.0, %v962
      %v988 = vsub.f32 0.0, %v963
      %v989 = vsub.f32 0.0, %v964
      %v990 = vsub.f32 0.0, %v965
      %v991 = vsub.f32 0.0, %v966
      %v992 = vsub.f32 0.0, %v967
      %v993 = vmul.f32 %v969, 1.442695
      %v994 = vpow.pop %v993
      %v995 = vmul.f32 %v970, 1.442695
      %v996 = vpow.pop %v995
      %v997 = vmul.f32 %v971, 1.442695
      %v998 = vpow.pop %v997
      %v999 = vmul.f32 %v972, 1.442695
      %v1000 = vpow.pop %v999
      %v1001 = vmul.f32 %v973, 1.442695
      %v1002 = vpow.pop %v1001
      %v1003 = vmul.f32 %v974, 1.442695
      %v1004 = vpow.pop %v1003
      %v1005 = vmul.f32 %v975, 1.442695
      %v1006 = vpow.pop %v1005
      %v1007 = vmul.f32 %v976, 1.442695
      %v1008 = vpow.pop %v1007
      %v1009 = vmul.f32 %v977, 1.442695
      %v1010 = vpow.pop %v1009
      %v1011 = vmul.f32 %v978, 1.442695
      %v1012 = vpow.pop %v1011
      %v1013 = vmul.f32 %v979, 1.442695
      %v1014 = vpow.pop %v1013
      %v1015 = vmul.f32 %v980, 1.442695
      %v1016 = vpow.pop %v1015
      %v1017 = vmul.f32 %v981, 1.442695
      %v1018 = vpow.pop %v1017
      %v1019 = vmul.f32 %v982, 1.442695
      %v1020 = vpow.pop %v1019
      %v1021 = vmul.f32 %v983, 1.442695
      %v1022 = vpow.pop %v1021
      %v1023 = vmul.f32 %v984, 1.442695
      %v1024 = vpow.pop %v1023
      %v1025 = vmul.f32 %v985, 1.442695
      %v1026 = vpow.pop %v1025
      %v1027 = vmul.f32 %v986, 1.442695
      %v1028 = vpow.pop %v1027
      %v1029 = vmul.f32 %v987, 1.442695
      %v1030 = vpow.pop %v1029
      %v1031 = vmul.f32 %v988, 1.442695
      %v1032 = vpow.pop %v1031
      %v1033 = vmul.f32 %v989, 1.442695
      %v1034 = vpow.pop %v1033
      %v1035 = vmul.f32 %v990, 1.442695
      %v1036 = vpow.pop %v1035
      %v1037 = vmul.f32 %v991, 1.442695
      %v1038 = vpow.pop %v1037
      %v1039 = vmul.f32 %v992, 1.442695
      %v1040 = vpow.pop %v1039
      %v1041 = vadd.f32 %v994, 1.0
      %v1042 = vadd.f32 %v996, 1.0
      %v1043 = vadd.f32 %v998, 1.0
      %v1044 = vadd.f32 %v1000, 1.0
      %v1045 = vadd.f32 %v1002, 1.0
      %v1046 = vadd.f32 %v1004, 1.0
      %v1047 = vadd.f32 %v1006, 1.0
      %v1048 = vadd.f32 %v1008, 1.0
      %v1049 = vadd.f32 %v1010, 1.0
      %v1050 = vadd.f32 %v1012, 1.0
      %v1051 = vadd.f32 %v1014, 1.0
      %v1052 = vadd.f32 %v1016, 1.0
      %v1053 = vadd.f32 %v1018, 1.0
      %v1054 = vadd.f32 %v1020, 1.0
      %v1055 = vadd.f32 %v1022, 1.0
      %v1056 = vadd.f32 %v1024, 1.0
      %v1057 = vadd.f32 %v1026, 1.0
      %v1058 = vadd.f32 %v1028, 1.0
      %v1059 = vadd.f32 %v1030, 1.0
      %v1060 = vadd.f32 %v1032, 1.0
      %v1061 = vadd.f32 %v1034, 1.0
      %v1062 = vadd.f32 %v1036, 1.0
      %v1063 = vadd.f32 %v1038, 1.0
      %v1064 = vadd.f32 %v1040, 1.0
      %v1065 = vrcp.pop %v1041
      %v1066 = vrcp.pop %v1042
      %v1067 = vrcp.pop %v1043
      %v1068 = vrcp.pop %v1044
      %v1069 = vrcp.pop %v1045
      %v1070 = vrcp.pop %v1046
      %v1071 = vrcp.pop %v1047
      %v1072 = vrcp.pop %v1048
      %v1073 = vrcp.pop %v1049
      %v1074 = vrcp.pop %v1050
      %v1075 = vrcp.pop %v1051
      %v1076 = vrcp.pop %v1052
      %v1077 = vrcp.pop %v1053
      %v1078 = vrcp.pop %v1054
      %v1079 = vrcp.pop %v1055
      %v1080 = vrcp.pop %v1056
      %v1081 = vrcp.pop %v1057
      %v1082 = vrcp.pop %v1058
      %v1083 = vrcp.pop %v1059
      %v1084 = vrcp.pop %v1060
      %v1085 = vrcp.pop %v1061
      %v1086 = vrcp.pop %v1062
      %v1087 = vrcp.pop %v1063
      %v1088 = vrcp.pop %v1064
      %v1089 = vmul.f32 %v944, %v1065
      %v1090 = vmul.f32 %v945, %v1066
      %v1091 = vmul.f32 %v946, %v1067
      %v1092 = vmul.f32 %v947, %v1068
      %v1093 = vmul.f32 %v948, %v1069
      %v1094 = vmul.f32 %v949, %v1070
      %v1095 = vmul.f32 %v950, %v1071
      %v1096 = vmul.f32 %v951, %v1072
      %v1097 = vmul.f32 %v952, %v1073
      %v1098 = vmul.f32 %v953, %v1074
      %v1099 = vmul.f32 %v954, %v1075
      %v1100 = vmul.f32 %v955, %v1076
      %v1101 = vmul.f32 %v956, %v1077
      %v1102 = vmul.f32 %v957, %v1078
      %v1103 = vmul.f32 %v958, %v1079
      %v1104 = vmul.f32 %v959, %v1080
      %v1105 = vmul.f32 %v960, %v1081
      %v1106 = vmul.f32 %v961, %v1082
      %v1107 = vmul.f32 %v962, %v1083
      %v1108 = vmul.f32 %v963, %v1084
      %v1109 = vmul.f32 %v964, %v1085
      %v1110 = vmul.f32 %v965, %v1086
      %v1111 = vmul.f32 %v966, %v1087
      %v1112 = vmul.f32 %v967, %v1088
      %v1113 = vpack.c.bf16 %v1090, %v1089
      %v1114 = vpack.c.bf16 %v1092, %v1091
      %v1115 = vpack.c.bf16 %v1094, %v1093
      %v1116 = vpack.c.bf16 %v1096, %v1095
      %v1117 = vpack.c.bf16 %v1098, %v1097
      %v1118 = vpack.c.bf16 %v1100, %v1099
      %v1119 = vpack.c.bf16 %v1102, %v1101
      %v1120 = vpack.c.bf16 %v1104, %v1103
      %v1121 = vpack.c.bf16 %v1106, %v1105
      %v1122 = vpack.c.bf16 %v1108, %v1107
      %v1123 = vpack.c.bf16 %v1110, %v1109
      %v1124 = vpack.c.bf16 %v1112, %v1111
      %v1125 = vld [vmem:[%s4] sm:$0xff]
      %v1126 = vld [vmem:[%s4 + $0x8] sm:$0xf]
      %v1127 = vld [vmem:[%s4 + $0xc] sm:$0xff]
      %v1128 = vld [vmem:[%s4 + $0x14] sm:$0xf]
      %v1129 = vld [vmem:[%s4 + $0x18] sm:$0xff]
      %v1130 = vld [vmem:[%s4 + $0x20] sm:$0xf]
      %v1131 = vld [vmem:[%s4 + $0x24] sm:$0xff]
      %v1132 = vld [vmem:[%s4 + $0x2c] sm:$0xf]
      %v1141 = vunpack.c.l.b16 %v1125
      %v1142 = vunpack.c.h.b16 %v1125
      %v1143 = vunpack.c.l.b16 %v1126
      %v1144 = vunpack.c.l.b16 %v1127
      %v1145 = vunpack.c.h.b16 %v1127
      %v1146 = vunpack.c.l.b16 %v1128
      %v1147 = vunpack.c.l.b16 %v1129
      %v1148 = vunpack.c.h.b16 %v1129
      %v1149 = vunpack.c.l.b16 %v1130
      %v1150 = vunpack.c.l.b16 %v1131
      %v1151 = vunpack.c.h.b16 %v1131
      %v1152 = vunpack.c.l.b16 %v1132
      %v1153 = vpack.c.b16 %v1144, %v1141
      %v1154 = vpack.c.b16 %v1145, %v1142
      %v1155 = vpack.c.b16 %v1146, %v1143
      %v1156 = vpack.c.b16 %v1150, %v1147
      %v1157 = vpack.c.b16 %v1151, %v1148
      %v1158 = vpack.c.b16 %v1152, %v1149
      %v1166 = vsel %vm652, %v1113, 0
      %v1169 = vsel %vm652, %v1114, 0
      %v1172 = vsel %vm652, %v1115, 0
      %v1175 = vsel %vm652, %v1116, 0
      %v1178 = vsel %vm652, %v1117, 0
      %v1181 = vsel %vm652, %v1118, 0
      %v1184 = vsel %vm652, %v1119, 0
      %v1187 = vsel %vm652, %v1120, 0
      %v1190 = vsel %vm652, %v1121, 0
      %v1193 = vsel %vm652, %v1122, 0
      %v1196 = vsel %vm652, %v1123, 0
      %v1199 = vsel %vm652, %v1124, 0
      %1201 = vmatprep.subr.bf16.mxu0 0
      %1202 = vmatpush1.bf16.msra.mxu0 0
      %1203 = vmatprep.subr.bf16.mxu0 0
      %1204 = vmatpush1.bf16.msra.mxu0 0
      %1205 = vmatprep.subr.bf16.mxu0 0
      %1206 = vmatpush1.bf16.msra.mxu0 0
      %1207 = vmatprep.subr.bf16.mxu0 0
      %1208 = vmatpush1.bf16.msra.mxu0 0
      %1209 = vmatprep.subr.bf16.mxu0 0
      %1210 = vmatpush1.bf16.msra.mxu0 0
      %1211 = vmatprep.subr.bf16.mxu0 0
      %1212 = vmatpush1.bf16.msra.mxu0 0
      %1213 = vmatprep.subr.bf16.mxu0 %v1157
      %1214 = vmatpush1.bf16.msra.mxu0 %v1156
      %1215 = vmatprep.subr.bf16.mxu0 %v1154
      %1216 = vmatpush1.bf16.msra.mxu0 %v1153
      %1217 = vmatprep.subr.bf16.mxu0 0
      %1218 = vmatpush2.bf16.msra.mxu0 0
      %1219 = vmatprep.subr.bf16.mxu0 0
      %1220 = vmatpush2.bf16.msra.mxu0 0
      %1221 = vmatprep.subr.bf16.mxu0 0
      %1222 = vmatpush2.bf16.msra.mxu0 0
      %1223 = vmatprep.subr.bf16.mxu0 0
      %1224 = vmatpush2.bf16.msra.mxu0 0
      %1225 = vmatprep.subr.bf16.mxu0 0
      %1226 = vmatpush2.bf16.msra.mxu0 0
      %1227 = vmatprep.subr.bf16.mxu0 0
      %1228 = vmatpush2.bf16.msra.mxu0 0
      %1229 = vmatprep.subr.bf16.mxu0 0
      %1230 = vmatpush2.bf16.msra.mxu0 0
      %1231 = vmatprep.subr.bf16.mxu0 0
      %1232 = vmatpush2.bf16.msra.mxu0 0
      %1233 = vmatprep.mubr.bf16.mxu0 0
      %1234 = vmatmul.mubr.bf16.gmra.mxu0 %v1166
      %v1235 = vpop.f32.mrf.mxu0
      %v1236 = vadd.f32 0.0, %v1235
      %v1237 = vpop.f32.mrf.mxu0
      %v1238 = vadd.f32 0.0, %v1237
      %v1239 = vpop.f32.mrf.mxu0
      %v1240 = vadd.f32 0.0, %v1239
      %v1241 = vpop.f32.mrf.mxu0
      %v1242 = vadd.f32 0.0, %v1241
      %1243 = vmatprep.mubr.bf16.mxu0 0
      %1244 = vmatmul.mubr.bf16.gmra.mxu0 %v1169
      %v1245 = vpop.f32.mrf.mxu0
      %v1246 = vadd.f32 0.0, %v1245
      %v1247 = vpop.f32.mrf.mxu0
      %v1248 = vadd.f32 0.0, %v1247
      %v1249 = vpop.f32.mrf.mxu0
      %v1250 = vadd.f32 0.0, %v1249
      %v1251 = vpop.f32.mrf.mxu0
      %v1252 = vadd.f32 0.0, %v1251
      %1253 = vmatprep.mubr.bf16.mxu0 0
      %1254 = vmatmul.mubr.bf16.gmra.mxu0 %v1172
      %v1255 = vpop.f32.mrf.mxu0
      %v1256 = vadd.f32 0.0, %v1255
      %v1257 = vpop.f32.mrf.mxu0
      %v1258 = vadd.f32 0.0, %v1257
      %v1259 = vpop.f32.mrf.mxu0
      %v1260 = vadd.f32 0.0, %v1259
      %v1261 = vpop.f32.mrf.mxu0
      %v1262 = vadd.f32 0.0, %v1261
      %1263 = vmatprep.mubr.bf16.mxu0 0
      %1264 = vmatmul.mubr.bf16.gmra.mxu0 %v1175
      %v1265 = vpop.f32.mrf.mxu0
      %v1266 = vadd.f32 0.0, %v1265
      %v1267 = vpop.f32.mrf.mxu0
      %v1268 = vadd.f32 0.0, %v1267
      %v1269 = vpop.f32.mrf.mxu0
      %v1270 = vadd.f32 0.0, %v1269
      %v1271 = vpop.f32.mrf.mxu0
      %v1272 = vadd.f32 0.0, %v1271
      %1273 = vmatprep.mubr.bf16.mxu0 0
      %1274 = vmatmul.mubr.bf16.gmra.mxu0 %v1178
      %v1275 = vpop.f32.mrf.mxu0
      %v1276 = vadd.f32 0.0, %v1275
      %v1277 = vpop.f32.mrf.mxu0
      %v1278 = vadd.f32 0.0, %v1277
      %v1279 = vpop.f32.mrf.mxu0
      %v1280 = vadd.f32 0.0, %v1279
      %v1281 = vpop.f32.mrf.mxu0
      %v1282 = vadd.f32 0.0, %v1281
      %1283 = vmatprep.mubr.bf16.mxu0 0
      %1284 = vmatmul.mubr.bf16.gmra.mxu0 %v1181
      %v1285 = vpop.f32.mrf.mxu0
      %v1286 = vadd.f32 0.0, %v1285
      %v1287 = vpop.f32.mrf.mxu0
      %v1288 = vadd.f32 0.0, %v1287
      %v1289 = vpop.f32.mrf.mxu0
      %v1290 = vadd.f32 0.0, %v1289
      %v1291 = vpop.f32.mrf.mxu0
      %v1292 = vadd.f32 0.0, %v1291
      %1293 = vmatprep.mubr.bf16.mxu0 0
      %1294 = vmatmul.mubr.bf16.gmra.mxu0 %v1184
      %v1295 = vpop.f32.mrf.mxu0
      %v1296 = vadd.f32 0.0, %v1295
      %v1297 = vpop.f32.mrf.mxu0
      %v1298 = vadd.f32 0.0, %v1297
      %v1299 = vpop.f32.mrf.mxu0
      %v1300 = vadd.f32 0.0, %v1299
      %v1301 = vpop.f32.mrf.mxu0
      %v1302 = vadd.f32 0.0, %v1301
      %1303 = vmatprep.mubr.bf16.mxu0 0
      %1304 = vmatmul.mubr.bf16.gmra.mxu0 %v1187
      %v1305 = vpop.f32.mrf.mxu0
      %v1306 = vadd.f32 0.0, %v1305
      %v1307 = vpop.f32.mrf.mxu0
      %v1308 = vadd.f32 0.0, %v1307
      %v1309 = vpop.f32.mrf.mxu0
      %v1310 = vadd.f32 0.0, %v1309
      %v1311 = vpop.f32.mrf.mxu0
      %v1312 = vadd.f32 0.0, %v1311
      %1313 = vmatprep.mubr.bf16.mxu0 0
      %1314 = vmatmul.mubr.bf16.gmra.mxu0 %v1190
      %v1315 = vpop.f32.mrf.mxu0
      %v1316 = vadd.f32 0.0, %v1315
      %v1317 = vpop.f32.mrf.mxu0
      %v1318 = vadd.f32 0.0, %v1317
      %v1319 = vpop.f32.mrf.mxu0
      %v1320 = vadd.f32 0.0, %v1319
      %v1321 = vpop.f32.mrf.mxu0
      %v1322 = vadd.f32 0.0, %v1321
      %1323 = vmatprep.mubr.bf16.mxu0 0
      %1324 = vmatmul.mubr.bf16.gmra.mxu0 %v1193
      %v1325 = vpop.f32.mrf.mxu0
      %v1326 = vadd.f32 0.0, %v1325
      %v1327 = vpop.f32.mrf.mxu0
      %v1328 = vadd.f32 0.0, %v1327
      %v1329 = vpop.f32.mrf.mxu0
      %v1330 = vadd.f32 0.0, %v1329
      %v1331 = vpop.f32.mrf.mxu0
      %v1332 = vadd.f32 0.0, %v1331
      %1333 = vmatprep.mubr.bf16.mxu0 0
      %1334 = vmatmul.mubr.bf16.gmra.mxu0 %v1196
      %v1335 = vpop.f32.mrf.mxu0
      %v1336 = vadd.f32 0.0, %v1335
      %v1337 = vpop.f32.mrf.mxu0
      %v1338 = vadd.f32 0.0, %v1337
      %v1339 = vpop.f32.mrf.mxu0
      %v1340 = vadd.f32 0.0, %v1339
      %v1341 = vpop.f32.mrf.mxu0
      %v1342 = vadd.f32 0.0, %v1341
      %1343 = vmatprep.mubr.bf16.mxu0 0
      %1344 = vmatmul.mubr.bf16.gmra.mxu0 %v1199
      %v1345 = vpop.f32.mrf.mxu0
      %v1346 = vadd.f32 0.0, %v1345
      %v1347 = vpop.f32.mrf.mxu0
      %v1348 = vadd.f32 0.0, %v1347
      %v1349 = vpop.f32.mrf.mxu0
      %v1350 = vadd.f32 0.0, %v1349
      %v1351 = vpop.f32.mrf.mxu0
      %v1352 = vadd.f32 0.0, %v1351
      %1353 = vdwg.mxu0
      %1354 = vmatprep.subr.bf16.mxu0 0
      %1355 = vmatpush1.bf16.msra.mxu0 0
      %1356 = vmatprep.subr.bf16.mxu0 0
      %1357 = vmatpush1.bf16.msra.mxu0 0
      %1358 = vmatprep.subr.bf16.mxu0 0
      %1359 = vmatpush1.bf16.msra.mxu0 0
      %1360 = vmatprep.subr.bf16.mxu0 0
      %1361 = vmatpush1.bf16.msra.mxu0 0
      %1362 = vmatprep.subr.bf16.mxu0 0
      %1363 = vmatpush1.bf16.msra.mxu0 0
      %1364 = vmatprep.subr.bf16.mxu0 0
      %1365 = vmatpush1.bf16.msra.mxu0 0
      %1366 = vmatprep.subr.bf16.mxu0 0
      %1367 = vmatpush1.bf16.msra.mxu0 %v1158
      %1368 = vmatprep.subr.bf16.mxu0 0
      %1369 = vmatpush1.bf16.msra.mxu0 %v1155
      %1370 = vmatprep.subr.bf16.mxu0 0
      %1371 = vmatpush2.bf16.msra.mxu0 0
      %1372 = vmatprep.subr.bf16.mxu0 0
      %1373 = vmatpush2.bf16.msra.mxu0 0
      %1374 = vmatprep.subr.bf16.mxu0 0
      %1375 = vmatpush2.bf16.msra.mxu0 0
      %1376 = vmatprep.subr.bf16.mxu0 0
      %1377 = vmatpush2.bf16.msra.mxu0 0
      %1378 = vmatprep.subr.bf16.mxu0 0
      %1379 = vmatpush2.bf16.msra.mxu0 0
      %1380 = vmatprep.subr.bf16.mxu0 0
      %1381 = vmatpush2.bf16.msra.mxu0 0
      %1382 = vmatprep.subr.bf16.mxu0 0
      %1383 = vmatpush2.bf16.msra.mxu0 0
      %1384 = vmatprep.subr.bf16.mxu0 0
      %1385 = vmatpush2.bf16.msra.mxu0 0
      %1386 = vmatprep.mubr.bf16.mxu0 0
      %1387 = vmatmul.mubr.bf16.gmra.mxu0 %v1166
      %v1388 = vpop.f32.mrf.mxu0
      %v1389 = vadd.f32 0.0, %v1388
      %v1390 = vpop.f32.mrf.mxu0
      %v1391 = vpop.f32.mrf.mxu0
      %v1392 = vadd.f32 0.0, %v1391
      %v1393 = vpop.f32.mrf.mxu0
      %1394 = vmatprep.mubr.bf16.mxu0 0
      %1395 = vmatmul.mubr.bf16.gmra.mxu0 %v1169
      %v1396 = vpop.f32.mrf.mxu0
      %v1397 = vadd.f32 0.0, %v1396
      %v1398 = vpop.f32.mrf.mxu0
      %v1399 = vpop.f32.mrf.mxu0
      %v1400 = vadd.f32 0.0, %v1399
      %v1401 = vpop.f32.mrf.mxu0
      %1402 = vmatprep.mubr.bf16.mxu0 0
      %1403 = vmatmul.mubr.bf16.gmra.mxu0 %v1172
      %v1404 = vpop.f32.mrf.mxu0
      %v1405 = vadd.f32 0.0, %v1404
      %v1406 = vpop.f32.mrf.mxu0
      %v1407 = vpop.f32.mrf.mxu0
      %v1408 = vadd.f32 0.0, %v1407
      %v1409 = vpop.f32.mrf.mxu0
      %1410 = vmatprep.mubr.bf16.mxu0 0
      %1411 = vmatmul.mubr.bf16.gmra.mxu0 %v1175
      %v1412 = vpop.f32.mrf.mxu0
      %v1413 = vadd.f32 0.0, %v1412
      %v1414 = vpop.f32.mrf.mxu0
      %v1415 = vpop.f32.mrf.mxu0
      %v1416 = vadd.f32 0.0, %v1415
      %v1417 = vpop.f32.mrf.mxu0
      %1418 = vmatprep.mubr.bf16.mxu0 0
      %1419 = vmatmul.mubr.bf16.gmra.mxu0 %v1178
      %v1420 = vpop.f32.mrf.mxu0
      %v1421 = vadd.f32 0.0, %v1420
      %v1422 = vpop.f32.mrf.mxu0
      %v1423 = vpop.f32.mrf.mxu0
      %v1424 = vadd.f32 0.0, %v1423
      %v1425 = vpop.f32.mrf.mxu0
      %1426 = vmatprep.mubr.bf16.mxu0 0
      %1427 = vmatmul.mubr.bf16.gmra.mxu0 %v1181
      %v1428 = vpop.f32.mrf.mxu0
      %v1429 = vadd.f32 0.0, %v1428
      %v1430 = vpop.f32.mrf.mxu0
      %v1431 = vpop.f32.mrf.mxu0
      %v1432 = vadd.f32 0.0, %v1431
      %v1433 = vpop.f32.mrf.mxu0
      %1434 = vmatprep.mubr.bf16.mxu0 0
      %1435 = vmatmul.mubr.bf16.gmra.mxu0 %v1184
      %v1436 = vpop.f32.mrf.mxu0
      %v1437 = vadd.f32 0.0, %v1436
      %v1438 = vpop.f32.mrf.mxu0
      %v1439 = vpop.f32.mrf.mxu0
      %v1440 = vadd.f32 0.0, %v1439
      %v1441 = vpop.f32.mrf.mxu0
      %1442 = vmatprep.mubr.bf16.mxu0 0
      %1443 = vmatmul.mubr.bf16.gmra.mxu0 %v1187
      %v1444 = vpop.f32.mrf.mxu0
      %v1445 = vadd.f32 0.0, %v1444
      %v1446 = vpop.f32.mrf.mxu0
      %v1447 = vpop.f32.mrf.mxu0
      %v1448 = vadd.f32 0.0, %v1447
      %v1449 = vpop.f32.mrf.mxu0
      %1450 = vmatprep.mubr.bf16.mxu0 0
      %1451 = vmatmul.mubr.bf16.gmra.mxu0 %v1190
      %v1452 = vpop.f32.mrf.mxu0
      %v1453 = vadd.f32 0.0, %v1452
      %v1454 = vpop.f32.mrf.mxu0
      %v1455 = vpop.f32.mrf.mxu0
      %v1456 = vadd.f32 0.0, %v1455
      %v1457 = vpop.f32.mrf.mxu0
      %1458 = vmatprep.mubr.bf16.mxu0 0
      %1459 = vmatmul.mubr.bf16.gmra.mxu0 %v1193
      %v1460 = vpop.f32.mrf.mxu0
      %v1461 = vadd.f32 0.0, %v1460
      %v1462 = vpop.f32.mrf.mxu0
      %v1463 = vpop.f32.mrf.mxu0
      %v1464 = vadd.f32 0.0, %v1463
      %v1465 = vpop.f32.mrf.mxu0
      %1466 = vmatprep.mubr.bf16.mxu0 0
      %1467 = vmatmul.mubr.bf16.gmra.mxu0 %v1196
      %v1468 = vpop.f32.mrf.mxu0
      %v1469 = vadd.f32 0.0, %v1468
      %v1470 = vpop.f32.mrf.mxu0
      %v1471 = vpop.f32.mrf.mxu0
      %v1472 = vadd.f32 0.0, %v1471
      %v1473 = vpop.f32.mrf.mxu0
      %1474 = vmatprep.mubr.bf16.mxu0 0
      %1475 = vmatmul.mubr.bf16.gmra.mxu0 %v1199
      %v1476 = vpop.f32.mrf.mxu0
      %v1477 = vadd.f32 0.0, %v1476
      %v1478 = vpop.f32.mrf.mxu0
      %v1479 = vpop.f32.mrf.mxu0
      %v1480 = vadd.f32 0.0, %v1479
      %v1481 = vpop.f32.mrf.mxu0
      %1482 = vdwg.mxu0
      %v1483 = vld [vmem:[%s5] sm:$0x1]
      %1485 = vset.pattern.permute.xlu0 0
      %1486 = vperm.xlu0 %1485, %v1389
      %v1487 = vpop.permute.xlu0 %1486
      %1490 = vset.pattern.permute.xlu0 0
      %1491 = vperm.xlu0 %1490, %v1392
      %v1492 = vpop.permute.xlu0 %1491
      %1495 = vset.pattern.permute.xlu0 0
      %1496 = vperm.xlu0 %1495, %v1397
      %v1497 = vpop.permute.xlu0 %1496
      %1500 = vset.pattern.permute.xlu0 0
      %1501 = vperm.xlu0 %1500, %v1400
      %v1502 = vpop.permute.xlu0 %1501
      %1505 = vset.pattern.permute.xlu0 0
      %1506 = vperm.xlu0 %1505, %v1405
      %v1507 = vpop.permute.xlu0 %1506
      %1510 = vset.pattern.permute.xlu0 0
      %1511 = vperm.xlu0 %1510, %v1408
      %v1512 = vpop.permute.xlu0 %1511
      %1515 = vset.pattern.permute.xlu0 0
      %1516 = vperm.xlu0 %1515, %v1413
      %v1517 = vpop.permute.xlu0 %1516
      %1520 = vset.pattern.permute.xlu0 0
      %1521 = vperm.xlu0 %1520, %v1416
      %v1522 = vpop.permute.xlu0 %1521
      %1525 = vset.pattern.permute.xlu0 0
      %1526 = vperm.xlu0 %1525, %v1421
      %v1527 = vpop.permute.xlu0 %1526
      %1530 = vset.pattern.permute.xlu0 0
      %1531 = vperm.xlu0 %1530, %v1424
      %v1532 = vpop.permute.xlu0 %1531
      %1535 = vset.pattern.permute.xlu0 0
      %1536 = vperm.xlu0 %1535, %v1429
      %v1537 = vpop.permute.xlu0 %1536
      %1540 = vset.pattern.permute.xlu0 0
      %1541 = vperm.xlu0 %1540, %v1432
      %v1542 = vpop.permute.xlu0 %1541
      %1545 = vset.pattern.permute.xlu0 0
      %1546 = vperm.xlu0 %1545, %v1437
      %v1547 = vpop.permute.xlu0 %1546
      %1550 = vset.pattern.permute.xlu0 0
      %1551 = vperm.xlu0 %1550, %v1440
      %v1552 = vpop.permute.xlu0 %1551
      %1555 = vset.pattern.permute.xlu0 0
      %1556 = vperm.xlu0 %1555, %v1445
      %v1557 = vpop.permute.xlu0 %1556
      %1560 = vset.pattern.permute.xlu0 0
      %1561 = vperm.xlu0 %1560, %v1448
      %v1562 = vpop.permute.xlu0 %1561
      %1565 = vset.pattern.permute.xlu0 0
      %1566 = vperm.xlu0 %1565, %v1453
      %v1567 = vpop.permute.xlu0 %1566
      %1570 = vset.pattern.permute.xlu0 0
      %1571 = vperm.xlu0 %1570, %v1456
      %v1572 = vpop.permute.xlu0 %1571
      %1575 = vset.pattern.permute.xlu0 0
      %1576 = vperm.xlu0 %1575, %v1461
      %v1577 = vpop.permute.xlu0 %1576
      %1580 = vset.pattern.permute.xlu0 0
      %1581 = vperm.xlu0 %1580, %v1464
      %v1582 = vpop.permute.xlu0 %1581
      %1585 = vset.pattern.permute.xlu0 0
      %1586 = vperm.xlu0 %1585, %v1469
      %v1587 = vpop.permute.xlu0 %1586
      %1590 = vset.pattern.permute.xlu0 0
      %1591 = vperm.xlu0 %1590, %v1472
      %v1592 = vpop.permute.xlu0 %1591
      %1595 = vset.pattern.permute.xlu0 0
      %1596 = vperm.xlu0 %1595, %v1477
      %v1597 = vpop.permute.xlu0 %1596
      %1600 = vset.pattern.permute.xlu0 0
      %1601 = vperm.xlu0 %1600, %v1480
      %v1602 = vpop.permute.xlu0 %1601
      %v1605 = vlaneseq
      %v1606 = vshrl.u32 %v1605, 7
      %v1607 = vsub.s32 0, %v1606
      %v1608 = vrot.slane %v1483, %v1607
      %v1610 = vmul.f32 %v1487, %v1608
      %v1611 = vmul.f32 %v1492, %v1608
      %v1612 = vmul.f32 %v1497, %v1608
      %v1613 = vmul.f32 %v1502, %v1608
      %v1614 = vmul.f32 %v1507, %v1608
      %v1615 = vmul.f32 %v1512, %v1608
      %v1616 = vmul.f32 %v1517, %v1608
      %v1617 = vmul.f32 %v1522, %v1608
      %v1618 = vmul.f32 %v1527, %v1608
      %v1619 = vmul.f32 %v1532, %v1608
      %v1620 = vmul.f32 %v1537, %v1608
      %v1621 = vmul.f32 %v1542, %v1608
      %v1622 = vmul.f32 %v1547, %v1608
      %v1623 = vmul.f32 %v1552, %v1608
      %v1624 = vmul.f32 %v1557, %v1608
      %v1625 = vmul.f32 %v1562, %v1608
      %v1626 = vmul.f32 %v1567, %v1608
      %v1627 = vmul.f32 %v1572, %v1608
      %v1628 = vmul.f32 %v1577, %v1608
      %v1629 = vmul.f32 %v1582, %v1608
      %v1630 = vmul.f32 %v1587, %v1608
      %v1631 = vmul.f32 %v1592, %v1608
      %v1632 = vmul.f32 %v1597, %v1608
      %v1633 = vmul.f32 %v1602, %v1608
      %v1634 = vld [vmem:[%s6] sm:$0x1]
      %v1636 = vlaneseq
      %v1637 = vshrl.u32 %v1636, 7
      %v1638 = vsub.s32 0, %v1637
      %v1639 = vrot.slane %v1634, %v1638
      %v1641 = vadd.f32 %v1610, %v1639
      %v1642 = vadd.f32 %v1611, %v1639
      %v1643 = vadd.f32 %v1612, %v1639
      %v1644 = vadd.f32 %v1613, %v1639
      %v1645 = vadd.f32 %v1614, %v1639
      %v1646 = vadd.f32 %v1615, %v1639
      %v1647 = vadd.f32 %v1616, %v1639
      %v1648 = vadd.f32 %v1617, %v1639
      %v1649 = vadd.f32 %v1618, %v1639
      %v1650 = vadd.f32 %v1619, %v1639
      %v1651 = vadd.f32 %v1620, %v1639
      %v1652 = vadd.f32 %v1621, %v1639
      %v1653 = vadd.f32 %v1622, %v1639
      %v1654 = vadd.f32 %v1623, %v1639
      %v1655 = vadd.f32 %v1624, %v1639
      %v1656 = vadd.f32 %v1625, %v1639
      %v1657 = vadd.f32 %v1626, %v1639
      %v1658 = vadd.f32 %v1627, %v1639
      %v1659 = vadd.f32 %v1628, %v1639
      %v1660 = vadd.f32 %v1629, %v1639
      %v1661 = vadd.f32 %v1630, %v1639
      %v1662 = vadd.f32 %v1631, %v1639
      %v1663 = vadd.f32 %v1632, %v1639
      %v1664 = vadd.f32 %v1633, %v1639
      %v1665 = vmax.f32 %v1641, 0.0
      %v1666 = vmax.f32 %v1642, 0.0
      %v1667 = vmax.f32 %v1643, 0.0
      %v1668 = vmax.f32 %v1644, 0.0
      %v1669 = vmax.f32 %v1645, 0.0
      %v1670 = vmax.f32 %v1646, 0.0
      %v1671 = vmax.f32 %v1647, 0.0
      %v1672 = vmax.f32 %v1648, 0.0
      %v1673 = vmax.f32 %v1649, 0.0
      %v1674 = vmax.f32 %v1650, 0.0
      %v1675 = vmax.f32 %v1651, 0.0
      %v1676 = vmax.f32 %v1652, 0.0
      %v1677 = vmax.f32 %v1653, 0.0
      %v1678 = vmax.f32 %v1654, 0.0
      %v1679 = vmax.f32 %v1655, 0.0
      %v1680 = vmax.f32 %v1656, 0.0
      %v1681 = vmax.f32 %v1657, 0.0
      %v1682 = vmax.f32 %v1658, 0.0
      %v1683 = vmax.f32 %v1659, 0.0
      %v1684 = vmax.f32 %v1660, 0.0
      %v1685 = vmax.f32 %v1661, 0.0
      %v1686 = vmax.f32 %v1662, 0.0
      %v1687 = vmax.f32 %v1663, 0.0
      %v1688 = vmax.f32 %v1664, 0.0
      %v1689 = vand.u32 2147483647, %v1641
      %v1690 = vand.u32 2147483647, %v1642
      %v1691 = vand.u32 2147483647, %v1643
      %v1692 = vand.u32 2147483647, %v1644
      %v1693 = vand.u32 2147483647, %v1645
      %v1694 = vand.u32 2147483647, %v1646
      %v1695 = vand.u32 2147483647, %v1647
      %v1696 = vand.u32 2147483647, %v1648
      %v1697 = vand.u32 2147483647, %v1649
      %v1698 = vand.u32 2147483647, %v1650
      %v1699 = vand.u32 2147483647, %v1651
      %v1700 = vand.u32 2147483647, %v1652
      %v1701 = vand.u32 2147483647, %v1653
      %v1702 = vand.u32 2147483647, %v1654
      %v1703 = vand.u32 2147483647, %v1655
      %v1704 = vand.u32 2147483647, %v1656
      %v1705 = vand.u32 2147483647, %v1657
      %v1706 = vand.u32 2147483647, %v1658
      %v1707 = vand.u32 2147483647, %v1659
      %v1708 = vand.u32 2147483647, %v1660
      %v1709 = vand.u32 2147483647, %v1661
      %v1710 = vand.u32 2147483647, %v1662
      %v1711 = vand.u32 2147483647, %v1663
      %v1712 = vand.u32 2147483647, %v1664
      %v1713 = vsub.f32 0.0, %v1689
      %v1714 = vsub.f32 0.0, %v1690
      %v1715 = vsub.f32 0.0, %v1691
      %v1716 = vsub.f32 0.0, %v1692
      %v1717 = vsub.f32 0.0, %v1693
      %v1718 = vsub.f32 0.0, %v1694
      %v1719 = vsub.f32 0.0, %v1695
      %v1720 = vsub.f32 0.0, %v1696
      %v1721 = vsub.f32 0.0, %v1697
      %v1722 = vsub.f32 0.0, %v1698
      %v1723 = vsub.f32 0.0, %v1699
      %v1724 = vsub.f32 0.0, %v1700
      %v1725 = vsub.f32 0.0, %v1701
      %v1726 = vsub.f32 0.0, %v1702
      %v1727 = vsub.f32 0.0, %v1703
      %v1728 = vsub.f32 0.0, %v1704
      %v1729 = vsub.f32 0.0, %v1705
      %v1730 = vsub.f32 0.0, %v1706
      %v1731 = vsub.f32 0.0, %v1707
      %v1732 = vsub.f32 0.0, %v1708
      %v1733 = vsub.f32 0.0, %v1709
      %v1734 = vsub.f32 0.0, %v1710
      %v1735 = vsub.f32 0.0, %v1711
      %v1736 = vsub.f32 0.0, %v1712
      %v1737 = vmul.f32 %v1713, 1.442695
      %v1738 = vpow.pop %v1737
      %v1739 = vmul.f32 %v1714, 1.442695
      %v1740 = vpow.pop %v1739
      %v1741 = vmul.f32 %v1715, 1.442695
      %v1742 = vpow.pop %v1741
      %v1743 = vmul.f32 %v1716, 1.442695
      %v1744 = vpow.pop %v1743
      %v1745 = vmul.f32 %v1717, 1.442695
      %v1746 = vpow.pop %v1745
      %v1747 = vmul.f32 %v1718, 1.442695
      %v1748 = vpow.pop %v1747
      %v1749 = vmul.f32 %v1719, 1.442695
      %v1750 = vpow.pop %v1749
      %v1751 = vmul.f32 %v1720, 1.442695
      %v1752 = vpow.pop %v1751
      %v1753 = vmul.f32 %v1721, 1.442695
      %v1754 = vpow.pop %v1753
      %v1755 = vmul.f32 %v1722, 1.442695
      %v1756 = vpow.pop %v1755
      %v1757 = vmul.f32 %v1723, 1.442695
      %v1758 = vpow.pop %v1757
      %v1759 = vmul.f32 %v1724, 1.442695
      %v1760 = vpow.pop %v1759
      %v1761 = vmul.f32 %v1725, 1.442695
      %v1762 = vpow.pop %v1761
      %v1763 = vmul.f32 %v1726, 1.442695
      %v1764 = vpow.pop %v1763
      %v1765 = vmul.f32 %v1727, 1.442695
      %v1766 = vpow.pop %v1765
      %v1767 = vmul.f32 %v1728, 1.442695
      %v1768 = vpow.pop %v1767
      %v1769 = vmul.f32 %v1729, 1.442695
      %v1770 = vpow.pop %v1769
      %v1771 = vmul.f32 %v1730, 1.442695
      %v1772 = vpow.pop %v1771
      %v1773 = vmul.f32 %v1731, 1.442695
      %v1774 = vpow.pop %v1773
      %v1775 = vmul.f32 %v1732, 1.442695
      %v1776 = vpow.pop %v1775
      %v1777 = vmul.f32 %v1733, 1.442695
      %v1778 = vpow.pop %v1777
      %v1779 = vmul.f32 %v1734, 1.442695
      %v1780 = vpow.pop %v1779
      %v1781 = vmul.f32 %v1735, 1.442695
      %v1782 = vpow.pop %v1781
      %v1783 = vmul.f32 %v1736, 1.442695
      %v1784 = vpow.pop %v1783
      %v1785 = vadd.f32 %v1738, 1.0
      %v1786 = vadd.f32 %v1740, 1.0
      %v1787 = vadd.f32 %v1742, 1.0
      %v1788 = vadd.f32 %v1744, 1.0
      %v1789 = vadd.f32 %v1746, 1.0
      %v1790 = vadd.f32 %v1748, 1.0
      %v1791 = vadd.f32 %v1750, 1.0
      %v1792 = vadd.f32 %v1752, 1.0
      %v1793 = vadd.f32 %v1754, 1.0
      %v1794 = vadd.f32 %v1756, 1.0
      %v1795 = vadd.f32 %v1758, 1.0
      %v1796 = vadd.f32 %v1760, 1.0
      %v1797 = vadd.f32 %v1762, 1.0
      %v1798 = vadd.f32 %v1764, 1.0
      %v1799 = vadd.f32 %v1766, 1.0
      %v1800 = vadd.f32 %v1768, 1.0
      %v1801 = vadd.f32 %v1770, 1.0
      %v1802 = vadd.f32 %v1772, 1.0
      %v1803 = vadd.f32 %v1774, 1.0
      %v1804 = vadd.f32 %v1776, 1.0
      %v1805 = vadd.f32 %v1778, 1.0
      %v1806 = vadd.f32 %v1780, 1.0
      %v1807 = vadd.f32 %v1782, 1.0
      %v1808 = vadd.f32 %v1784, 1.0
      %v1809 = vlog2.pop %v1785
      %v1810 = vmul.f32 %v1809, 0.6931472
      %v1811 = vlog2.pop %v1786
      %v1812 = vmul.f32 %v1811, 0.6931472
      %v1813 = vlog2.pop %v1787
      %v1814 = vmul.f32 %v1813, 0.6931472
      %v1815 = vlog2.pop %v1788
      %v1816 = vmul.f32 %v1815, 0.6931472
      %v1817 = vlog2.pop %v1789
      %v1818 = vmul.f32 %v1817, 0.6931472
      %v1819 = vlog2.pop %v1790
      %v1820 = vmul.f32 %v1819, 0.6931472
      %v1821 = vlog2.pop %v1791
      %v1822 = vmul.f32 %v1821, 0.6931472
      %v1823 = vlog2.pop %v1792
      %v1824 = vmul.f32 %v1823, 0.6931472
      %v1825 = vlog2.pop %v1793
      %v1826 = vmul.f32 %v1825, 0.6931472
      %v1827 = vlog2.pop %v1794
      %v1828 = vmul.f32 %v1827, 0.6931472
      %v1829 = vlog2.pop %v1795
      %v1830 = vmul.f32 %v1829, 0.6931472
      %v1831 = vlog2.pop %v1796
      %v1832 = vmul.f32 %v1831, 0.6931472
      %v1833 = vlog2.pop %v1797
      %v1834 = vmul.f32 %v1833, 0.6931472
      %v1835 = vlog2.pop %v1798
      %v1836 = vmul.f32 %v1835, 0.6931472
      %v1837 = vlog2.pop %v1799
      %v1838 = vmul.f32 %v1837, 0.6931472
      %v1839 = vlog2.pop %v1800
      %v1840 = vmul.f32 %v1839, 0.6931472
      %v1841 = vlog2.pop %v1801
      %v1842 = vmul.f32 %v1841, 0.6931472
      %v1843 = vlog2.pop %v1802
      %v1844 = vmul.f32 %v1843, 0.6931472
      %v1845 = vlog2.pop %v1803
      %v1846 = vmul.f32 %v1845, 0.6931472
      %v1847 = vlog2.pop %v1804
      %v1848 = vmul.f32 %v1847, 0.6931472
      %v1849 = vlog2.pop %v1805
      %v1850 = vmul.f32 %v1849, 0.6931472
      %v1851 = vlog2.pop %v1806
      %v1852 = vmul.f32 %v1851, 0.6931472
      %v1853 = vlog2.pop %v1807
      %v1854 = vmul.f32 %v1853, 0.6931472
      %v1855 = vlog2.pop %v1808
      %v1856 = vmul.f32 %v1855, 0.6931472
      %v1857 = vadd.f32 %v1665, %v1810
      %v1858 = vadd.f32 %v1666, %v1812
      %v1859 = vadd.f32 %v1667, %v1814
      %v1860 = vadd.f32 %v1668, %v1816
      %v1861 = vadd.f32 %v1669, %v1818
      %v1862 = vadd.f32 %v1670, %v1820
      %v1863 = vadd.f32 %v1671, %v1822
      %v1864 = vadd.f32 %v1672, %v1824
      %v1865 = vadd.f32 %v1673, %v1826
      %v1866 = vadd.f32 %v1674, %v1828
      %v1867 = vadd.f32 %v1675, %v1830
      %v1868 = vadd.f32 %v1676, %v1832
      %v1869 = vadd.f32 %v1677, %v1834
      %v1870 = vadd.f32 %v1678, %v1836
      %v1871 = vadd.f32 %v1679, %v1838
      %v1872 = vadd.f32 %v1680, %v1840
      %v1873 = vadd.f32 %v1681, %v1842
      %v1874 = vadd.f32 %v1682, %v1844
      %v1875 = vadd.f32 %v1683, %v1846
      %v1876 = vadd.f32 %v1684, %v1848
      %v1877 = vadd.f32 %v1685, %v1850
      %v1878 = vadd.f32 %v1686, %v1852
      %v1879 = vadd.f32 %v1687, %v1854
      %v1880 = vadd.f32 %v1688, %v1856
      %1881 = vst.msk [vmem:[#allocation5] sm:$0xff] %vm652, %v1857
      %1882 = vst.msk [vmem:[#allocation5 + $0x8] sm:$0xff] %vm652, %v1858
      %1883 = vst.msk [vmem:[#allocation5 + $0x10] sm:$0xff] %vm652, %v1859
      %1884 = vst.msk [vmem:[#allocation5 + $0x18] sm:$0xff] %vm652, %v1860
      %1885 = vst.msk [vmem:[#allocation5 + $0x20] sm:$0xff] %vm652, %v1861
      %1886 = vst.msk [vmem:[#allocation5 + $0x28] sm:$0xff] %vm652, %v1862
      %1887 = vst.msk [vmem:[#allocation5 + $0x30] sm:$0xff] %vm652, %v1863
      %1888 = vst.msk [vmem:[#allocation5 + $0x38] sm:$0xff] %vm652, %v1864
      %1889 = vst.msk [vmem:[#allocation5 + $0x40] sm:$0xff] %vm652, %v1865
      %1890 = vst.msk [vmem:[#allocation5 + $0x48] sm:$0xff] %vm652, %v1866
      %1891 = vst.msk [vmem:[#allocation5 + $0x50] sm:$0xff] %vm652, %v1867
      %1892 = vst.msk [vmem:[#allocation5 + $0x58] sm:$0xff] %vm652, %v1868
      %1893 = vst.msk [vmem:[#allocation5 + $0x60] sm:$0xff] %vm652, %v1869
      %1894 = vst.msk [vmem:[#allocation5 + $0x68] sm:$0xff] %vm652, %v1870
      %1895 = vst.msk [vmem:[#allocation5 + $0x70] sm:$0xff] %vm652, %v1871
      %1896 = vst.msk [vmem:[#allocation5 + $0x78] sm:$0xff] %vm652, %v1872
      %1897 = vst.msk [vmem:[#allocation5 + $0x80] sm:$0xff] %vm652, %v1873
      %1898 = vst.msk [vmem:[#allocation5 + $0x88] sm:$0xff] %vm652, %v1874
      %1899 = vst.msk [vmem:[#allocation5 + $0x90] sm:$0xff] %vm652, %v1875
      %1900 = vst.msk [vmem:[#allocation5 + $0x98] sm:$0xff] %vm652, %v1876
      %1901 = vst.msk [vmem:[#allocation5 + $0xa0] sm:$0xff] %vm652, %v1877
      %1902 = vst.msk [vmem:[#allocation5 + $0xa8] sm:$0xff] %vm652, %v1878
      %1903 = vst.msk [vmem:[#allocation5 + $0xb0] sm:$0xff] %vm652, %v1879
      %1904 = vst.msk [vmem:[#allocation5 + $0xb8] sm:$0xff] %vm652, %v1880
      %v1905 = vmul.f32 %v1857, %v1089
      %v1906 = vmul.f32 %v1858, %v1090
      %v1907 = vmul.f32 %v1859, %v1091
      %v1908 = vmul.f32 %v1860, %v1092
      %v1909 = vmul.f32 %v1861, %v1093
      %v1910 = vmul.f32 %v1862, %v1094
      %v1911 = vmul.f32 %v1863, %v1095
      %v1912 = vmul.f32 %v1864, %v1096
      %v1913 = vmul.f32 %v1865, %v1097
      %v1914 = vmul.f32 %v1866, %v1098
      %v1915 = vmul.f32 %v1867, %v1099
      %v1916 = vmul.f32 %v1868, %v1100
      %v1917 = vmul.f32 %v1869, %v1101
      %v1918 = vmul.f32 %v1870, %v1102
      %v1919 = vmul.f32 %v1871, %v1103
      %v1920 = vmul.f32 %v1872, %v1104
      %v1921 = vmul.f32 %v1873, %v1105
      %v1922 = vmul.f32 %v1874, %v1106
      %v1923 = vmul.f32 %v1875, %v1107
      %v1924 = vmul.f32 %v1876, %v1108
      %v1925 = vmul.f32 %v1877, %v1109
      %v1926 = vmul.f32 %v1878, %v1110
      %v1927 = vmul.f32 %v1879, %v1111
      %v1928 = vmul.f32 %v1880, %v1112
      %1929 = vst.msk [vmem:[#allocation6] sm:$0xff] %vm652, %v1905
      %1930 = vst.msk [vmem:[#allocation6 + $0x8] sm:$0xff] %vm652, %v1906
      %1931 = vst.msk [vmem:[#allocation6 + $0x10] sm:$0xff] %vm652, %v1907
      %1932 = vst.msk [vmem:[#allocation6 + $0x18] sm:$0xff] %vm652, %v1908
      %1933 = vst.msk [vmem:[#allocation6 + $0x20] sm:$0xff] %vm652, %v1909
      %1934 = vst.msk [vmem:[#allocation6 + $0x28] sm:$0xff] %vm652, %v1910
      %1935 = vst.msk [vmem:[#allocation6 + $0x30] sm:$0xff] %vm652, %v1911
      %1936 = vst.msk [vmem:[#allocation6 + $0x38] sm:$0xff] %vm652, %v1912
      %1937 = vst.msk [vmem:[#allocation6 + $0x40] sm:$0xff] %vm652, %v1913
      %1938 = vst.msk [vmem:[#allocation6 + $0x48] sm:$0xff] %vm652, %v1914
      %1939 = vst.msk [vmem:[#allocation6 + $0x50] sm:$0xff] %vm652, %v1915
      %1940 = vst.msk [vmem:[#allocation6 + $0x58] sm:$0xff] %vm652, %v1916
      %1941 = vst.msk [vmem:[#allocation6 + $0x60] sm:$0xff] %vm652, %v1917
      %1942 = vst.msk [vmem:[#allocation6 + $0x68] sm:$0xff] %vm652, %v1918
      %1943 = vst.msk [vmem:[#allocation6 + $0x70] sm:$0xff] %vm652, %v1919
      %1944 = vst.msk [vmem:[#allocation6 + $0x78] sm:$0xff] %vm652, %v1920
      %1945 = vst.msk [vmem:[#allocation6 + $0x80] sm:$0xff] %vm652, %v1921
      %1946 = vst.msk [vmem:[#allocation6 + $0x88] sm:$0xff] %vm652, %v1922
      %1947 = vst.msk [vmem:[#allocation6 + $0x90] sm:$0xff] %vm652, %v1923
      %1948 = vst.msk [vmem:[#allocation6 + $0x98] sm:$0xff] %vm652, %v1924
      %1949 = vst.msk [vmem:[#allocation6 + $0xa0] sm:$0xff] %vm652, %v1925
      %1950 = vst.msk [vmem:[#allocation6 + $0xa8] sm:$0xff] %vm652, %v1926
      %1951 = vst.msk [vmem:[#allocation6 + $0xb0] sm:$0xff] %vm652, %v1927
      %1952 = vst.msk [vmem:[#allocation6 + $0xb8] sm:$0xff] %vm652, %v1928
      %vm1953 = vcmask 523264
      %1954 = vst.msk [vmem:[#allocation7] sm:$0xff] %vm1953, %v1236
      %1955 = vst.msk [vmem:[#allocation7 + $0x8] sm:$0xff] %vm1953, %v1240
      %1956 = vst.msk [vmem:[#allocation7 + $0x10] sm:$0xff] %vm1953, %v1246
      %1957 = vst.msk [vmem:[#allocation7 + $0x18] sm:$0xff] %vm1953, %v1250
      %1958 = vst.msk [vmem:[#allocation7 + $0x20] sm:$0xff] %vm1953, %v1256
      %1959 = vst.msk [vmem:[#allocation7 + $0x28] sm:$0xff] %vm1953, %v1260
      %1960 = vst.msk [vmem:[#allocation7 + $0x30] sm:$0xff] %vm1953, %v1266
      %1961 = vst.msk [vmem:[#allocation7 + $0x38] sm:$0xff] %vm1953, %v1270
      %1962 = vst.msk [vmem:[#allocation7 + $0x40] sm:$0xff] %vm1953, %v1276
      %1963 = vst.msk [vmem:[#allocation7 + $0x48] sm:$0xff] %vm1953, %v1280
      %1964 = vst.msk [vmem:[#allocation7 + $0x50] sm:$0xff] %vm1953, %v1286
      %1965 = vst.msk [vmem:[#allocation7 + $0x58] sm:$0xff] %vm1953, %v1290
      %1966 = vst.msk [vmem:[#allocation7 + $0x60] sm:$0xff] %vm1953, %v1296
      %1967 = vst.msk [vmem:[#allocation7 + $0x68] sm:$0xff] %vm1953, %v1300
      %1968 = vst.msk [vmem:[#allocation7 + $0x70] sm:$0xff] %vm1953, %v1306
      %1969 = vst.msk [vmem:[#allocation7 + $0x78] sm:$0xff] %vm1953, %v1310
      %1970 = vst.msk [vmem:[#allocation7 + $0x80] sm:$0xff] %vm1953, %v1316
      %1971 = vst.msk [vmem:[#allocation7 + $0x88] sm:$0xff] %vm1953, %v1320
      %1972 = vst.msk [vmem:[#allocation7 + $0x90] sm:$0xff] %vm1953, %v1326
      %1973 = vst.msk [vmem:[#allocation7 + $0x98] sm:$0xff] %vm1953, %v1330
      %1974 = vst.msk [vmem:[#allocation7 + $0xa0] sm:$0xff] %vm1953, %v1336
      %1975 = vst.msk [vmem:[#allocation7 + $0xa8] sm:$0xff] %vm1953, %v1340
      %1976 = vst.msk [vmem:[#allocation7 + $0xb0] sm:$0xff] %vm1953, %v1346
      %1977 = vst.msk [vmem:[#allocation7 + $0xb8] sm:$0xff] %vm1953, %v1350
      %1978 = vst.msk [vmem:[#allocation8] sm:$0xff] %vm1953, %v1238
      %1979 = vst.msk [vmem:[#allocation8 + $0x8] sm:$0xff] %vm1953, %v1242
      %1980 = vst.msk [vmem:[#allocation8 + $0x10] sm:$0xff] %vm1953, %v1248
      %1981 = vst.msk [vmem:[#allocation8 + $0x18] sm:$0xff] %vm1953, %v1252
      %1982 = vst.msk [vmem:[#allocation8 + $0x20] sm:$0xff] %vm1953, %v1258
      %1983 = vst.msk [vmem:[#allocation8 + $0x28] sm:$0xff] %vm1953, %v1262
      %1984 = vst.msk [vmem:[#allocation8 + $0x30] sm:$0xff] %vm1953, %v1268
      %1985 = vst.msk [vmem:[#allocation8 + $0x38] sm:$0xff] %vm1953, %v1272
      %1986 = vst.msk [vmem:[#allocation8 + $0x40] sm:$0xff] %vm1953, %v1278
      %1987 = vst.msk [vmem:[#allocation8 + $0x48] sm:$0xff] %vm1953, %v1282
      %1988 = vst.msk [vmem:[#allocation8 + $0x50] sm:$0xff] %vm1953, %v1288
      %1989 = vst.msk [vmem:[#allocation8 + $0x58] sm:$0xff] %vm1953, %v1292
      %1990 = vst.msk [vmem:[#allocation8 + $0x60] sm:$0xff] %vm1953, %v1298
      %1991 = vst.msk [vmem:[#allocation8 + $0x68] sm:$0xff] %vm1953, %v1302
      %1992 = vst.msk [vmem:[#allocation8 + $0x70] sm:$0xff] %vm1953, %v1308
      %1993 = vst.msk [vmem:[#allocation8 + $0x78] sm:$0xff] %vm1953, %v1312
      %1994 = vst.msk [vmem:[#allocation8 + $0x80] sm:$0xff] %vm1953, %v1318
      %1995 = vst.msk [vmem:[#allocation8 + $0x88] sm:$0xff] %vm1953, %v1322
      %1996 = vst.msk [vmem:[#allocation8 + $0x90] sm:$0xff] %vm1953, %v1328
      %1997 = vst.msk [vmem:[#allocation8 + $0x98] sm:$0xff] %vm1953, %v1332
      %1998 = vst.msk [vmem:[#allocation8 + $0xa0] sm:$0xff] %vm1953, %v1338
      %1999 = vst.msk [vmem:[#allocation8 + $0xa8] sm:$0xff] %vm1953, %v1342
      %2000 = vst.msk [vmem:[#allocation8 + $0xb0] sm:$0xff] %vm1953, %v1348
      %2001 = vst.msk [vmem:[#allocation8 + $0xb8] sm:$0xff] %vm1953, %v1352
      %v2002 = vld [vmem:[%s7] sm:$0xff]
      %v2003 = vld [vmem:[%s7 + $0x8] sm:$0xff]
      %v2004 = vld [vmem:[%s7 + $0x10] sm:$0xff]
      %v2005 = vld [vmem:[%s7 + $0x18] sm:$0xff]
      %v2006 = vld [vmem:[%s7 + $0x20] sm:$0xff]
      %v2007 = vld [vmem:[%s7 + $0x28] sm:$0xff]
      %v2008 = vld [vmem:[%s7 + $0x30] sm:$0xff]
      %v2009 = vld [vmem:[%s7 + $0x38] sm:$0xff]
      %v2010 = vld [vmem:[#allocation3] sm:$0xff]
      %v2011 = vld [vmem:[#allocation3 + $0x8] sm:$0xff]
      %v2012 = vld [vmem:[#allocation3 + $0x10] sm:$0xff]
      %v2013 = vld [vmem:[#allocation3 + $0x18] sm:$0xff]
      %v2014 = vld [vmem:[#allocation3 + $0x20] sm:$0xff]
      %v2015 = vld [vmem:[#allocation3 + $0x28] sm:$0xff]
      %v2016 = vld [vmem:[#allocation3 + $0x30] sm:$0xff]
      %v2017 = vld [vmem:[#allocation3 + $0x38] sm:$0xff]
      loop: start=0, step=1, limit=12
      $region65: #{tpu_custom_call.1} parent=59 // loop_pre_header
        _
      $region66: #{tpu_custom_call.1} parent=59 // loop_header
        %s2019 = sphi 0, %s2023
        %p2020 = scmp.ge.s32.totalorder %s2019, 12
        %v2024 = vphi %v2010, %v4720
        %v2025 = vphi %v2011, %v4721
        %v2026 = vphi %v2012, %v4722
        %v2027 = vphi %v2013, %v4723
        %v2028 = vphi %v2014, %v4724
        %v2029 = vphi %v2015, %v4725
        %v2030 = vphi %v2016, %v4726
        %v2031 = vphi %v2017, %v4727
      $region67: #{tpu_custom_call.1} parent=59 // loop_header_branch
        %2022 = sbr.rel (%p2020) target = $region71
      $region68: #{tpu_custom_call.1} parent=59 // loop_body
        %s2032 = smul.u32 %s2019, 16
        %s2033 = scalar_lea.vmem [#allocation5], %s2032
        %v2034 = vld [vmem:[%s2033] sm:$0xff]
        %v2035 = vld [vmem:[%s2033 + $0x8] sm:$0xff]
        %s2036 = scalar_lea.vmem [#allocation6], %s2032
        %v2037 = vld [vmem:[%s2036] sm:$0xff]
        %v2038 = vld [vmem:[%s2036 + $0x8] sm:$0xff]
        %s2039 = scalar_lea.vmem [#allocation7], %s2032
        %v2040 = vld [vmem:[%s2039] sm:$0xff]
        %v2041 = vld [vmem:[%s2039 + $0x8] sm:$0xff]
        %s2042 = scalar_lea.vmem [#allocation8], %s2032
        %v2043 = vld [vmem:[%s2042] sm:$0xff]
        %v2044 = vld [vmem:[%s2042 + $0x8] sm:$0xff]
        %v2047 = vcombine.high %v2034, %v2034
        %v2049 = vunpack.c.l.s4 1966171168
        %v2050 = vunpack.c.0.s8 %v2049
        %v2051 = vlaneseq
        %v2052 = vshrl.u32 %v2051, 7
        %v2053 = vsub.s32 %v2050, %v2052
        %v2054 = vrot.slane %v2034, %v2053
        %v2056 = vunpack.c.l.s4 1966171168
        %v2057 = vunpack.c.0.s8 %v2056
        %v2058 = vlaneseq
        %v2059 = vshrl.u32 %v2058, 7
        %v2060 = vsub.s32 %v2057, %v2059
        %v2061 = vrot.slane %v2047, %v2060
        %v2062 = vcombine.high %v2054, %v2054
        %v2063 = vcombine.high %v2061, %v2061
        %v2065 = vunpack.c.l.s4 1966171168
        %v2066 = vunpack.c.0.s8 %v2065
        %v2067 = vlaneseq
        %v2068 = vshrl.u32 %v2067, 7
        %v2069 = vsub.s32 %v2066, %v2068
        %v2070 = vrot.slane %v2054, %v2069
        %v2072 = vunpack.c.l.s4 1966171168
        %v2073 = vunpack.c.0.s8 %v2072
        %v2074 = vlaneseq
        %v2075 = vshrl.u32 %v2074, 7
        %v2076 = vsub.s32 %v2073, %v2075
        %v2077 = vrot.slane %v2061, %v2076
        %v2079 = vunpack.c.l.s4 1966171168
        %v2080 = vunpack.c.0.s8 %v2079
        %v2081 = vlaneseq
        %v2082 = vshrl.u32 %v2081, 7
        %v2083 = vsub.s32 %v2080, %v2082
        %v2084 = vrot.slane %v2062, %v2083
        %v2086 = vunpack.c.l.s4 1966171168
        %v2087 = vunpack.c.0.s8 %v2086
        %v2088 = vlaneseq
        %v2089 = vshrl.u32 %v2088, 7
        %v2090 = vsub.s32 %v2087, %v2089
        %v2091 = vrot.slane %v2063, %v2090
        %v2092 = vcombine.high %v2070, %v2070
        %v2093 = vcombine.high %v2077, %v2077
        %v2094 = vcombine.high %v2084, %v2084
        %v2095 = vcombine.high %v2091, %v2091
        %v2096 = vcombine.high %v2035, %v2035
        %v2098 = vunpack.c.l.s4 1966171168
        %v2099 = vunpack.c.0.s8 %v2098
        %v2100 = vlaneseq
        %v2101 = vshrl.u32 %v2100, 7
        %v2102 = vsub.s32 %v2099, %v2101
        %v2103 = vrot.slane %v2035, %v2102
        %v2105 = vunpack.c.l.s4 1966171168
        %v2106 = vunpack.c.0.s8 %v2105
        %v2107 = vlaneseq
        %v2108 = vshrl.u32 %v2107, 7
        %v2109 = vsub.s32 %v2106, %v2108
        %v2110 = vrot.slane %v2096, %v2109
        %v2111 = vcombine.high %v2103, %v2103
        %v2112 = vcombine.high %v2110, %v2110
        %v2114 = vunpack.c.l.s4 1966171168
        %v2115 = vunpack.c.0.s8 %v2114
        %v2116 = vlaneseq
        %v2117 = vshrl.u32 %v2116, 7
        %v2118 = vsub.s32 %v2115, %v2117
        %v2119 = vrot.slane %v2103, %v2118
        %v2121 = vunpack.c.l.s4 1966171168
        %v2122 = vunpack.c.0.s8 %v2121
        %v2123 = vlaneseq
        %v2124 = vshrl.u32 %v2123, 7
        %v2125 = vsub.s32 %v2122, %v2124
        %v2126 = vrot.slane %v2110, %v2125
        %v2128 = vunpack.c.l.s4 1966171168
        %v2129 = vunpack.c.0.s8 %v2128
        %v2130 = vlaneseq
        %v2131 = vshrl.u32 %v2130, 7
        %v2132 = vsub.s32 %v2129, %v2131
        %v2133 = vrot.slane %v2111, %v2132
        %v2135 = vunpack.c.l.s4 1966171168
        %v2136 = vunpack.c.0.s8 %v2135
        %v2137 = vlaneseq
        %v2138 = vshrl.u32 %v2137, 7
        %v2139 = vsub.s32 %v2136, %v2138
        %v2140 = vrot.slane %v2112, %v2139
        %v2141 = vcombine.high %v2119, %v2119
        %v2142 = vcombine.high %v2126, %v2126
        %v2143 = vcombine.high %v2133, %v2133
        %v2144 = vcombine.high %v2140, %v2140
        %v2145 = vlaneseq
        %v2146 = vshrl.u32 %v2145, 7
        %v2147 = vsub.s32 0, %v2146
        %v2148 = vrot.slane %v2070, %v2147
        %v2149 = vlaneseq
        %v2150 = vshrl.u32 %v2149, 7
        %v2151 = vsub.s32 0, %v2150
        %v2152 = vrot.slane %v2084, %v2151
        %v2153 = vlaneseq
        %v2154 = vshrl.u32 %v2153, 7
        %v2155 = vsub.s32 0, %v2154
        %v2156 = vrot.slane %v2092, %v2155
        %v2157 = vlaneseq
        %v2158 = vshrl.u32 %v2157, 7
        %v2159 = vsub.s32 0, %v2158
        %v2160 = vrot.slane %v2094, %v2159
        %v2161 = vlaneseq
        %v2162 = vshrl.u32 %v2161, 7
        %v2163 = vsub.s32 0, %v2162
        %v2164 = vrot.slane %v2077, %v2163
        %v2165 = vlaneseq
        %v2166 = vshrl.u32 %v2165, 7
        %v2167 = vsub.s32 0, %v2166
        %v2168 = vrot.slane %v2091, %v2167
        %v2169 = vlaneseq
        %v2170 = vshrl.u32 %v2169, 7
        %v2171 = vsub.s32 0, %v2170
        %v2172 = vrot.slane %v2093, %v2171
        %v2173 = vlaneseq
        %v2174 = vshrl.u32 %v2173, 7
        %v2175 = vsub.s32 0, %v2174
        %v2176 = vrot.slane %v2095, %v2175
        %v2177 = vlaneseq
        %v2178 = vshrl.u32 %v2177, 7
        %v2179 = vsub.s32 0, %v2178
        %v2180 = vrot.slane %v2119, %v2179
        %v2181 = vlaneseq
        %v2182 = vshrl.u32 %v2181, 7
        %v2183 = vsub.s32 0, %v2182
        %v2184 = vrot.slane %v2133, %v2183
        %v2185 = vlaneseq
        %v2186 = vshrl.u32 %v2185, 7
        %v2187 = vsub.s32 0, %v2186
        %v2188 = vrot.slane %v2141, %v2187
        %v2189 = vlaneseq
        %v2190 = vshrl.u32 %v2189, 7
        %v2191 = vsub.s32 0, %v2190
        %v2192 = vrot.slane %v2143, %v2191
        %v2193 = vlaneseq
        %v2194 = vshrl.u32 %v2193, 7
        %v2195 = vsub.s32 0, %v2194
        %v2196 = vrot.slane %v2126, %v2195
        %v2197 = vlaneseq
        %v2198 = vshrl.u32 %v2197, 7
        %v2199 = vsub.s32 0, %v2198
        %v2200 = vrot.slane %v2140, %v2199
        %v2201 = vlaneseq
        %v2202 = vshrl.u32 %v2201, 7
        %v2203 = vsub.s32 0, %v2202
        %v2204 = vrot.slane %v2142, %v2203
        %v2205 = vlaneseq
        %v2206 = vshrl.u32 %v2205, 7
        %v2207 = vsub.s32 0, %v2206
        %v2208 = vrot.slane %v2144, %v2207
        %v2225 = vmul.f32 %v2148, %v2002
        %v2226 = vmul.f32 %v2148, %v2003
        %v2227 = vmul.f32 %v2148, %v2004
        %v2228 = vmul.f32 %v2148, %v2005
        %v2229 = vmul.f32 %v2148, %v2006
        %v2230 = vmul.f32 %v2148, %v2007
        %v2231 = vmul.f32 %v2148, %v2008
        %v2232 = vmul.f32 %v2148, %v2009
        %v2233 = vmul.f32 %v2152, %v2002
        %v2234 = vmul.f32 %v2152, %v2003
        %v2235 = vmul.f32 %v2152, %v2004
        %v2236 = vmul.f32 %v2152, %v2005
        %v2237 = vmul.f32 %v2152, %v2006
        %v2238 = vmul.f32 %v2152, %v2007
        %v2239 = vmul.f32 %v2152, %v2008
        %v2240 = vmul.f32 %v2152, %v2009
        %v2241 = vmul.f32 %v2156, %v2002
        %v2242 = vmul.f32 %v2156, %v2003
        %v2243 = vmul.f32 %v2156, %v2004
        %v2244 = vmul.f32 %v2156, %v2005
        %v2245 = vmul.f32 %v2156, %v2006
        %v2246 = vmul.f32 %v2156, %v2007
        %v2247 = vmul.f32 %v2156, %v2008
        %v2248 = vmul.f32 %v2156, %v2009
        %v2249 = vmul.f32 %v2160, %v2002
        %v2250 = vmul.f32 %v2160, %v2003
        %v2251 = vmul.f32 %v2160, %v2004
        %v2252 = vmul.f32 %v2160, %v2005
        %v2253 = vmul.f32 %v2160, %v2006
        %v2254 = vmul.f32 %v2160, %v2007
        %v2255 = vmul.f32 %v2160, %v2008
        %v2256 = vmul.f32 %v2160, %v2009
        %v2257 = vmul.f32 %v2164, %v2002
        %v2258 = vmul.f32 %v2164, %v2003
        %v2259 = vmul.f32 %v2164, %v2004
        %v2260 = vmul.f32 %v2164, %v2005
        %v2261 = vmul.f32 %v2164, %v2006
        %v2262 = vmul.f32 %v2164, %v2007
        %v2263 = vmul.f32 %v2164, %v2008
        %v2264 = vmul.f32 %v2164, %v2009
        %v2265 = vmul.f32 %v2168, %v2002
        %v2266 = vmul.f32 %v2168, %v2003
        %v2267 = vmul.f32 %v2168, %v2004
        %v2268 = vmul.f32 %v2168, %v2005
        %v2269 = vmul.f32 %v2168, %v2006
        %v2270 = vmul.f32 %v2168, %v2007
        %v2271 = vmul.f32 %v2168, %v2008
        %v2272 = vmul.f32 %v2168, %v2009
        %v2273 = vmul.f32 %v2172, %v2002
        %v2274 = vmul.f32 %v2172, %v2003
        %v2275 = vmul.f32 %v2172, %v2004
        %v2276 = vmul.f32 %v2172, %v2005
        %v2277 = vmul.f32 %v2172, %v2006
        %v2278 = vmul.f32 %v2172, %v2007
        %v2279 = vmul.f32 %v2172, %v2008
        %v2280 = vmul.f32 %v2172, %v2009
        %v2281 = vmul.f32 %v2176, %v2002
        %v2282 = vmul.f32 %v2176, %v2003
        %v2283 = vmul.f32 %v2176, %v2004
        %v2284 = vmul.f32 %v2176, %v2005
        %v2285 = vmul.f32 %v2176, %v2006
        %v2286 = vmul.f32 %v2176, %v2007
        %v2287 = vmul.f32 %v2176, %v2008
        %v2288 = vmul.f32 %v2176, %v2009
        %v2289 = vmul.f32 %v2180, %v2002
        %v2290 = vmul.f32 %v2180, %v2003
        %v2291 = vmul.f32 %v2180, %v2004
        %v2292 = vmul.f32 %v2180, %v2005
        %v2293 = vmul.f32 %v2180, %v2006
        %v2294 = vmul.f32 %v2180, %v2007
        %v2295 = vmul.f32 %v2180, %v2008
        %v2296 = vmul.f32 %v2180, %v2009
        %v2297 = vmul.f32 %v2184, %v2002
        %v2298 = vmul.f32 %v2184, %v2003
        %v2299 = vmul.f32 %v2184, %v2004
        %v2300 = vmul.f32 %v2184, %v2005
        %v2301 = vmul.f32 %v2184, %v2006
        %v2302 = vmul.f32 %v2184, %v2007
        %v2303 = vmul.f32 %v2184, %v2008
        %v2304 = vmul.f32 %v2184, %v2009
        %v2305 = vmul.f32 %v2188, %v2002
        %v2306 = vmul.f32 %v2188, %v2003
        %v2307 = vmul.f32 %v2188, %v2004
        %v2308 = vmul.f32 %v2188, %v2005
        %v2309 = vmul.f32 %v2188, %v2006
        %v2310 = vmul.f32 %v2188, %v2007
        %v2311 = vmul.f32 %v2188, %v2008
        %v2312 = vmul.f32 %v2188, %v2009
        %v2313 = vmul.f32 %v2192, %v2002
        %v2314 = vmul.f32 %v2192, %v2003
        %v2315 = vmul.f32 %v2192, %v2004
        %v2316 = vmul.f32 %v2192, %v2005
        %v2317 = vmul.f32 %v2192, %v2006
        %v2318 = vmul.f32 %v2192, %v2007
        %v2319 = vmul.f32 %v2192, %v2008
        %v2320 = vmul.f32 %v2192, %v2009
        %v2321 = vmul.f32 %v2196, %v2002
        %v2322 = vmul.f32 %v2196, %v2003
        %v2323 = vmul.f32 %v2196, %v2004
        %v2324 = vmul.f32 %v2196, %v2005
        %v2325 = vmul.f32 %v2196, %v2006
        %v2326 = vmul.f32 %v2196, %v2007
        %v2327 = vmul.f32 %v2196, %v2008
        %v2328 = vmul.f32 %v2196, %v2009
        %v2329 = vmul.f32 %v2200, %v2002
        %v2330 = vmul.f32 %v2200, %v2003
        %v2331 = vmul.f32 %v2200, %v2004
        %v2332 = vmul.f32 %v2200, %v2005
        %v2333 = vmul.f32 %v2200, %v2006
        %v2334 = vmul.f32 %v2200, %v2007
        %v2335 = vmul.f32 %v2200, %v2008
        %v2336 = vmul.f32 %v2200, %v2009
        %v2337 = vmul.f32 %v2204, %v2002
        %v2338 = vmul.f32 %v2204, %v2003
        %v2339 = vmul.f32 %v2204, %v2004
        %v2340 = vmul.f32 %v2204, %v2005
        %v2341 = vmul.f32 %v2204, %v2006
        %v2342 = vmul.f32 %v2204, %v2007
        %v2343 = vmul.f32 %v2204, %v2008
        %v2344 = vmul.f32 %v2204, %v2009
        %v2345 = vmul.f32 %v2208, %v2002
        %v2346 = vmul.f32 %v2208, %v2003
        %v2347 = vmul.f32 %v2208, %v2004
        %v2348 = vmul.f32 %v2208, %v2005
        %v2349 = vmul.f32 %v2208, %v2006
        %v2350 = vmul.f32 %v2208, %v2007
        %v2351 = vmul.f32 %v2208, %v2008
        %v2352 = vmul.f32 %v2208, %v2009
        %v2353 = vmul.f32 %v2225, 1.442695
        %v2354 = vpow.pop %v2353
        %v2355 = vmul.f32 %v2226, 1.442695
        %v2356 = vpow.pop %v2355
        %v2357 = vmul.f32 %v2227, 1.442695
        %v2358 = vpow.pop %v2357
        %v2359 = vmul.f32 %v2228, 1.442695
        %v2360 = vpow.pop %v2359
        %v2361 = vmul.f32 %v2229, 1.442695
        %v2362 = vpow.pop %v2361
        %v2363 = vmul.f32 %v2230, 1.442695
        %v2364 = vpow.pop %v2363
        %v2365 = vmul.f32 %v2231, 1.442695
        %v2366 = vpow.pop %v2365
        %v2367 = vmul.f32 %v2232, 1.442695
        %v2368 = vpow.pop %v2367
        %v2369 = vmul.f32 %v2233, 1.442695
        %v2370 = vpow.pop %v2369
        %v2371 = vmul.f32 %v2234, 1.442695
        %v2372 = vpow.pop %v2371
        %v2373 = vmul.f32 %v2235, 1.442695
        %v2374 = vpow.pop %v2373
        %v2375 = vmul.f32 %v2236, 1.442695
        %v2376 = vpow.pop %v2375
        %v2377 = vmul.f32 %v2237, 1.442695
        %v2378 = vpow.pop %v2377
        %v2379 = vmul.f32 %v2238, 1.442695
        %v2380 = vpow.pop %v2379
        %v2381 = vmul.f32 %v2239, 1.442695
        %v2382 = vpow.pop %v2381
        %v2383 = vmul.f32 %v2240, 1.442695
        %v2384 = vpow.pop %v2383
        %v2385 = vmul.f32 %v2241, 1.442695
        %v2386 = vpow.pop %v2385
        %v2387 = vmul.f32 %v2242, 1.442695
        %v2388 = vpow.pop %v2387
        %v2389 = vmul.f32 %v2243, 1.442695
        %v2390 = vpow.pop %v2389
        %v2391 = vmul.f32 %v2244, 1.442695
        %v2392 = vpow.pop %v2391
        %v2393 = vmul.f32 %v2245, 1.442695
        %v2394 = vpow.pop %v2393
        %v2395 = vmul.f32 %v2246, 1.442695
        %v2396 = vpow.pop %v2395
        %v2397 = vmul.f32 %v2247, 1.442695
        %v2398 = vpow.pop %v2397
        %v2399 = vmul.f32 %v2248, 1.442695
        %v2400 = vpow.pop %v2399
        %v2401 = vmul.f32 %v2249, 1.442695
        %v2402 = vpow.pop %v2401
        %v2403 = vmul.f32 %v2250, 1.442695
        %v2404 = vpow.pop %v2403
        %v2405 = vmul.f32 %v2251, 1.442695
        %v2406 = vpow.pop %v2405
        %v2407 = vmul.f32 %v2252, 1.442695
        %v2408 = vpow.pop %v2407
        %v2409 = vmul.f32 %v2253, 1.442695
        %v2410 = vpow.pop %v2409
        %v2411 = vmul.f32 %v2254, 1.442695
        %v2412 = vpow.pop %v2411
        %v2413 = vmul.f32 %v2255, 1.442695
        %v2414 = vpow.pop %v2413
        %v2415 = vmul.f32 %v2256, 1.442695
        %v2416 = vpow.pop %v2415
        %v2417 = vmul.f32 %v2257, 1.442695
        %v2418 = vpow.pop %v2417
        %v2419 = vmul.f32 %v2258, 1.442695
        %v2420 = vpow.pop %v2419
        %v2421 = vmul.f32 %v2259, 1.442695
        %v2422 = vpow.pop %v2421
        %v2423 = vmul.f32 %v2260, 1.442695
        %v2424 = vpow.pop %v2423
        %v2425 = vmul.f32 %v2261, 1.442695
        %v2426 = vpow.pop %v2425
        %v2427 = vmul.f32 %v2262, 1.442695
        %v2428 = vpow.pop %v2427
        %v2429 = vmul.f32 %v2263, 1.442695
        %v2430 = vpow.pop %v2429
        %v2431 = vmul.f32 %v2264, 1.442695
        %v2432 = vpow.pop %v2431
        %v2433 = vmul.f32 %v2265, 1.442695
        %v2434 = vpow.pop %v2433
        %v2435 = vmul.f32 %v2266, 1.442695
        %v2436 = vpow.pop %v2435
        %v2437 = vmul.f32 %v2267, 1.442695
        %v2438 = vpow.pop %v2437
        %v2439 = vmul.f32 %v2268, 1.442695
        %v2440 = vpow.pop %v2439
        %v2441 = vmul.f32 %v2269, 1.442695
        %v2442 = vpow.pop %v2441
        %v2443 = vmul.f32 %v2270, 1.442695
        %v2444 = vpow.pop %v2443
        %v2445 = vmul.f32 %v2271, 1.442695
        %v2446 = vpow.pop %v2445
        %v2447 = vmul.f32 %v2272, 1.442695
        %v2448 = vpow.pop %v2447
        %v2449 = vmul.f32 %v2273, 1.442695
        %v2450 = vpow.pop %v2449
        %v2451 = vmul.f32 %v2274, 1.442695
        %v2452 = vpow.pop %v2451
        %v2453 = vmul.f32 %v2275, 1.442695
        %v2454 = vpow.pop %v2453
        %v2455 = vmul.f32 %v2276, 1.442695
        %v2456 = vpow.pop %v2455
        %v2457 = vmul.f32 %v2277, 1.442695
        %v2458 = vpow.pop %v2457
        %v2459 = vmul.f32 %v2278, 1.442695
        %v2460 = vpow.pop %v2459
        %v2461 = vmul.f32 %v2279, 1.442695
        %v2462 = vpow.pop %v2461
        %v2463 = vmul.f32 %v2280, 1.442695
        %v2464 = vpow.pop %v2463
        %v2465 = vmul.f32 %v2281, 1.442695
        %v2466 = vpow.pop %v2465
        %v2467 = vmul.f32 %v2282, 1.442695
        %v2468 = vpow.pop %v2467
        %v2469 = vmul.f32 %v2283, 1.442695
        %v2470 = vpow.pop %v2469
        %v2471 = vmul.f32 %v2284, 1.442695
        %v2472 = vpow.pop %v2471
        %v2473 = vmul.f32 %v2285, 1.442695
        %v2474 = vpow.pop %v2473
        %v2475 = vmul.f32 %v2286, 1.442695
        %v2476 = vpow.pop %v2475
        %v2477 = vmul.f32 %v2287, 1.442695
        %v2478 = vpow.pop %v2477
        %v2479 = vmul.f32 %v2288, 1.442695
        %v2480 = vpow.pop %v2479
        %v2481 = vmul.f32 %v2289, 1.442695
        %v2482 = vpow.pop %v2481
        %v2483 = vmul.f32 %v2290, 1.442695
        %v2484 = vpow.pop %v2483
        %v2485 = vmul.f32 %v2291, 1.442695
        %v2486 = vpow.pop %v2485
        %v2487 = vmul.f32 %v2292, 1.442695
        %v2488 = vpow.pop %v2487
        %v2489 = vmul.f32 %v2293, 1.442695
        %v2490 = vpow.pop %v2489
        %v2491 = vmul.f32 %v2294, 1.442695
        %v2492 = vpow.pop %v2491
        %v2493 = vmul.f32 %v2295, 1.442695
        %v2494 = vpow.pop %v2493
        %v2495 = vmul.f32 %v2296, 1.442695
        %v2496 = vpow.pop %v2495
        %v2497 = vmul.f32 %v2297, 1.442695
        %v2498 = vpow.pop %v2497
        %v2499 = vmul.f32 %v2298, 1.442695
        %v2500 = vpow.pop %v2499
        %v2501 = vmul.f32 %v2299, 1.442695
        %v2502 = vpow.pop %v2501
        %v2503 = vmul.f32 %v2300, 1.442695
        %v2504 = vpow.pop %v2503
        %v2505 = vmul.f32 %v2301, 1.442695
        %v2506 = vpow.pop %v2505
        %v2507 = vmul.f32 %v2302, 1.442695
        %v2508 = vpow.pop %v2507
        %v2509 = vmul.f32 %v2303, 1.442695
        %v2510 = vpow.pop %v2509
        %v2511 = vmul.f32 %v2304, 1.442695
        %v2512 = vpow.pop %v2511
        %v2513 = vmul.f32 %v2305, 1.442695
        %v2514 = vpow.pop %v2513
        %v2515 = vmul.f32 %v2306, 1.442695
        %v2516 = vpow.pop %v2515
        %v2517 = vmul.f32 %v2307, 1.442695
        %v2518 = vpow.pop %v2517
        %v2519 = vmul.f32 %v2308, 1.442695
        %v2520 = vpow.pop %v2519
        %v2521 = vmul.f32 %v2309, 1.442695
        %v2522 = vpow.pop %v2521
        %v2523 = vmul.f32 %v2310, 1.442695
        %v2524 = vpow.pop %v2523
        %v2525 = vmul.f32 %v2311, 1.442695
        %v2526 = vpow.pop %v2525
        %v2527 = vmul.f32 %v2312, 1.442695
        %v2528 = vpow.pop %v2527
        %v2529 = vmul.f32 %v2313, 1.442695
        %v2530 = vpow.pop %v2529
        %v2531 = vmul.f32 %v2314, 1.442695
        %v2532 = vpow.pop %v2531
        %v2533 = vmul.f32 %v2315, 1.442695
        %v2534 = vpow.pop %v2533
        %v2535 = vmul.f32 %v2316, 1.442695
        %v2536 = vpow.pop %v2535
        %v2537 = vmul.f32 %v2317, 1.442695
        %v2538 = vpow.pop %v2537
        %v2539 = vmul.f32 %v2318, 1.442695
        %v2540 = vpow.pop %v2539
        %v2541 = vmul.f32 %v2319, 1.442695
        %v2542 = vpow.pop %v2541
        %v2543 = vmul.f32 %v2320, 1.442695
        %v2544 = vpow.pop %v2543
        %v2545 = vmul.f32 %v2321, 1.442695
        %v2546 = vpow.pop %v2545
        %v2547 = vmul.f32 %v2322, 1.442695
        %v2548 = vpow.pop %v2547
        %v2549 = vmul.f32 %v2323, 1.442695
        %v2550 = vpow.pop %v2549
        %v2551 = vmul.f32 %v2324, 1.442695
        %v2552 = vpow.pop %v2551
        %v2553 = vmul.f32 %v2325, 1.442695
        %v2554 = vpow.pop %v2553
        %v2555 = vmul.f32 %v2326, 1.442695
        %v2556 = vpow.pop %v2555
        %v2557 = vmul.f32 %v2327, 1.442695
        %v2558 = vpow.pop %v2557
        %v2559 = vmul.f32 %v2328, 1.442695
        %v2560 = vpow.pop %v2559
        %v2561 = vmul.f32 %v2329, 1.442695
        %v2562 = vpow.pop %v2561
        %v2563 = vmul.f32 %v2330, 1.442695
        %v2564 = vpow.pop %v2563
        %v2565 = vmul.f32 %v2331, 1.442695
        %v2566 = vpow.pop %v2565
        %v2567 = vmul.f32 %v2332, 1.442695
        %v2568 = vpow.pop %v2567
        %v2569 = vmul.f32 %v2333, 1.442695
        %v2570 = vpow.pop %v2569
        %v2571 = vmul.f32 %v2334, 1.442695
        %v2572 = vpow.pop %v2571
        %v2573 = vmul.f32 %v2335, 1.442695
        %v2574 = vpow.pop %v2573
        %v2575 = vmul.f32 %v2336, 1.442695
        %v2576 = vpow.pop %v2575
        %v2577 = vmul.f32 %v2337, 1.442695
        %v2578 = vpow.pop %v2577
        %v2579 = vmul.f32 %v2338, 1.442695
        %v2580 = vpow.pop %v2579
        %v2581 = vmul.f32 %v2339, 1.442695
        %v2582 = vpow.pop %v2581
        %v2583 = vmul.f32 %v2340, 1.442695
        %v2584 = vpow.pop %v2583
        %v2585 = vmul.f32 %v2341, 1.442695
        %v2586 = vpow.pop %v2585
        %v2587 = vmul.f32 %v2342, 1.442695
        %v2588 = vpow.pop %v2587
        %v2589 = vmul.f32 %v2343, 1.442695
        %v2590 = vpow.pop %v2589
        %v2591 = vmul.f32 %v2344, 1.442695
        %v2592 = vpow.pop %v2591
        %v2593 = vmul.f32 %v2345, 1.442695
        %v2594 = vpow.pop %v2593
        %v2595 = vmul.f32 %v2346, 1.442695
        %v2596 = vpow.pop %v2595
        %v2597 = vmul.f32 %v2347, 1.442695
        %v2598 = vpow.pop %v2597
        %v2599 = vmul.f32 %v2348, 1.442695
        %v2600 = vpow.pop %v2599
        %v2601 = vmul.f32 %v2349, 1.442695
        %v2602 = vpow.pop %v2601
        %v2603 = vmul.f32 %v2350, 1.442695
        %v2604 = vpow.pop %v2603
        %v2605 = vmul.f32 %v2351, 1.442695
        %v2606 = vpow.pop %v2605
        %v2607 = vmul.f32 %v2352, 1.442695
        %v2608 = vpow.pop %v2607
        %v2609 = vlaneseq
        %v2610 = vshrl.u32 %v2609, 7
        %v2611 = vsub.s32 0, %v2610
        %v2612 = vrot.slane %v2040, %v2611
        %2614 = vbcast.lane.b32.xlu0 %v2612, 256
        %v2615 = vpop.permute.xlu0 %2614
        %s2617 = sor.u32 256, 8
        %2618 = vbcast.lane.b32.xlu0 %v2612, %s2617
        %v2619 = vpop.permute.xlu0 %2618
        %s2621 = sor.u32 256, 16
        %2622 = vbcast.lane.b32.xlu0 %v2612, %s2621
        %v2623 = vpop.permute.xlu0 %2622
        %s2625 = sor.u32 256, 24
        %2626 = vbcast.lane.b32.xlu0 %v2612, %s2625
        %v2627 = vpop.permute.xlu0 %2626
        %s2629 = sor.u32 256, 32
        %2630 = vbcast.lane.b32.xlu0 %v2612, %s2629
        %v2631 = vpop.permute.xlu0 %2630
        %s2633 = sor.u32 256, 40
        %2634 = vbcast.lane.b32.xlu0 %v2612, %s2633
        %v2635 = vpop.permute.xlu0 %2634
        %s2637 = sor.u32 256, 48
        %2638 = vbcast.lane.b32.xlu0 %v2612, %s2637
        %v2639 = vpop.permute.xlu0 %2638
        %s2641 = sor.u32 256, 56
        %2642 = vbcast.lane.b32.xlu0 %v2612, %s2641
        %v2643 = vpop.permute.xlu0 %2642
        %v2644 = vlaneseq
        %v2645 = vshrl.u32 %v2644, 7
        %v2646 = vsub.s32 1, %v2645
        %v2647 = vrot.slane %v2040, %v2646
        %2649 = vbcast.lane.b32.xlu0 %v2647, 256
        %v2650 = vpop.permute.xlu0 %2649
        %s2652 = sor.u32 256, 8
        %2653 = vbcast.lane.b32.xlu0 %v2647, %s2652
        %v2654 = vpop.permute.xlu0 %2653
        %s2656 = sor.u32 256, 16
        %2657 = vbcast.lane.b32.xlu0 %v2647, %s2656
        %v2658 = vpop.permute.xlu0 %2657
        %s2660 = sor.u32 256, 24
        %2661 = vbcast.lane.b32.xlu0 %v2647, %s2660
        %v2662 = vpop.permute.xlu0 %2661
        %s2664 = sor.u32 256, 32
        %2665 = vbcast.lane.b32.xlu0 %v2647, %s2664
        %v2666 = vpop.permute.xlu0 %2665
        %s2668 = sor.u32 256, 40
        %2669 = vbcast.lane.b32.xlu0 %v2647, %s2668
        %v2670 = vpop.permute.xlu0 %2669
        %s2672 = sor.u32 256, 48
        %2673 = vbcast.lane.b32.xlu0 %v2647, %s2672
        %v2674 = vpop.permute.xlu0 %2673
        %s2676 = sor.u32 256, 56
        %2677 = vbcast.lane.b32.xlu0 %v2647, %s2676
        %v2678 = vpop.permute.xlu0 %2677
        %v2679 = vlaneseq
        %v2680 = vshrl.u32 %v2679, 7
        %v2681 = vsub.s32 2, %v2680
        %v2682 = vrot.slane %v2040, %v2681
        %2684 = vbcast.lane.b32.xlu0 %v2682, 256
        %v2685 = vpop.permute.xlu0 %2684
        %s2687 = sor.u32 256, 8
        %2688 = vbcast.lane.b32.xlu0 %v2682, %s2687
        %v2689 = vpop.permute.xlu0 %2688
        %s2691 = sor.u32 256, 16
        %2692 = vbcast.lane.b32.xlu0 %v2682, %s2691
        %v2693 = vpop.permute.xlu0 %2692
        %s2695 = sor.u32 256, 24
        %2696 = vbcast.lane.b32.xlu0 %v2682, %s2695
        %v2697 = vpop.permute.xlu0 %2696
        %s2699 = sor.u32 256, 32
        %2700 = vbcast.lane.b32.xlu0 %v2682, %s2699
        %v2701 = vpop.permute.xlu0 %2700
        %s2703 = sor.u32 256, 40
        %2704 = vbcast.lane.b32.xlu0 %v2682, %s2703
        %v2705 = vpop.permute.xlu0 %2704
        %s2707 = sor.u32 256, 48
        %2708 = vbcast.lane.b32.xlu0 %v2682, %s2707
        %v2709 = vpop.permute.xlu0 %2708
        %s2711 = sor.u32 256, 56
        %2712 = vbcast.lane.b32.xlu0 %v2682, %s2711
        %v2713 = vpop.permute.xlu0 %2712
        %v2714 = vlaneseq
        %v2715 = vshrl.u32 %v2714, 7
        %v2716 = vsub.s32 3, %v2715
        %v2717 = vrot.slane %v2040, %v2716
        %2719 = vbcast.lane.b32.xlu0 %v2717, 256
        %v2720 = vpop.permute.xlu0 %2719
        %s2722 = sor.u32 256, 8
        %2723 = vbcast.lane.b32.xlu0 %v2717, %s2722
        %v2724 = vpop.permute.xlu0 %2723
        %s2726 = sor.u32 256, 16
        %2727 = vbcast.lane.b32.xlu0 %v2717, %s2726
        %v2728 = vpop.permute.xlu0 %2727
        %s2730 = sor.u32 256, 24
        %2731 = vbcast.lane.b32.xlu0 %v2717, %s2730
        %v2732 = vpop.permute.xlu0 %2731
        %s2734 = sor.u32 256, 32
        %2735 = vbcast.lane.b32.xlu0 %v2717, %s2734
        %v2736 = vpop.permute.xlu0 %2735
        %s2738 = sor.u32 256, 40
        %2739 = vbcast.lane.b32.xlu0 %v2717, %s2738
        %v2740 = vpop.permute.xlu0 %2739
        %s2742 = sor.u32 256, 48
        %2743 = vbcast.lane.b32.xlu0 %v2717, %s2742
        %v2744 = vpop.permute.xlu0 %2743
        %s2746 = sor.u32 256, 56
        %2747 = vbcast.lane.b32.xlu0 %v2717, %s2746
        %v2748 = vpop.permute.xlu0 %2747
        %v2749 = vlaneseq
        %v2750 = vshrl.u32 %v2749, 7
        %v2751 = vsub.s32 4, %v2750
        %v2752 = vrot.slane %v2040, %v2751
        %2754 = vbcast.lane.b32.xlu0 %v2752, 256
        %v2755 = vpop.permute.xlu0 %2754
        %s2757 = sor.u32 256, 8
        %2758 = vbcast.lane.b32.xlu0 %v2752, %s2757
        %v2759 = vpop.permute.xlu0 %2758
        %s2761 = sor.u32 256, 16
        %2762 = vbcast.lane.b32.xlu0 %v2752, %s2761
        %v2763 = vpop.permute.xlu0 %2762
        %s2765 = sor.u32 256, 24
        %2766 = vbcast.lane.b32.xlu0 %v2752, %s2765
        %v2767 = vpop.permute.xlu0 %2766
        %s2769 = sor.u32 256, 32
        %2770 = vbcast.lane.b32.xlu0 %v2752, %s2769
        %v2771 = vpop.permute.xlu0 %2770
        %s2773 = sor.u32 256, 40
        %2774 = vbcast.lane.b32.xlu0 %v2752, %s2773
        %v2775 = vpop.permute.xlu0 %2774
        %s2777 = sor.u32 256, 48
        %2778 = vbcast.lane.b32.xlu0 %v2752, %s2777
        %v2779 = vpop.permute.xlu0 %2778
        %s2781 = sor.u32 256, 56
        %2782 = vbcast.lane.b32.xlu0 %v2752, %s2781
        %v2783 = vpop.permute.xlu0 %2782
        %v2784 = vlaneseq
        %v2785 = vshrl.u32 %v2784, 7
        %v2786 = vsub.s32 5, %v2785
        %v2787 = vrot.slane %v2040, %v2786
        %2789 = vbcast.lane.b32.xlu0 %v2787, 256
        %v2790 = vpop.permute.xlu0 %2789
        %s2792 = sor.u32 256, 8
        %2793 = vbcast.lane.b32.xlu0 %v2787, %s2792
        %v2794 = vpop.permute.xlu0 %2793
        %s2796 = sor.u32 256, 16
        %2797 = vbcast.lane.b32.xlu0 %v2787, %s2796
        %v2798 = vpop.permute.xlu0 %2797
        %s2800 = sor.u32 256, 24
        %2801 = vbcast.lane.b32.xlu0 %v2787, %s2800
        %v2802 = vpop.permute.xlu0 %2801
        %s2804 = sor.u32 256, 32
        %2805 = vbcast.lane.b32.xlu0 %v2787, %s2804
        %v2806 = vpop.permute.xlu0 %2805
        %s2808 = sor.u32 256, 40
        %2809 = vbcast.lane.b32.xlu0 %v2787, %s2808
        %v2810 = vpop.permute.xlu0 %2809
        %s2812 = sor.u32 256, 48
        %2813 = vbcast.lane.b32.xlu0 %v2787, %s2812
        %v2814 = vpop.permute.xlu0 %2813
        %s2816 = sor.u32 256, 56
        %2817 = vbcast.lane.b32.xlu0 %v2787, %s2816
        %v2818 = vpop.permute.xlu0 %2817
        %v2819 = vlaneseq
        %v2820 = vshrl.u32 %v2819, 7
        %v2821 = vsub.s32 6, %v2820
        %v2822 = vrot.slane %v2040, %v2821
        %2824 = vbcast.lane.b32.xlu0 %v2822, 256
        %v2825 = vpop.permute.xlu0 %2824
        %s2827 = sor.u32 256, 8
        %2828 = vbcast.lane.b32.xlu0 %v2822, %s2827
        %v2829 = vpop.permute.xlu0 %2828
        %s2831 = sor.u32 256, 16
        %2832 = vbcast.lane.b32.xlu0 %v2822, %s2831
        %v2833 = vpop.permute.xlu0 %2832
        %s2835 = sor.u32 256, 24
        %2836 = vbcast.lane.b32.xlu0 %v2822, %s2835
        %v2837 = vpop.permute.xlu0 %2836
        %s2839 = sor.u32 256, 32
        %2840 = vbcast.lane.b32.xlu0 %v2822, %s2839
        %v2841 = vpop.permute.xlu0 %2840
        %s2843 = sor.u32 256, 40
        %2844 = vbcast.lane.b32.xlu0 %v2822, %s2843
        %v2845 = vpop.permute.xlu0 %2844
        %s2847 = sor.u32 256, 48
        %2848 = vbcast.lane.b32.xlu0 %v2822, %s2847
        %v2849 = vpop.permute.xlu0 %2848
        %s2851 = sor.u32 256, 56
        %2852 = vbcast.lane.b32.xlu0 %v2822, %s2851
        %v2853 = vpop.permute.xlu0 %2852
        %v2854 = vlaneseq
        %v2855 = vshrl.u32 %v2854, 7
        %v2856 = vsub.s32 7, %v2855
        %v2857 = vrot.slane %v2040, %v2856
        %2859 = vbcast.lane.b32.xlu0 %v2857, 256
        %v2860 = vpop.permute.xlu0 %2859
        %s2862 = sor.u32 256, 8
        %2863 = vbcast.lane.b32.xlu0 %v2857, %s2862
        %v2864 = vpop.permute.xlu0 %2863
        %s2866 = sor.u32 256, 16
        %2867 = vbcast.lane.b32.xlu0 %v2857, %s2866
        %v2868 = vpop.permute.xlu0 %2867
        %s2870 = sor.u32 256, 24
        %2871 = vbcast.lane.b32.xlu0 %v2857, %s2870
        %v2872 = vpop.permute.xlu0 %2871
        %s2874 = sor.u32 256, 32
        %2875 = vbcast.lane.b32.xlu0 %v2857, %s2874
        %v2876 = vpop.permute.xlu0 %2875
        %s2878 = sor.u32 256, 40
        %2879 = vbcast.lane.b32.xlu0 %v2857, %s2878
        %v2880 = vpop.permute.xlu0 %2879
        %s2882 = sor.u32 256, 48
        %2883 = vbcast.lane.b32.xlu0 %v2857, %s2882
        %v2884 = vpop.permute.xlu0 %2883
        %s2886 = sor.u32 256, 56
        %2887 = vbcast.lane.b32.xlu0 %v2857, %s2886
        %v2888 = vpop.permute.xlu0 %2887
        %v2889 = vlaneseq
        %v2890 = vshrl.u32 %v2889, 7
        %v2891 = vsub.s32 0, %v2890
        %v2892 = vrot.slane %v2041, %v2891
        %2894 = vbcast.lane.b32.xlu0 %v2892, 256
        %v2895 = vpop.permute.xlu0 %2894
        %s2897 = sor.u32 256, 8
        %2898 = vbcast.lane.b32.xlu0 %v2892, %s2897
        %v2899 = vpop.permute.xlu0 %2898
        %s2901 = sor.u32 256, 16
        %2902 = vbcast.lane.b32.xlu0 %v2892, %s2901
        %v2903 = vpop.permute.xlu0 %2902
        %s2905 = sor.u32 256, 24
        %2906 = vbcast.lane.b32.xlu0 %v2892, %s2905
        %v2907 = vpop.permute.xlu0 %2906
        %s2909 = sor.u32 256, 32
        %2910 = vbcast.lane.b32.xlu0 %v2892, %s2909
        %v2911 = vpop.permute.xlu0 %2910
        %s2913 = sor.u32 256, 40
        %2914 = vbcast.lane.b32.xlu0 %v2892, %s2913
        %v2915 = vpop.permute.xlu0 %2914
        %s2917 = sor.u32 256, 48
        %2918 = vbcast.lane.b32.xlu0 %v2892, %s2917
        %v2919 = vpop.permute.xlu0 %2918
        %s2921 = sor.u32 256, 56
        %2922 = vbcast.lane.b32.xlu0 %v2892, %s2921
        %v2923 = vpop.permute.xlu0 %2922
        %v2924 = vlaneseq
        %v2925 = vshrl.u32 %v2924, 7
        %v2926 = vsub.s32 1, %v2925
        %v2927 = vrot.slane %v2041, %v2926
        %2929 = vbcast.lane.b32.xlu0 %v2927, 256
        %v2930 = vpop.permute.xlu0 %2929
        %s2932 = sor.u32 256, 8
        %2933 = vbcast.lane.b32.xlu0 %v2927, %s2932
        %v2934 = vpop.permute.xlu0 %2933
        %s2936 = sor.u32 256, 16
        %2937 = vbcast.lane.b32.xlu0 %v2927, %s2936
        %v2938 = vpop.permute.xlu0 %2937
        %s2940 = sor.u32 256, 24
        %2941 = vbcast.lane.b32.xlu0 %v2927, %s2940
        %v2942 = vpop.permute.xlu0 %2941
        %s2944 = sor.u32 256, 32
        %2945 = vbcast.lane.b32.xlu0 %v2927, %s2944
        %v2946 = vpop.permute.xlu0 %2945
        %s2948 = sor.u32 256, 40
        %2949 = vbcast.lane.b32.xlu0 %v2927, %s2948
        %v2950 = vpop.permute.xlu0 %2949
        %s2952 = sor.u32 256, 48
        %2953 = vbcast.lane.b32.xlu0 %v2927, %s2952
        %v2954 = vpop.permute.xlu0 %2953
        %s2956 = sor.u32 256, 56
        %2957 = vbcast.lane.b32.xlu0 %v2927, %s2956
        %v2958 = vpop.permute.xlu0 %2957
        %v2959 = vlaneseq
        %v2960 = vshrl.u32 %v2959, 7
        %v2961 = vsub.s32 2, %v2960
        %v2962 = vrot.slane %v2041, %v2961
        %2964 = vbcast.lane.b32.xlu0 %v2962, 256
        %v2965 = vpop.permute.xlu0 %2964
        %s2967 = sor.u32 256, 8
        %2968 = vbcast.lane.b32.xlu0 %v2962, %s2967
        %v2969 = vpop.permute.xlu0 %2968
        %s2971 = sor.u32 256, 16
        %2972 = vbcast.lane.b32.xlu0 %v2962, %s2971
        %v2973 = vpop.permute.xlu0 %2972
        %s2975 = sor.u32 256, 24
        %2976 = vbcast.lane.b32.xlu0 %v2962, %s2975
        %v2977 = vpop.permute.xlu0 %2976
        %s2979 = sor.u32 256, 32
        %2980 = vbcast.lane.b32.xlu0 %v2962, %s2979
        %v2981 = vpop.permute.xlu0 %2980
        %s2983 = sor.u32 256, 40
        %2984 = vbcast.lane.b32.xlu0 %v2962, %s2983
        %v2985 = vpop.permute.xlu0 %2984
        %s2987 = sor.u32 256, 48
        %2988 = vbcast.lane.b32.xlu0 %v2962, %s2987
        %v2989 = vpop.permute.xlu0 %2988
        %s2991 = sor.u32 256, 56
        %2992 = vbcast.lane.b32.xlu0 %v2962, %s2991
        %v2993 = vpop.permute.xlu0 %2992
        %v2994 = vlaneseq
        %v2995 = vshrl.u32 %v2994, 7
        %v2996 = vsub.s32 3, %v2995
        %v2997 = vrot.slane %v2041, %v2996
        %2999 = vbcast.lane.b32.xlu0 %v2997, 256
        %v3000 = vpop.permute.xlu0 %2999
        %s3002 = sor.u32 256, 8
        %3003 = vbcast.lane.b32.xlu0 %v2997, %s3002
        %v3004 = vpop.permute.xlu0 %3003
        %s3006 = sor.u32 256, 16
        %3007 = vbcast.lane.b32.xlu0 %v2997, %s3006
        %v3008 = vpop.permute.xlu0 %3007
        %s3010 = sor.u32 256, 24
        %3011 = vbcast.lane.b32.xlu0 %v2997, %s3010
        %v3012 = vpop.permute.xlu0 %3011
        %s3014 = sor.u32 256, 32
        %3015 = vbcast.lane.b32.xlu0 %v2997, %s3014
        %v3016 = vpop.permute.xlu0 %3015
        %s3018 = sor.u32 256, 40
        %3019 = vbcast.lane.b32.xlu0 %v2997, %s3018
        %v3020 = vpop.permute.xlu0 %3019
        %s3022 = sor.u32 256, 48
        %3023 = vbcast.lane.b32.xlu0 %v2997, %s3022
        %v3024 = vpop.permute.xlu0 %3023
        %s3026 = sor.u32 256, 56
        %3027 = vbcast.lane.b32.xlu0 %v2997, %s3026
        %v3028 = vpop.permute.xlu0 %3027
        %v3029 = vlaneseq
        %v3030 = vshrl.u32 %v3029, 7
        %v3031 = vsub.s32 4, %v3030
        %v3032 = vrot.slane %v2041, %v3031
        %3034 = vbcast.lane.b32.xlu0 %v3032, 256
        %v3035 = vpop.permute.xlu0 %3034
        %s3037 = sor.u32 256, 8
        %3038 = vbcast.lane.b32.xlu0 %v3032, %s3037
        %v3039 = vpop.permute.xlu0 %3038
        %s3041 = sor.u32 256, 16
        %3042 = vbcast.lane.b32.xlu0 %v3032, %s3041
        %v3043 = vpop.permute.xlu0 %3042
        %s3045 = sor.u32 256, 24
        %3046 = vbcast.lane.b32.xlu0 %v3032, %s3045
        %v3047 = vpop.permute.xlu0 %3046
        %s3049 = sor.u32 256, 32
        %3050 = vbcast.lane.b32.xlu0 %v3032, %s3049
        %v3051 = vpop.permute.xlu0 %3050
        %s3053 = sor.u32 256, 40
        %3054 = vbcast.lane.b32.xlu0 %v3032, %s3053
        %v3055 = vpop.permute.xlu0 %3054
        %s3057 = sor.u32 256, 48
        %3058 = vbcast.lane.b32.xlu0 %v3032, %s3057
        %v3059 = vpop.permute.xlu0 %3058
        %s3061 = sor.u32 256, 56
        %3062 = vbcast.lane.b32.xlu0 %v3032, %s3061
        %v3063 = vpop.permute.xlu0 %3062
        %v3064 = vlaneseq
        %v3065 = vshrl.u32 %v3064, 7
        %v3066 = vsub.s32 5, %v3065
        %v3067 = vrot.slane %v2041, %v3066
        %3069 = vbcast.lane.b32.xlu0 %v3067, 256
        %v3070 = vpop.permute.xlu0 %3069
        %s3072 = sor.u32 256, 8
        %3073 = vbcast.lane.b32.xlu0 %v3067, %s3072
        %v3074 = vpop.permute.xlu0 %3073
        %s3076 = sor.u32 256, 16
        %3077 = vbcast.lane.b32.xlu0 %v3067, %s3076
        %v3078 = vpop.permute.xlu0 %3077
        %s3080 = sor.u32 256, 24
        %3081 = vbcast.lane.b32.xlu0 %v3067, %s3080
        %v3082 = vpop.permute.xlu0 %3081
        %s3084 = sor.u32 256, 32
        %3085 = vbcast.lane.b32.xlu0 %v3067, %s3084
        %v3086 = vpop.permute.xlu0 %3085
        %s3088 = sor.u32 256, 40
        %3089 = vbcast.lane.b32.xlu0 %v3067, %s3088
        %v3090 = vpop.permute.xlu0 %3089
        %s3092 = sor.u32 256, 48
        %3093 = vbcast.lane.b32.xlu0 %v3067, %s3092
        %v3094 = vpop.permute.xlu0 %3093
        %s3096 = sor.u32 256, 56
        %3097 = vbcast.lane.b32.xlu0 %v3067, %s3096
        %v3098 = vpop.permute.xlu0 %3097
        %v3099 = vlaneseq
        %v3100 = vshrl.u32 %v3099, 7
        %v3101 = vsub.s32 6, %v3100
        %v3102 = vrot.slane %v2041, %v3101
        %3104 = vbcast.lane.b32.xlu0 %v3102, 256
        %v3105 = vpop.permute.xlu0 %3104
        %s3107 = sor.u32 256, 8
        %3108 = vbcast.lane.b32.xlu0 %v3102, %s3107
        %v3109 = vpop.permute.xlu0 %3108
        %s3111 = sor.u32 256, 16
        %3112 = vbcast.lane.b32.xlu0 %v3102, %s3111
        %v3113 = vpop.permute.xlu0 %3112
        %s3115 = sor.u32 256, 24
        %3116 = vbcast.lane.b32.xlu0 %v3102, %s3115
        %v3117 = vpop.permute.xlu0 %3116
        %s3119 = sor.u32 256, 32
        %3120 = vbcast.lane.b32.xlu0 %v3102, %s3119
        %v3121 = vpop.permute.xlu0 %3120
        %s3123 = sor.u32 256, 40
        %3124 = vbcast.lane.b32.xlu0 %v3102, %s3123
        %v3125 = vpop.permute.xlu0 %3124
        %s3127 = sor.u32 256, 48
        %3128 = vbcast.lane.b32.xlu0 %v3102, %s3127
        %v3129 = vpop.permute.xlu0 %3128
        %s3131 = sor.u32 256, 56
        %3132 = vbcast.lane.b32.xlu0 %v3102, %s3131
        %v3133 = vpop.permute.xlu0 %3132
        %v3134 = vlaneseq
        %v3135 = vshrl.u32 %v3134, 7
        %v3136 = vsub.s32 7, %v3135
        %v3137 = vrot.slane %v2041, %v3136
        %3139 = vbcast.lane.b32.xlu0 %v3137, 256
        %v3140 = vpop.permute.xlu0 %3139
        %s3142 = sor.u32 256, 8
        %3143 = vbcast.lane.b32.xlu0 %v3137, %s3142
        %v3144 = vpop.permute.xlu0 %3143
        %s3146 = sor.u32 256, 16
        %3147 = vbcast.lane.b32.xlu0 %v3137, %s3146
        %v3148 = vpop.permute.xlu0 %3147
        %s3150 = sor.u32 256, 24
        %3151 = vbcast.lane.b32.xlu0 %v3137, %s3150
        %v3152 = vpop.permute.xlu0 %3151
        %s3154 = sor.u32 256, 32
        %3155 = vbcast.lane.b32.xlu0 %v3137, %s3154
        %v3156 = vpop.permute.xlu0 %3155
        %s3158 = sor.u32 256, 40
        %3159 = vbcast.lane.b32.xlu0 %v3137, %s3158
        %v3160 = vpop.permute.xlu0 %3159
        %s3162 = sor.u32 256, 48
        %3163 = vbcast.lane.b32.xlu0 %v3137, %s3162
        %v3164 = vpop.permute.xlu0 %3163
        %s3166 = sor.u32 256, 56
        %3167 = vbcast.lane.b32.xlu0 %v3137, %s3166
        %v3168 = vpop.permute.xlu0 %3167
        %v3171 = vcombine.high %v2037, %v2037
        %v3173 = vunpack.c.l.s4 1966171168
        %v3174 = vunpack.c.0.s8 %v3173
        %v3175 = vlaneseq
        %v3176 = vshrl.u32 %v3175, 7
        %v3177 = vsub.s32 %v3174, %v3176
        %v3178 = vrot.slane %v2037, %v3177
        %v3180 = vunpack.c.l.s4 1966171168
        %v3181 = vunpack.c.0.s8 %v3180
        %v3182 = vlaneseq
        %v3183 = vshrl.u32 %v3182, 7
        %v3184 = vsub.s32 %v3181, %v3183
        %v3185 = vrot.slane %v3171, %v3184
        %v3186 = vcombine.high %v3178, %v3178
        %v3187 = vcombine.high %v3185, %v3185
        %v3189 = vunpack.c.l.s4 1966171168
        %v3190 = vunpack.c.0.s8 %v3189
        %v3191 = vlaneseq
        %v3192 = vshrl.u32 %v3191, 7
        %v3193 = vsub.s32 %v3190, %v3192
        %v3194 = vrot.slane %v3178, %v3193
        %v3196 = vunpack.c.l.s4 1966171168
        %v3197 = vunpack.c.0.s8 %v3196
        %v3198 = vlaneseq
        %v3199 = vshrl.u32 %v3198, 7
        %v3200 = vsub.s32 %v3197, %v3199
        %v3201 = vrot.slane %v3185, %v3200
        %v3203 = vunpack.c.l.s4 1966171168
        %v3204 = vunpack.c.0.s8 %v3203
        %v3205 = vlaneseq
        %v3206 = vshrl.u32 %v3205, 7
        %v3207 = vsub.s32 %v3204, %v3206
        %v3208 = vrot.slane %v3186, %v3207
        %v3210 = vunpack.c.l.s4 1966171168
        %v3211 = vunpack.c.0.s8 %v3210
        %v3212 = vlaneseq
        %v3213 = vshrl.u32 %v3212, 7
        %v3214 = vsub.s32 %v3211, %v3213
        %v3215 = vrot.slane %v3187, %v3214
        %v3216 = vcombine.high %v3194, %v3194
        %v3217 = vcombine.high %v3201, %v3201
        %v3218 = vcombine.high %v3208, %v3208
        %v3219 = vcombine.high %v3215, %v3215
        %v3220 = vcombine.high %v2038, %v2038
        %v3222 = vunpack.c.l.s4 1966171168
        %v3223 = vunpack.c.0.s8 %v3222
        %v3224 = vlaneseq
        %v3225 = vshrl.u32 %v3224, 7
        %v3226 = vsub.s32 %v3223, %v3225
        %v3227 = vrot.slane %v2038, %v3226
        %v3229 = vunpack.c.l.s4 1966171168
        %v3230 = vunpack.c.0.s8 %v3229
        %v3231 = vlaneseq
        %v3232 = vshrl.u32 %v3231, 7
        %v3233 = vsub.s32 %v3230, %v3232
        %v3234 = vrot.slane %v3220, %v3233
        %v3235 = vcombine.high %v3227, %v3227
        %v3236 = vcombine.high %v3234, %v3234
        %v3238 = vunpack.c.l.s4 1966171168
        %v3239 = vunpack.c.0.s8 %v3238
        %v3240 = vlaneseq
        %v3241 = vshrl.u32 %v3240, 7
        %v3242 = vsub.s32 %v3239, %v3241
        %v3243 = vrot.slane %v3227, %v3242
        %v3245 = vunpack.c.l.s4 1966171168
        %v3246 = vunpack.c.0.s8 %v3245
        %v3247 = vlaneseq
        %v3248 = vshrl.u32 %v3247, 7
        %v3249 = vsub.s32 %v3246, %v3248
        %v3250 = vrot.slane %v3234, %v3249
        %v3252 = vunpack.c.l.s4 1966171168
        %v3253 = vunpack.c.0.s8 %v3252
        %v3254 = vlaneseq
        %v3255 = vshrl.u32 %v3254, 7
        %v3256 = vsub.s32 %v3253, %v3255
        %v3257 = vrot.slane %v3235, %v3256
        %v3259 = vunpack.c.l.s4 1966171168
        %v3260 = vunpack.c.0.s8 %v3259
        %v3261 = vlaneseq
        %v3262 = vshrl.u32 %v3261, 7
        %v3263 = vsub.s32 %v3260, %v3262
        %v3264 = vrot.slane %v3236, %v3263
        %v3265 = vcombine.high %v3243, %v3243
        %v3266 = vcombine.high %v3250, %v3250
        %v3267 = vcombine.high %v3257, %v3257
        %v3268 = vcombine.high %v3264, %v3264
        %v3269 = vlaneseq
        %v3270 = vshrl.u32 %v3269, 7
        %v3271 = vsub.s32 0, %v3270
        %v3272 = vrot.slane %v3194, %v3271
        %v3273 = vlaneseq
        %v3274 = vshrl.u32 %v3273, 7
        %v3275 = vsub.s32 0, %v3274
        %v3276 = vrot.slane %v3208, %v3275
        %v3277 = vlaneseq
        %v3278 = vshrl.u32 %v3277, 7
        %v3279 = vsub.s32 0, %v3278
        %v3280 = vrot.slane %v3216, %v3279
        %v3281 = vlaneseq
        %v3282 = vshrl.u32 %v3281, 7
        %v3283 = vsub.s32 0, %v3282
        %v3284 = vrot.slane %v3218, %v3283
        %v3285 = vlaneseq
        %v3286 = vshrl.u32 %v3285, 7
        %v3287 = vsub.s32 0, %v3286
        %v3288 = vrot.slane %v3201, %v3287
        %v3289 = vlaneseq
        %v3290 = vshrl.u32 %v3289, 7
        %v3291 = vsub.s32 0, %v3290
        %v3292 = vrot.slane %v3215, %v3291
        %v3293 = vlaneseq
        %v3294 = vshrl.u32 %v3293, 7
        %v3295 = vsub.s32 0, %v3294
        %v3296 = vrot.slane %v3217, %v3295
        %v3297 = vlaneseq
        %v3298 = vshrl.u32 %v3297, 7
        %v3299 = vsub.s32 0, %v3298
        %v3300 = vrot.slane %v3219, %v3299
        %v3301 = vlaneseq
        %v3302 = vshrl.u32 %v3301, 7
        %v3303 = vsub.s32 0, %v3302
        %v3304 = vrot.slane %v3243, %v3303
        %v3305 = vlaneseq
        %v3306 = vshrl.u32 %v3305, 7
        %v3307 = vsub.s32 0, %v3306
        %v3308 = vrot.slane %v3257, %v3307
        %v3309 = vlaneseq
        %v3310 = vshrl.u32 %v3309, 7
        %v3311 = vsub.s32 0, %v3310
        %v3312 = vrot.slane %v3265, %v3311
        %v3313 = vlaneseq
        %v3314 = vshrl.u32 %v3313, 7
        %v3315 = vsub.s32 0, %v3314
        %v3316 = vrot.slane %v3267, %v3315
        %v3317 = vlaneseq
        %v3318 = vshrl.u32 %v3317, 7
        %v3319 = vsub.s32 0, %v3318
        %v3320 = vrot.slane %v3250, %v3319
        %v3321 = vlaneseq
        %v3322 = vshrl.u32 %v3321, 7
        %v3323 = vsub.s32 0, %v3322
        %v3324 = vrot.slane %v3264, %v3323
        %v3325 = vlaneseq
        %v3326 = vshrl.u32 %v3325, 7
        %v3327 = vsub.s32 0, %v3326
        %v3328 = vrot.slane %v3266, %v3327
        %v3329 = vlaneseq
        %v3330 = vshrl.u32 %v3329, 7
        %v3331 = vsub.s32 0, %v3330
        %v3332 = vrot.slane %v3268, %v3331
        %v3349 = vmul.f32 %v2615, %v3272
        %v3350 = vmul.f32 %v2619, %v3272
        %v3351 = vmul.f32 %v2623, %v3272
        %v3352 = vmul.f32 %v2627, %v3272
        %v3353 = vmul.f32 %v2631, %v3272
        %v3354 = vmul.f32 %v2635, %v3272
        %v3355 = vmul.f32 %v2639, %v3272
        %v3356 = vmul.f32 %v2643, %v3272
        %v3357 = vmul.f32 %v2650, %v3276
        %v3358 = vmul.f32 %v2654, %v3276
        %v3359 = vmul.f32 %v2658, %v3276
        %v3360 = vmul.f32 %v2662, %v3276
        %v3361 = vmul.f32 %v2666, %v3276
        %v3362 = vmul.f32 %v2670, %v3276
        %v3363 = vmul.f32 %v2674, %v3276
        %v3364 = vmul.f32 %v2678, %v3276
        %v3365 = vmul.f32 %v2685, %v3280
        %v3366 = vmul.f32 %v2689, %v3280
        %v3367 = vmul.f32 %v2693, %v3280
        %v3368 = vmul.f32 %v2697, %v3280
        %v3369 = vmul.f32 %v2701, %v3280
        %v3370 = vmul.f32 %v2705, %v3280
        %v3371 = vmul.f32 %v2709, %v3280
        %v3372 = vmul.f32 %v2713, %v3280
        %v3373 = vmul.f32 %v2720, %v3284
        %v3374 = vmul.f32 %v2724, %v3284
        %v3375 = vmul.f32 %v2728, %v3284
        %v3376 = vmul.f32 %v2732, %v3284
        %v3377 = vmul.f32 %v2736, %v3284
        %v3378 = vmul.f32 %v2740, %v3284
        %v3379 = vmul.f32 %v2744, %v3284
        %v3380 = vmul.f32 %v2748, %v3284
        %v3381 = vmul.f32 %v2755, %v3288
        %v3382 = vmul.f32 %v2759, %v3288
        %v3383 = vmul.f32 %v2763, %v3288
        %v3384 = vmul.f32 %v2767, %v3288
        %v3385 = vmul.f32 %v2771, %v3288
        %v3386 = vmul.f32 %v2775, %v3288
        %v3387 = vmul.f32 %v2779, %v3288
        %v3388 = vmul.f32 %v2783, %v3288
        %v3389 = vmul.f32 %v2790, %v3292
        %v3390 = vmul.f32 %v2794, %v3292
        %v3391 = vmul.f32 %v2798, %v3292
        %v3392 = vmul.f32 %v2802, %v3292
        %v3393 = vmul.f32 %v2806, %v3292
        %v3394 = vmul.f32 %v2810, %v3292
        %v3395 = vmul.f32 %v2814, %v3292
        %v3396 = vmul.f32 %v2818, %v3292
        %v3397 = vmul.f32 %v2825, %v3296
        %v3398 = vmul.f32 %v2829, %v3296
        %v3399 = vmul.f32 %v2833, %v3296
        %v3400 = vmul.f32 %v2837, %v3296
        %v3401 = vmul.f32 %v2841, %v3296
        %v3402 = vmul.f32 %v2845, %v3296
        %v3403 = vmul.f32 %v2849, %v3296
        %v3404 = vmul.f32 %v2853, %v3296
        %v3405 = vmul.f32 %v2860, %v3300
        %v3406 = vmul.f32 %v2864, %v3300
        %v3407 = vmul.f32 %v2868, %v3300
        %v3408 = vmul.f32 %v2872, %v3300
        %v3409 = vmul.f32 %v2876, %v3300
        %v3410 = vmul.f32 %v2880, %v3300
        %v3411 = vmul.f32 %v2884, %v3300
        %v3412 = vmul.f32 %v2888, %v3300
        %v3413 = vmul.f32 %v2895, %v3304
        %v3414 = vmul.f32 %v2899, %v3304
        %v3415 = vmul.f32 %v2903, %v3304
        %v3416 = vmul.f32 %v2907, %v3304
        %v3417 = vmul.f32 %v2911, %v3304
        %v3418 = vmul.f32 %v2915, %v3304
        %v3419 = vmul.f32 %v2919, %v3304
        %v3420 = vmul.f32 %v2923, %v3304
        %v3421 = vmul.f32 %v2930, %v3308
        %v3422 = vmul.f32 %v2934, %v3308
        %v3423 = vmul.f32 %v2938, %v3308
        %v3424 = vmul.f32 %v2942, %v3308
        %v3425 = vmul.f32 %v2946, %v3308
        %v3426 = vmul.f32 %v2950, %v3308
        %v3427 = vmul.f32 %v2954, %v3308
        %v3428 = vmul.f32 %v2958, %v3308
        %v3429 = vmul.f32 %v2965, %v3312
        %v3430 = vmul.f32 %v2969, %v3312
        %v3431 = vmul.f32 %v2973, %v3312
        %v3432 = vmul.f32 %v2977, %v3312
        %v3433 = vmul.f32 %v2981, %v3312
        %v3434 = vmul.f32 %v2985, %v3312
        %v3435 = vmul.f32 %v2989, %v3312
        %v3436 = vmul.f32 %v2993, %v3312
        %v3437 = vmul.f32 %v3000, %v3316
        %v3438 = vmul.f32 %v3004, %v3316
        %v3439 = vmul.f32 %v3008, %v3316
        %v3440 = vmul.f32 %v3012, %v3316
        %v3441 = vmul.f32 %v3016, %v3316
        %v3442 = vmul.f32 %v3020, %v3316
        %v3443 = vmul.f32 %v3024, %v3316
        %v3444 = vmul.f32 %v3028, %v3316
        %v3445 = vmul.f32 %v3035, %v3320
        %v3446 = vmul.f32 %v3039, %v3320
        %v3447 = vmul.f32 %v3043, %v3320
        %v3448 = vmul.f32 %v3047, %v3320
        %v3449 = vmul.f32 %v3051, %v3320
        %v3450 = vmul.f32 %v3055, %v3320
        %v3451 = vmul.f32 %v3059, %v3320
        %v3452 = vmul.f32 %v3063, %v3320
        %v3453 = vmul.f32 %v3070, %v3324
        %v3454 = vmul.f32 %v3074, %v3324
        %v3455 = vmul.f32 %v3078, %v3324
        %v3456 = vmul.f32 %v3082, %v3324
        %v3457 = vmul.f32 %v3086, %v3324
        %v3458 = vmul.f32 %v3090, %v3324
        %v3459 = vmul.f32 %v3094, %v3324
        %v3460 = vmul.f32 %v3098, %v3324
        %v3461 = vmul.f32 %v3105, %v3328
        %v3462 = vmul.f32 %v3109, %v3328
        %v3463 = vmul.f32 %v3113, %v3328
        %v3464 = vmul.f32 %v3117, %v3328
        %v3465 = vmul.f32 %v3121, %v3328
        %v3466 = vmul.f32 %v3125, %v3328
        %v3467 = vmul.f32 %v3129, %v3328
        %v3468 = vmul.f32 %v3133, %v3328
        %v3469 = vmul.f32 %v3140, %v3332
        %v3470 = vmul.f32 %v3144, %v3332
        %v3471 = vmul.f32 %v3148, %v3332
        %v3472 = vmul.f32 %v3152, %v3332
        %v3473 = vmul.f32 %v3156, %v3332
        %v3474 = vmul.f32 %v3160, %v3332
        %v3475 = vmul.f32 %v3164, %v3332
        %v3476 = vmul.f32 %v3168, %v3332
        %v3477 = vlaneseq
        %v3478 = vshrl.u32 %v3477, 7
        %v3479 = vsub.s32 0, %v3478
        %v3480 = vrot.slane %v2043, %v3479
        %3482 = vbcast.lane.b32.xlu0 %v3480, 256
        %v3483 = vpop.permute.xlu0 %3482
        %s3485 = sor.u32 256, 8
        %3486 = vbcast.lane.b32.xlu0 %v3480, %s3485
        %v3487 = vpop.permute.xlu0 %3486
        %s3489 = sor.u32 256, 16
        %3490 = vbcast.lane.b32.xlu0 %v3480, %s3489
        %v3491 = vpop.permute.xlu0 %3490
        %s3493 = sor.u32 256, 24
        %3494 = vbcast.lane.b32.xlu0 %v3480, %s3493
        %v3495 = vpop.permute.xlu0 %3494
        %s3497 = sor.u32 256, 32
        %3498 = vbcast.lane.b32.xlu0 %v3480, %s3497
        %v3499 = vpop.permute.xlu0 %3498
        %s3501 = sor.u32 256, 40
        %3502 = vbcast.lane.b32.xlu0 %v3480, %s3501
        %v3503 = vpop.permute.xlu0 %3502
        %s3505 = sor.u32 256, 48
        %3506 = vbcast.lane.b32.xlu0 %v3480, %s3505
        %v3507 = vpop.permute.xlu0 %3506
        %s3509 = sor.u32 256, 56
        %3510 = vbcast.lane.b32.xlu0 %v3480, %s3509
        %v3511 = vpop.permute.xlu0 %3510
        %v3512 = vlaneseq
        %v3513 = vshrl.u32 %v3512, 7
        %v3514 = vsub.s32 1, %v3513
        %v3515 = vrot.slane %v2043, %v3514
        %3517 = vbcast.lane.b32.xlu0 %v3515, 256
        %v3518 = vpop.permute.xlu0 %3517
        %s3520 = sor.u32 256, 8
        %3521 = vbcast.lane.b32.xlu0 %v3515, %s3520
        %v3522 = vpop.permute.xlu0 %3521
        %s3524 = sor.u32 256, 16
        %3525 = vbcast.lane.b32.xlu0 %v3515, %s3524
        %v3526 = vpop.permute.xlu0 %3525
        %s3528 = sor.u32 256, 24
        %3529 = vbcast.lane.b32.xlu0 %v3515, %s3528
        %v3530 = vpop.permute.xlu0 %3529
        %s3532 = sor.u32 256, 32
        %3533 = vbcast.lane.b32.xlu0 %v3515, %s3532
        %v3534 = vpop.permute.xlu0 %3533
        %s3536 = sor.u32 256, 40
        %3537 = vbcast.lane.b32.xlu0 %v3515, %s3536
        %v3538 = vpop.permute.xlu0 %3537
        %s3540 = sor.u32 256, 48
        %3541 = vbcast.lane.b32.xlu0 %v3515, %s3540
        %v3542 = vpop.permute.xlu0 %3541
        %s3544 = sor.u32 256, 56
        %3545 = vbcast.lane.b32.xlu0 %v3515, %s3544
        %v3546 = vpop.permute.xlu0 %3545
        %v3547 = vlaneseq
        %v3548 = vshrl.u32 %v3547, 7
        %v3549 = vsub.s32 2, %v3548
        %v3550 = vrot.slane %v2043, %v3549
        %3552 = vbcast.lane.b32.xlu0 %v3550, 256
        %v3553 = vpop.permute.xlu0 %3552
        %s3555 = sor.u32 256, 8
        %3556 = vbcast.lane.b32.xlu0 %v3550, %s3555
        %v3557 = vpop.permute.xlu0 %3556
        %s3559 = sor.u32 256, 16
        %3560 = vbcast.lane.b32.xlu0 %v3550, %s3559
        %v3561 = vpop.permute.xlu0 %3560
        %s3563 = sor.u32 256, 24
        %3564 = vbcast.lane.b32.xlu0 %v3550, %s3563
        %v3565 = vpop.permute.xlu0 %3564
        %s3567 = sor.u32 256, 32
        %3568 = vbcast.lane.b32.xlu0 %v3550, %s3567
        %v3569 = vpop.permute.xlu0 %3568
        %s3571 = sor.u32 256, 40
        %3572 = vbcast.lane.b32.xlu0 %v3550, %s3571
        %v3573 = vpop.permute.xlu0 %3572
        %s3575 = sor.u32 256, 48
        %3576 = vbcast.lane.b32.xlu0 %v3550, %s3575
        %v3577 = vpop.permute.xlu0 %3576
        %s3579 = sor.u32 256, 56
        %3580 = vbcast.lane.b32.xlu0 %v3550, %s3579
        %v3581 = vpop.permute.xlu0 %3580
        %v3582 = vlaneseq
        %v3583 = vshrl.u32 %v3582, 7
        %v3584 = vsub.s32 3, %v3583
        %v3585 = vrot.slane %v2043, %v3584
        %3587 = vbcast.lane.b32.xlu0 %v3585, 256
        %v3588 = vpop.permute.xlu0 %3587
        %s3590 = sor.u32 256, 8
        %3591 = vbcast.lane.b32.xlu0 %v3585, %s3590
        %v3592 = vpop.permute.xlu0 %3591
        %s3594 = sor.u32 256, 16
        %3595 = vbcast.lane.b32.xlu0 %v3585, %s3594
        %v3596 = vpop.permute.xlu0 %3595
        %s3598 = sor.u32 256, 24
        %3599 = vbcast.lane.b32.xlu0 %v3585, %s3598
        %v3600 = vpop.permute.xlu0 %3599
        %s3602 = sor.u32 256, 32
        %3603 = vbcast.lane.b32.xlu0 %v3585, %s3602
        %v3604 = vpop.permute.xlu0 %3603
        %s3606 = sor.u32 256, 40
        %3607 = vbcast.lane.b32.xlu0 %v3585, %s3606
        %v3608 = vpop.permute.xlu0 %3607
        %s3610 = sor.u32 256, 48
        %3611 = vbcast.lane.b32.xlu0 %v3585, %s3610
        %v3612 = vpop.permute.xlu0 %3611
        %s3614 = sor.u32 256, 56
        %3615 = vbcast.lane.b32.xlu0 %v3585, %s3614
        %v3616 = vpop.permute.xlu0 %3615
        %v3617 = vlaneseq
        %v3618 = vshrl.u32 %v3617, 7
        %v3619 = vsub.s32 4, %v3618
        %v3620 = vrot.slane %v2043, %v3619
        %3622 = vbcast.lane.b32.xlu0 %v3620, 256
        %v3623 = vpop.permute.xlu0 %3622
        %s3625 = sor.u32 256, 8
        %3626 = vbcast.lane.b32.xlu0 %v3620, %s3625
        %v3627 = vpop.permute.xlu0 %3626
        %s3629 = sor.u32 256, 16
        %3630 = vbcast.lane.b32.xlu0 %v3620, %s3629
        %v3631 = vpop.permute.xlu0 %3630
        %s3633 = sor.u32 256, 24
        %3634 = vbcast.lane.b32.xlu0 %v3620, %s3633
        %v3635 = vpop.permute.xlu0 %3634
        %s3637 = sor.u32 256, 32
        %3638 = vbcast.lane.b32.xlu0 %v3620, %s3637
        %v3639 = vpop.permute.xlu0 %3638
        %s3641 = sor.u32 256, 40
        %3642 = vbcast.lane.b32.xlu0 %v3620, %s3641
        %v3643 = vpop.permute.xlu0 %3642
        %s3645 = sor.u32 256, 48
        %3646 = vbcast.lane.b32.xlu0 %v3620, %s3645
        %v3647 = vpop.permute.xlu0 %3646
        %s3649 = sor.u32 256, 56
        %3650 = vbcast.lane.b32.xlu0 %v3620, %s3649
        %v3651 = vpop.permute.xlu0 %3650
        %v3652 = vlaneseq
        %v3653 = vshrl.u32 %v3652, 7
        %v3654 = vsub.s32 5, %v3653
        %v3655 = vrot.slane %v2043, %v3654
        %3657 = vbcast.lane.b32.xlu0 %v3655, 256
        %v3658 = vpop.permute.xlu0 %3657
        %s3660 = sor.u32 256, 8
        %3661 = vbcast.lane.b32.xlu0 %v3655, %s3660
        %v3662 = vpop.permute.xlu0 %3661
        %s3664 = sor.u32 256, 16
        %3665 = vbcast.lane.b32.xlu0 %v3655, %s3664
        %v3666 = vpop.permute.xlu0 %3665
        %s3668 = sor.u32 256, 24
        %3669 = vbcast.lane.b32.xlu0 %v3655, %s3668
        %v3670 = vpop.permute.xlu0 %3669
        %s3672 = sor.u32 256, 32
        %3673 = vbcast.lane.b32.xlu0 %v3655, %s3672
        %v3674 = vpop.permute.xlu0 %3673
        %s3676 = sor.u32 256, 40
        %3677 = vbcast.lane.b32.xlu0 %v3655, %s3676
        %v3678 = vpop.permute.xlu0 %3677
        %s3680 = sor.u32 256, 48
        %3681 = vbcast.lane.b32.xlu0 %v3655, %s3680
        %v3682 = vpop.permute.xlu0 %3681
        %s3684 = sor.u32 256, 56
        %3685 = vbcast.lane.b32.xlu0 %v3655, %s3684
        %v3686 = vpop.permute.xlu0 %3685
        %v3687 = vlaneseq
        %v3688 = vshrl.u32 %v3687, 7
        %v3689 = vsub.s32 6, %v3688
        %v3690 = vrot.slane %v2043, %v3689
        %3692 = vbcast.lane.b32.xlu0 %v3690, 256
        %v3693 = vpop.permute.xlu0 %3692
        %s3695 = sor.u32 256, 8
        %3696 = vbcast.lane.b32.xlu0 %v3690, %s3695
        %v3697 = vpop.permute.xlu0 %3696
        %s3699 = sor.u32 256, 16
        %3700 = vbcast.lane.b32.xlu0 %v3690, %s3699
        %v3701 = vpop.permute.xlu0 %3700
        %s3703 = sor.u32 256, 24
        %3704 = vbcast.lane.b32.xlu0 %v3690, %s3703
        %v3705 = vpop.permute.xlu0 %3704
        %s3707 = sor.u32 256, 32
        %3708 = vbcast.lane.b32.xlu0 %v3690, %s3707
        %v3709 = vpop.permute.xlu0 %3708
        %s3711 = sor.u32 256, 40
        %3712 = vbcast.lane.b32.xlu0 %v3690, %s3711
        %v3713 = vpop.permute.xlu0 %3712
        %s3715 = sor.u32 256, 48
        %3716 = vbcast.lane.b32.xlu0 %v3690, %s3715
        %v3717 = vpop.permute.xlu0 %3716
        %s3719 = sor.u32 256, 56
        %3720 = vbcast.lane.b32.xlu0 %v3690, %s3719
        %v3721 = vpop.permute.xlu0 %3720
        %v3722 = vlaneseq
        %v3723 = vshrl.u32 %v3722, 7
        %v3724 = vsub.s32 7, %v3723
        %v3725 = vrot.slane %v2043, %v3724
        %3727 = vbcast.lane.b32.xlu0 %v3725, 256
        %v3728 = vpop.permute.xlu0 %3727
        %s3730 = sor.u32 256, 8
        %3731 = vbcast.lane.b32.xlu0 %v3725, %s3730
        %v3732 = vpop.permute.xlu0 %3731
        %s3734 = sor.u32 256, 16
        %3735 = vbcast.lane.b32.xlu0 %v3725, %s3734
        %v3736 = vpop.permute.xlu0 %3735
        %s3738 = sor.u32 256, 24
        %3739 = vbcast.lane.b32.xlu0 %v3725, %s3738
        %v3740 = vpop.permute.xlu0 %3739
        %s3742 = sor.u32 256, 32
        %3743 = vbcast.lane.b32.xlu0 %v3725, %s3742
        %v3744 = vpop.permute.xlu0 %3743
        %s3746 = sor.u32 256, 40
        %3747 = vbcast.lane.b32.xlu0 %v3725, %s3746
        %v3748 = vpop.permute.xlu0 %3747
        %s3750 = sor.u32 256, 48
        %3751 = vbcast.lane.b32.xlu0 %v3725, %s3750
        %v3752 = vpop.permute.xlu0 %3751
        %s3754 = sor.u32 256, 56
        %3755 = vbcast.lane.b32.xlu0 %v3725, %s3754
        %v3756 = vpop.permute.xlu0 %3755
        %v3757 = vlaneseq
        %v3758 = vshrl.u32 %v3757, 7
        %v3759 = vsub.s32 0, %v3758
        %v3760 = vrot.slane %v2044, %v3759
        %3762 = vbcast.lane.b32.xlu0 %v3760, 256
        %v3763 = vpop.permute.xlu0 %3762
        %s3765 = sor.u32 256, 8
        %3766 = vbcast.lane.b32.xlu0 %v3760, %s3765
        %v3767 = vpop.permute.xlu0 %3766
        %s3769 = sor.u32 256, 16
        %3770 = vbcast.lane.b32.xlu0 %v3760, %s3769
        %v3771 = vpop.permute.xlu0 %3770
        %s3773 = sor.u32 256, 24
        %3774 = vbcast.lane.b32.xlu0 %v3760, %s3773
        %v3775 = vpop.permute.xlu0 %3774
        %s3777 = sor.u32 256, 32
        %3778 = vbcast.lane.b32.xlu0 %v3760, %s3777
        %v3779 = vpop.permute.xlu0 %3778
        %s3781 = sor.u32 256, 40
        %3782 = vbcast.lane.b32.xlu0 %v3760, %s3781
        %v3783 = vpop.permute.xlu0 %3782
        %s3785 = sor.u32 256, 48
        %3786 = vbcast.lane.b32.xlu0 %v3760, %s3785
        %v3787 = vpop.permute.xlu0 %3786
        %s3789 = sor.u32 256, 56
        %3790 = vbcast.lane.b32.xlu0 %v3760, %s3789
        %v3791 = vpop.permute.xlu0 %3790
        %v3792 = vlaneseq
        %v3793 = vshrl.u32 %v3792, 7
        %v3794 = vsub.s32 1, %v3793
        %v3795 = vrot.slane %v2044, %v3794
        %3797 = vbcast.lane.b32.xlu0 %v3795, 256
        %v3798 = vpop.permute.xlu0 %3797
        %s3800 = sor.u32 256, 8
        %3801 = vbcast.lane.b32.xlu0 %v3795, %s3800
        %v3802 = vpop.permute.xlu0 %3801
        %s3804 = sor.u32 256, 16
        %3805 = vbcast.lane.b32.xlu0 %v3795, %s3804
        %v3806 = vpop.permute.xlu0 %3805
        %s3808 = sor.u32 256, 24
        %3809 = vbcast.lane.b32.xlu0 %v3795, %s3808
        %v3810 = vpop.permute.xlu0 %3809
        %s3812 = sor.u32 256, 32
        %3813 = vbcast.lane.b32.xlu0 %v3795, %s3812
        %v3814 = vpop.permute.xlu0 %3813
        %s3816 = sor.u32 256, 40
        %3817 = vbcast.lane.b32.xlu0 %v3795, %s3816
        %v3818 = vpop.permute.xlu0 %3817
        %s3820 = sor.u32 256, 48
        %3821 = vbcast.lane.b32.xlu0 %v3795, %s3820
        %v3822 = vpop.permute.xlu0 %3821
        %s3824 = sor.u32 256, 56
        %3825 = vbcast.lane.b32.xlu0 %v3795, %s3824
        %v3826 = vpop.permute.xlu0 %3825
        %v3827 = vlaneseq
        %v3828 = vshrl.u32 %v3827, 7
        %v3829 = vsub.s32 2, %v3828
        %v3830 = vrot.slane %v2044, %v3829
        %3832 = vbcast.lane.b32.xlu0 %v3830, 256
        %v3833 = vpop.permute.xlu0 %3832
        %s3835 = sor.u32 256, 8
        %3836 = vbcast.lane.b32.xlu0 %v3830, %s3835
        %v3837 = vpop.permute.xlu0 %3836
        %s3839 = sor.u32 256, 16
        %3840 = vbcast.lane.b32.xlu0 %v3830, %s3839
        %v3841 = vpop.permute.xlu0 %3840
        %s3843 = sor.u32 256, 24
        %3844 = vbcast.lane.b32.xlu0 %v3830, %s3843
        %v3845 = vpop.permute.xlu0 %3844
        %s3847 = sor.u32 256, 32
        %3848 = vbcast.lane.b32.xlu0 %v3830, %s3847
        %v3849 = vpop.permute.xlu0 %3848
        %s3851 = sor.u32 256, 40
        %3852 = vbcast.lane.b32.xlu0 %v3830, %s3851
        %v3853 = vpop.permute.xlu0 %3852
        %s3855 = sor.u32 256, 48
        %3856 = vbcast.lane.b32.xlu0 %v3830, %s3855
        %v3857 = vpop.permute.xlu0 %3856
        %s3859 = sor.u32 256, 56
        %3860 = vbcast.lane.b32.xlu0 %v3830, %s3859
        %v3861 = vpop.permute.xlu0 %3860
        %v3862 = vlaneseq
        %v3863 = vshrl.u32 %v3862, 7
        %v3864 = vsub.s32 3, %v3863
        %v3865 = vrot.slane %v2044, %v3864
        %3867 = vbcast.lane.b32.xlu0 %v3865, 256
        %v3868 = vpop.permute.xlu0 %3867
        %s3870 = sor.u32 256, 8
        %3871 = vbcast.lane.b32.xlu0 %v3865, %s3870
        %v3872 = vpop.permute.xlu0 %3871
        %s3874 = sor.u32 256, 16
        %3875 = vbcast.lane.b32.xlu0 %v3865, %s3874
        %v3876 = vpop.permute.xlu0 %3875
        %s3878 = sor.u32 256, 24
        %3879 = vbcast.lane.b32.xlu0 %v3865, %s3878
        %v3880 = vpop.permute.xlu0 %3879
        %s3882 = sor.u32 256, 32
        %3883 = vbcast.lane.b32.xlu0 %v3865, %s3882
        %v3884 = vpop.permute.xlu0 %3883
        %s3886 = sor.u32 256, 40
        %3887 = vbcast.lane.b32.xlu0 %v3865, %s3886
        %v3888 = vpop.permute.xlu0 %3887
        %s3890 = sor.u32 256, 48
        %3891 = vbcast.lane.b32.xlu0 %v3865, %s3890
        %v3892 = vpop.permute.xlu0 %3891
        %s3894 = sor.u32 256, 56
        %3895 = vbcast.lane.b32.xlu0 %v3865, %s3894
        %v3896 = vpop.permute.xlu0 %3895
        %v3897 = vlaneseq
        %v3898 = vshrl.u32 %v3897, 7
        %v3899 = vsub.s32 4, %v3898
        %v3900 = vrot.slane %v2044, %v3899
        %3902 = vbcast.lane.b32.xlu0 %v3900, 256
        %v3903 = vpop.permute.xlu0 %3902
        %s3905 = sor.u32 256, 8
        %3906 = vbcast.lane.b32.xlu0 %v3900, %s3905
        %v3907 = vpop.permute.xlu0 %3906
        %s3909 = sor.u32 256, 16
        %3910 = vbcast.lane.b32.xlu0 %v3900, %s3909
        %v3911 = vpop.permute.xlu0 %3910
        %s3913 = sor.u32 256, 24
        %3914 = vbcast.lane.b32.xlu0 %v3900, %s3913
        %v3915 = vpop.permute.xlu0 %3914
        %s3917 = sor.u32 256, 32
        %3918 = vbcast.lane.b32.xlu0 %v3900, %s3917
        %v3919 = vpop.permute.xlu0 %3918
        %s3921 = sor.u32 256, 40
        %3922 = vbcast.lane.b32.xlu0 %v3900, %s3921
        %v3923 = vpop.permute.xlu0 %3922
        %s3925 = sor.u32 256, 48
        %3926 = vbcast.lane.b32.xlu0 %v3900, %s3925
        %v3927 = vpop.permute.xlu0 %3926
        %s3929 = sor.u32 256, 56
        %3930 = vbcast.lane.b32.xlu0 %v3900, %s3929
        %v3931 = vpop.permute.xlu0 %3930
        %v3932 = vlaneseq
        %v3933 = vshrl.u32 %v3932, 7
        %v3934 = vsub.s32 5, %v3933
        %v3935 = vrot.slane %v2044, %v3934
        %3937 = vbcast.lane.b32.xlu0 %v3935, 256
        %v3938 = vpop.permute.xlu0 %3937
        %s3940 = sor.u32 256, 8
        %3941 = vbcast.lane.b32.xlu0 %v3935, %s3940
        %v3942 = vpop.permute.xlu0 %3941
        %s3944 = sor.u32 256, 16
        %3945 = vbcast.lane.b32.xlu0 %v3935, %s3944
        %v3946 = vpop.permute.xlu0 %3945
        %s3948 = sor.u32 256, 24
        %3949 = vbcast.lane.b32.xlu0 %v3935, %s3948
        %v3950 = vpop.permute.xlu0 %3949
        %s3952 = sor.u32 256, 32
        %3953 = vbcast.lane.b32.xlu0 %v3935, %s3952
        %v3954 = vpop.permute.xlu0 %3953
        %s3956 = sor.u32 256, 40
        %3957 = vbcast.lane.b32.xlu0 %v3935, %s3956
        %v3958 = vpop.permute.xlu0 %3957
        %s3960 = sor.u32 256, 48
        %3961 = vbcast.lane.b32.xlu0 %v3935, %s3960
        %v3962 = vpop.permute.xlu0 %3961
        %s3964 = sor.u32 256, 56
        %3965 = vbcast.lane.b32.xlu0 %v3935, %s3964
        %v3966 = vpop.permute.xlu0 %3965
        %v3967 = vlaneseq
        %v3968 = vshrl.u32 %v3967, 7
        %v3969 = vsub.s32 6, %v3968
        %v3970 = vrot.slane %v2044, %v3969
        %3972 = vbcast.lane.b32.xlu0 %v3970, 256
        %v3973 = vpop.permute.xlu0 %3972
        %s3975 = sor.u32 256, 8
        %3976 = vbcast.lane.b32.xlu0 %v3970, %s3975
        %v3977 = vpop.permute.xlu0 %3976
        %s3979 = sor.u32 256, 16
        %3980 = vbcast.lane.b32.xlu0 %v3970, %s3979
        %v3981 = vpop.permute.xlu0 %3980
        %s3983 = sor.u32 256, 24
        %3984 = vbcast.lane.b32.xlu0 %v3970, %s3983
        %v3985 = vpop.permute.xlu0 %3984
        %s3987 = sor.u32 256, 32
        %3988 = vbcast.lane.b32.xlu0 %v3970, %s3987
        %v3989 = vpop.permute.xlu0 %3988
        %s3991 = sor.u32 256, 40
        %3992 = vbcast.lane.b32.xlu0 %v3970, %s3991
        %v3993 = vpop.permute.xlu0 %3992
        %s3995 = sor.u32 256, 48
        %3996 = vbcast.lane.b32.xlu0 %v3970, %s3995
        %v3997 = vpop.permute.xlu0 %3996
        %s3999 = sor.u32 256, 56
        %4000 = vbcast.lane.b32.xlu0 %v3970, %s3999
        %v4001 = vpop.permute.xlu0 %4000
        %v4002 = vlaneseq
        %v4003 = vshrl.u32 %v4002, 7
        %v4004 = vsub.s32 7, %v4003
        %v4005 = vrot.slane %v2044, %v4004
        %4007 = vbcast.lane.b32.xlu0 %v4005, 256
        %v4008 = vpop.permute.xlu0 %4007
        %s4010 = sor.u32 256, 8
        %4011 = vbcast.lane.b32.xlu0 %v4005, %s4010
        %v4012 = vpop.permute.xlu0 %4011
        %s4014 = sor.u32 256, 16
        %4015 = vbcast.lane.b32.xlu0 %v4005, %s4014
        %v4016 = vpop.permute.xlu0 %4015
        %s4018 = sor.u32 256, 24
        %4019 = vbcast.lane.b32.xlu0 %v4005, %s4018
        %v4020 = vpop.permute.xlu0 %4019
        %s4022 = sor.u32 256, 32
        %4023 = vbcast.lane.b32.xlu0 %v4005, %s4022
        %v4024 = vpop.permute.xlu0 %4023
        %s4026 = sor.u32 256, 40
        %4027 = vbcast.lane.b32.xlu0 %v4005, %s4026
        %v4028 = vpop.permute.xlu0 %4027
        %s4030 = sor.u32 256, 48
        %4031 = vbcast.lane.b32.xlu0 %v4005, %s4030
        %v4032 = vpop.permute.xlu0 %4031
        %s4034 = sor.u32 256, 56
        %4035 = vbcast.lane.b32.xlu0 %v4005, %s4034
        %v4036 = vpop.permute.xlu0 %4035
        %v4037 = vmul.f32 %v2354, %v2024
        %v4038 = vmul.f32 %v2356, %v2025
        %v4039 = vmul.f32 %v2358, %v2026
        %v4040 = vmul.f32 %v2360, %v2027
        %v4041 = vmul.f32 %v2362, %v2028
        %v4042 = vmul.f32 %v2364, %v2029
        %v4043 = vmul.f32 %v2366, %v2030
        %v4044 = vmul.f32 %v2368, %v2031
        %v4045 = vadd.f32 %v4037, %v3349
        %v4046 = vadd.f32 %v4038, %v3350
        %v4047 = vadd.f32 %v4039, %v3351
        %v4048 = vadd.f32 %v4040, %v3352
        %v4049 = vadd.f32 %v4041, %v3353
        %v4050 = vadd.f32 %v4042, %v3354
        %v4051 = vadd.f32 %v4043, %v3355
        %v4052 = vadd.f32 %v4044, %v3356
        %v4053 = vmul.f32 %v4045, %v3483
        %v4054 = vmul.f32 %v4046, %v3487
        %v4055 = vmul.f32 %v4047, %v3491
        %v4056 = vmul.f32 %v4048, %v3495
        %v4057 = vmul.f32 %v4049, %v3499
        %v4058 = vmul.f32 %v4050, %v3503
        %v4059 = vmul.f32 %v4051, %v3507
        %v4060 = vmul.f32 %v4052, %v3511
        %v4061 = vsel %vm652, %v4053, 0.0
        %v4062 = vsel %vm652, %v4054, 0.0
        %v4063 = vadd.f32 %v4061, %v4062
        %v4064 = vsel %vm652, %v4055, 0.0
        %v4065 = vadd.f32 %v4063, %v4064
        %v4066 = vsel %vm652, %v4056, 0.0
        %v4067 = vadd.f32 %v4065, %v4066
        %v4068 = vsel %vm652, %v4057, 0.0
        %v4069 = vadd.f32 %v4067, %v4068
        %v4070 = vsel %vm652, %v4058, 0.0
        %v4071 = vadd.f32 %v4069, %v4070
        %v4072 = vsel %vm652, %v4059, 0.0
        %v4073 = vadd.f32 %v4071, %v4072
        %v4074 = vsel %vm652, %v4060, 0.0
        %v4075 = vadd.f32 %v4073, %v4074
        %v4076 = vrot.slane %v4075, 4
        %v4077 = vadd.f32 %v4075, %v4076
        %v4078 = vrot.slane %v4077, 2
        %v4079 = vadd.f32 %v4077, %v4078
        %v4080 = vrot.slane %v4079, 1
        %v4081 = vadd.f32 %v4079, %v4080
        %v4082 = vmul.f32 %v2370, %v4045
        %v4083 = vmul.f32 %v2372, %v4046
        %v4084 = vmul.f32 %v2374, %v4047
        %v4085 = vmul.f32 %v2376, %v4048
        %v4086 = vmul.f32 %v2378, %v4049
        %v4087 = vmul.f32 %v2380, %v4050
        %v4088 = vmul.f32 %v2382, %v4051
        %v4089 = vmul.f32 %v2384, %v4052
        %v4090 = vadd.f32 %v4082, %v3357
        %v4091 = vadd.f32 %v4083, %v3358
        %v4092 = vadd.f32 %v4084, %v3359
        %v4093 = vadd.f32 %v4085, %v3360
        %v4094 = vadd.f32 %v4086, %v3361
        %v4095 = vadd.f32 %v4087, %v3362
        %v4096 = vadd.f32 %v4088, %v3363
        %v4097 = vadd.f32 %v4089, %v3364
        %v4098 = vmul.f32 %v4090, %v3518
        %v4099 = vmul.f32 %v4091, %v3522
        %v4100 = vmul.f32 %v4092, %v3526
        %v4101 = vmul.f32 %v4093, %v3530
        %v4102 = vmul.f32 %v4094, %v3534
        %v4103 = vmul.f32 %v4095, %v3538
        %v4104 = vmul.f32 %v4096, %v3542
        %v4105 = vmul.f32 %v4097, %v3546
        %v4106 = vsel %vm652, %v4098, 0.0
        %v4107 = vsel %vm652, %v4099, 0.0
        %v4108 = vadd.f32 %v4106, %v4107
        %v4109 = vsel %vm652, %v4100, 0.0
        %v4110 = vadd.f32 %v4108, %v4109
        %v4111 = vsel %vm652, %v4101, 0.0
        %v4112 = vadd.f32 %v4110, %v4111
        %v4113 = vsel %vm652, %v4102, 0.0
        %v4114 = vadd.f32 %v4112, %v4113
        %v4115 = vsel %vm652, %v4103, 0.0
        %v4116 = vadd.f32 %v4114, %v4115
        %v4117 = vsel %vm652, %v4104, 0.0
        %v4118 = vadd.f32 %v4116, %v4117
        %v4119 = vsel %vm652, %v4105, 0.0
        %v4120 = vadd.f32 %v4118, %v4119
        %v4121 = vrot.slane %v4120, 4
        %v4122 = vadd.f32 %v4120, %v4121
        %v4123 = vrot.slane %v4122, 2
        %v4124 = vadd.f32 %v4122, %v4123
        %v4125 = vrot.slane %v4124, 1
        %v4126 = vadd.f32 %v4124, %v4125
        %v4127 = vmul.f32 %v2386, %v4090
        %v4128 = vmul.f32 %v2388, %v4091
        %v4129 = vmul.f32 %v2390, %v4092
        %v4130 = vmul.f32 %v2392, %v4093
        %v4131 = vmul.f32 %v2394, %v4094
        %v4132 = vmul.f32 %v2396, %v4095
        %v4133 = vmul.f32 %v2398, %v4096
        %v4134 = vmul.f32 %v2400, %v4097
        %v4135 = vadd.f32 %v4127, %v3365
        %v4136 = vadd.f32 %v4128, %v3366
        %v4137 = vadd.f32 %v4129, %v3367
        %v4138 = vadd.f32 %v4130, %v3368
        %v4139 = vadd.f32 %v4131, %v3369
        %v4140 = vadd.f32 %v4132, %v3370
        %v4141 = vadd.f32 %v4133, %v3371
        %v4142 = vadd.f32 %v4134, %v3372
        %v4143 = vmul.f32 %v4135, %v3553
        %v4144 = vmul.f32 %v4136, %v3557
        %v4145 = vmul.f32 %v4137, %v3561
        %v4146 = vmul.f32 %v4138, %v3565
        %v4147 = vmul.f32 %v4139, %v3569
        %v4148 = vmul.f32 %v4140, %v3573
        %v4149 = vmul.f32 %v4141, %v3577
        %v4150 = vmul.f32 %v4142, %v3581
        %v4151 = vsel %vm652, %v4143, 0.0
        %v4152 = vsel %vm652, %v4144, 0.0
        %v4153 = vadd.f32 %v4151, %v4152
        %v4154 = vsel %vm652, %v4145, 0.0
        %v4155 = vadd.f32 %v4153, %v4154
        %v4156 = vsel %vm652, %v4146, 0.0
        %v4157 = vadd.f32 %v4155, %v4156
        %v4158 = vsel %vm652, %v4147, 0.0
        %v4159 = vadd.f32 %v4157, %v4158
        %v4160 = vsel %vm652, %v4148, 0.0
        %v4161 = vadd.f32 %v4159, %v4160
        %v4162 = vsel %vm652, %v4149, 0.0
        %v4163 = vadd.f32 %v4161, %v4162
        %v4164 = vsel %vm652, %v4150, 0.0
        %v4165 = vadd.f32 %v4163, %v4164
        %v4166 = vrot.slane %v4165, 4
        %v4167 = vadd.f32 %v4165, %v4166
        %v4168 = vrot.slane %v4167, 2
        %v4169 = vadd.f32 %v4167, %v4168
        %v4170 = vrot.slane %v4169, 1
        %v4171 = vadd.f32 %v4169, %v4170
        %v4172 = vmul.f32 %v2402, %v4135
        %v4173 = vmul.f32 %v2404, %v4136
        %v4174 = vmul.f32 %v2406, %v4137
        %v4175 = vmul.f32 %v2408, %v4138
        %v4176 = vmul.f32 %v2410, %v4139
        %v4177 = vmul.f32 %v2412, %v4140
        %v4178 = vmul.f32 %v2414, %v4141
        %v4179 = vmul.f32 %v2416, %v4142
        %v4180 = vadd.f32 %v4172, %v3373
        %v4181 = vadd.f32 %v4173, %v3374
        %v4182 = vadd.f32 %v4174, %v3375
        %v4183 = vadd.f32 %v4175, %v3376
        %v4184 = vadd.f32 %v4176, %v3377
        %v4185 = vadd.f32 %v4177, %v3378
        %v4186 = vadd.f32 %v4178, %v3379
        %v4187 = vadd.f32 %v4179, %v3380
        %v4188 = vmul.f32 %v4180, %v3588
        %v4189 = vmul.f32 %v4181, %v3592
        %v4190 = vmul.f32 %v4182, %v3596
        %v4191 = vmul.f32 %v4183, %v3600
        %v4192 = vmul.f32 %v4184, %v3604
        %v4193 = vmul.f32 %v4185, %v3608
        %v4194 = vmul.f32 %v4186, %v3612
        %v4195 = vmul.f32 %v4187, %v3616
        %v4196 = vsel %vm652, %v4188, 0.0
        %v4197 = vsel %vm652, %v4189, 0.0
        %v4198 = vadd.f32 %v4196, %v4197
        %v4199 = vsel %vm652, %v4190, 0.0
        %v4200 = vadd.f32 %v4198, %v4199
        %v4201 = vsel %vm652, %v4191, 0.0
        %v4202 = vadd.f32 %v4200, %v4201
        %v4203 = vsel %vm652, %v4192, 0.0
        %v4204 = vadd.f32 %v4202, %v4203
        %v4205 = vsel %vm652, %v4193, 0.0
        %v4206 = vadd.f32 %v4204, %v4205
        %v4207 = vsel %vm652, %v4194, 0.0
        %v4208 = vadd.f32 %v4206, %v4207
        %v4209 = vsel %vm652, %v4195, 0.0
        %v4210 = vadd.f32 %v4208, %v4209
        %v4211 = vrot.slane %v4210, 4
        %v4212 = vadd.f32 %v4210, %v4211
        %v4213 = vrot.slane %v4212, 2
        %v4214 = vadd.f32 %v4212, %v4213
        %v4215 = vrot.slane %v4214, 1
        %v4216 = vadd.f32 %v4214, %v4215
        %v4217 = vmul.f32 %v2418, %v4180
        %v4218 = vmul.f32 %v2420, %v4181
        %v4219 = vmul.f32 %v2422, %v4182
        %v4220 = vmul.f32 %v2424, %v4183
        %v4221 = vmul.f32 %v2426, %v4184
        %v4222 = vmul.f32 %v2428, %v4185
        %v4223 = vmul.f32 %v2430, %v4186
        %v4224 = vmul.f32 %v2432, %v4187
        %v4225 = vadd.f32 %v4217, %v3381
        %v4226 = vadd.f32 %v4218, %v3382
        %v4227 = vadd.f32 %v4219, %v3383
        %v4228 = vadd.f32 %v4220, %v3384
        %v4229 = vadd.f32 %v4221, %v3385
        %v4230 = vadd.f32 %v4222, %v3386
        %v4231 = vadd.f32 %v4223, %v3387
        %v4232 = vadd.f32 %v4224, %v3388
        %v4233 = vmul.f32 %v4225, %v3623
        %v4234 = vmul.f32 %v4226, %v3627
        %v4235 = vmul.f32 %v4227, %v3631
        %v4236 = vmul.f32 %v4228, %v3635
        %v4237 = vmul.f32 %v4229, %v3639
        %v4238 = vmul.f32 %v4230, %v3643
        %v4239 = vmul.f32 %v4231, %v3647
        %v4240 = vmul.f32 %v4232, %v3651
        %v4241 = vsel %vm652, %v4233, 0.0
        %v4242 = vsel %vm652, %v4234, 0.0
        %v4243 = vadd.f32 %v4241, %v4242
        %v4244 = vsel %vm652, %v4235, 0.0
        %v4245 = vadd.f32 %v4243, %v4244
        %v4246 = vsel %vm652, %v4236, 0.0
        %v4247 = vadd.f32 %v4245, %v4246
        %v4248 = vsel %vm652, %v4237, 0.0
        %v4249 = vadd.f32 %v4247, %v4248
        %v4250 = vsel %vm652, %v4238, 0.0
        %v4251 = vadd.f32 %v4249, %v4250
        %v4252 = vsel %vm652, %v4239, 0.0
        %v4253 = vadd.f32 %v4251, %v4252
        %v4254 = vsel %vm652, %v4240, 0.0
        %v4255 = vadd.f32 %v4253, %v4254
        %v4256 = vrot.slane %v4255, 4
        %v4257 = vadd.f32 %v4255, %v4256
        %v4258 = vrot.slane %v4257, 2
        %v4259 = vadd.f32 %v4257, %v4258
        %v4260 = vrot.slane %v4259, 1
        %v4261 = vadd.f32 %v4259, %v4260
        %v4262 = vmul.f32 %v2434, %v4225
        %v4263 = vmul.f32 %v2436, %v4226
        %v4264 = vmul.f32 %v2438, %v4227
        %v4265 = vmul.f32 %v2440, %v4228
        %v4266 = vmul.f32 %v2442, %v4229
        %v4267 = vmul.f32 %v2444, %v4230
        %v4268 = vmul.f32 %v2446, %v4231
        %v4269 = vmul.f32 %v2448, %v4232
        %v4270 = vadd.f32 %v4262, %v3389
        %v4271 = vadd.f32 %v4263, %v3390
        %v4272 = vadd.f32 %v4264, %v3391
        %v4273 = vadd.f32 %v4265, %v3392
        %v4274 = vadd.f32 %v4266, %v3393
        %v4275 = vadd.f32 %v4267, %v3394
        %v4276 = vadd.f32 %v4268, %v3395
        %v4277 = vadd.f32 %v4269, %v3396
        %v4278 = vmul.f32 %v4270, %v3658
        %v4279 = vmul.f32 %v4271, %v3662
        %v4280 = vmul.f32 %v4272, %v3666
        %v4281 = vmul.f32 %v4273, %v3670
        %v4282 = vmul.f32 %v4274, %v3674
        %v4283 = vmul.f32 %v4275, %v3678
        %v4284 = vmul.f32 %v4276, %v3682
        %v4285 = vmul.f32 %v4277, %v3686
        %v4286 = vsel %vm652, %v4278, 0.0
        %v4287 = vsel %vm652, %v4279, 0.0
        %v4288 = vadd.f32 %v4286, %v4287
        %v4289 = vsel %vm652, %v4280, 0.0
        %v4290 = vadd.f32 %v4288, %v4289
        %v4291 = vsel %vm652, %v4281, 0.0
        %v4292 = vadd.f32 %v4290, %v4291
        %v4293 = vsel %vm652, %v4282, 0.0
        %v4294 = vadd.f32 %v4292, %v4293
        %v4295 = vsel %vm652, %v4283, 0.0
        %v4296 = vadd.f32 %v4294, %v4295
        %v4297 = vsel %vm652, %v4284, 0.0
        %v4298 = vadd.f32 %v4296, %v4297
        %v4299 = vsel %vm652, %v4285, 0.0
        %v4300 = vadd.f32 %v4298, %v4299
        %v4301 = vrot.slane %v4300, 4
        %v4302 = vadd.f32 %v4300, %v4301
        %v4303 = vrot.slane %v4302, 2
        %v4304 = vadd.f32 %v4302, %v4303
        %v4305 = vrot.slane %v4304, 1
        %v4306 = vadd.f32 %v4304, %v4305
        %v4307 = vmul.f32 %v2450, %v4270
        %v4308 = vmul.f32 %v2452, %v4271
        %v4309 = vmul.f32 %v2454, %v4272
        %v4310 = vmul.f32 %v2456, %v4273
        %v4311 = vmul.f32 %v2458, %v4274
        %v4312 = vmul.f32 %v2460, %v4275
        %v4313 = vmul.f32 %v2462, %v4276
        %v4314 = vmul.f32 %v2464, %v4277
        %v4315 = vadd.f32 %v4307, %v3397
        %v4316 = vadd.f32 %v4308, %v3398
        %v4317 = vadd.f32 %v4309, %v3399
        %v4318 = vadd.f32 %v4310, %v3400
        %v4319 = vadd.f32 %v4311, %v3401
        %v4320 = vadd.f32 %v4312, %v3402
        %v4321 = vadd.f32 %v4313, %v3403
        %v4322 = vadd.f32 %v4314, %v3404
        %v4323 = vmul.f32 %v4315, %v3693
        %v4324 = vmul.f32 %v4316, %v3697
        %v4325 = vmul.f32 %v4317, %v3701
        %v4326 = vmul.f32 %v4318, %v3705
        %v4327 = vmul.f32 %v4319, %v3709
        %v4328 = vmul.f32 %v4320, %v3713
        %v4329 = vmul.f32 %v4321, %v3717
        %v4330 = vmul.f32 %v4322, %v3721
        %v4331 = vsel %vm652, %v4323, 0.0
        %v4332 = vsel %vm652, %v4324, 0.0
        %v4333 = vadd.f32 %v4331, %v4332
        %v4334 = vsel %vm652, %v4325, 0.0
        %v4335 = vadd.f32 %v4333, %v4334
        %v4336 = vsel %vm652, %v4326, 0.0
        %v4337 = vadd.f32 %v4335, %v4336
        %v4338 = vsel %vm652, %v4327, 0.0
        %v4339 = vadd.f32 %v4337, %v4338
        %v4340 = vsel %vm652, %v4328, 0.0
        %v4341 = vadd.f32 %v4339, %v4340
        %v4342 = vsel %vm652, %v4329, 0.0
        %v4343 = vadd.f32 %v4341, %v4342
        %v4344 = vsel %vm652, %v4330, 0.0
        %v4345 = vadd.f32 %v4343, %v4344
        %v4346 = vrot.slane %v4345, 4
        %v4347 = vadd.f32 %v4345, %v4346
        %v4348 = vrot.slane %v4347, 2
        %v4349 = vadd.f32 %v4347, %v4348
        %v4350 = vrot.slane %v4349, 1
        %v4351 = vadd.f32 %v4349, %v4350
        %v4352 = vmul.f32 %v2466, %v4315
        %v4353 = vmul.f32 %v2468, %v4316
        %v4354 = vmul.f32 %v2470, %v4317
        %v4355 = vmul.f32 %v2472, %v4318
        %v4356 = vmul.f32 %v2474, %v4319
        %v4357 = vmul.f32 %v2476, %v4320
        %v4358 = vmul.f32 %v2478, %v4321
        %v4359 = vmul.f32 %v2480, %v4322
        %v4360 = vadd.f32 %v4352, %v3405
        %v4361 = vadd.f32 %v4353, %v3406
        %v4362 = vadd.f32 %v4354, %v3407
        %v4363 = vadd.f32 %v4355, %v3408
        %v4364 = vadd.f32 %v4356, %v3409
        %v4365 = vadd.f32 %v4357, %v3410
        %v4366 = vadd.f32 %v4358, %v3411
        %v4367 = vadd.f32 %v4359, %v3412
        %v4368 = vmul.f32 %v4360, %v3728
        %v4369 = vmul.f32 %v4361, %v3732
        %v4370 = vmul.f32 %v4362, %v3736
        %v4371 = vmul.f32 %v4363, %v3740
        %v4372 = vmul.f32 %v4364, %v3744
        %v4373 = vmul.f32 %v4365, %v3748
        %v4374 = vmul.f32 %v4366, %v3752
        %v4375 = vmul.f32 %v4367, %v3756
        %v4376 = vsel %vm652, %v4368, 0.0
        %v4377 = vsel %vm652, %v4369, 0.0
        %v4378 = vadd.f32 %v4376, %v4377
        %v4379 = vsel %vm652, %v4370, 0.0
        %v4380 = vadd.f32 %v4378, %v4379
        %v4381 = vsel %vm652, %v4371, 0.0
        %v4382 = vadd.f32 %v4380, %v4381
        %v4383 = vsel %vm652, %v4372, 0.0
        %v4384 = vadd.f32 %v4382, %v4383
        %v4385 = vsel %vm652, %v4373, 0.0
        %v4386 = vadd.f32 %v4384, %v4385
        %v4387 = vsel %vm652, %v4374, 0.0
        %v4388 = vadd.f32 %v4386, %v4387
        %v4389 = vsel %vm652, %v4375, 0.0
        %v4390 = vadd.f32 %v4388, %v4389
        %v4391 = vrot.slane %v4390, 4
        %v4392 = vadd.f32 %v4390, %v4391
        %v4393 = vrot.slane %v4392, 2
        %v4394 = vadd.f32 %v4392, %v4393
        %v4395 = vrot.slane %v4394, 1
        %v4396 = vadd.f32 %v4394, %v4395
        %v4397 = vmul.f32 %v2482, %v4360
        %v4398 = vmul.f32 %v2484, %v4361
        %v4399 = vmul.f32 %v2486, %v4362
        %v4400 = vmul.f32 %v2488, %v4363
        %v4401 = vmul.f32 %v2490, %v4364
        %v4402 = vmul.f32 %v2492, %v4365
        %v4403 = vmul.f32 %v2494, %v4366
        %v4404 = vmul.f32 %v2496, %v4367
        %v4405 = vadd.f32 %v4397, %v3413
        %v4406 = vadd.f32 %v4398, %v3414
        %v4407 = vadd.f32 %v4399, %v3415
        %v4408 = vadd.f32 %v4400, %v3416
        %v4409 = vadd.f32 %v4401, %v3417
        %v4410 = vadd.f32 %v4402, %v3418
        %v4411 = vadd.f32 %v4403, %v3419
        %v4412 = vadd.f32 %v4404, %v3420
        %v4413 = vmul.f32 %v4405, %v3763
        %v4414 = vmul.f32 %v4406, %v3767
        %v4415 = vmul.f32 %v4407, %v3771
        %v4416 = vmul.f32 %v4408, %v3775
        %v4417 = vmul.f32 %v4409, %v3779
        %v4418 = vmul.f32 %v4410, %v3783
        %v4419 = vmul.f32 %v4411, %v3787
        %v4420 = vmul.f32 %v4412, %v3791
        %v4421 = vsel %vm652, %v4413, 0.0
        %v4422 = vsel %vm652, %v4414, 0.0
        %v4423 = vadd.f32 %v4421, %v4422
        %v4424 = vsel %vm652, %v4415, 0.0
        %v4425 = vadd.f32 %v4423, %v4424
        %v4426 = vsel %vm652, %v4416, 0.0
        %v4427 = vadd.f32 %v4425, %v4426
        %v4428 = vsel %vm652, %v4417, 0.0
        %v4429 = vadd.f32 %v4427, %v4428
        %v4430 = vsel %vm652, %v4418, 0.0
        %v4431 = vadd.f32 %v4429, %v4430
        %v4432 = vsel %vm652, %v4419, 0.0
        %v4433 = vadd.f32 %v4431, %v4432
        %v4434 = vsel %vm652, %v4420, 0.0
        %v4435 = vadd.f32 %v4433, %v4434
        %v4436 = vrot.slane %v4435, 4
        %v4437 = vadd.f32 %v4435, %v4436
        %v4438 = vrot.slane %v4437, 2
        %v4439 = vadd.f32 %v4437, %v4438
        %v4440 = vrot.slane %v4439, 1
        %v4441 = vadd.f32 %v4439, %v4440
        %v4442 = vmul.f32 %v2498, %v4405
        %v4443 = vmul.f32 %v2500, %v4406
        %v4444 = vmul.f32 %v2502, %v4407
        %v4445 = vmul.f32 %v2504, %v4408
        %v4446 = vmul.f32 %v2506, %v4409
        %v4447 = vmul.f32 %v2508, %v4410
        %v4448 = vmul.f32 %v2510, %v4411
        %v4449 = vmul.f32 %v2512, %v4412
        %v4450 = vadd.f32 %v4442, %v3421
        %v4451 = vadd.f32 %v4443, %v3422
        %v4452 = vadd.f32 %v4444, %v3423
        %v4453 = vadd.f32 %v4445, %v3424
        %v4454 = vadd.f32 %v4446, %v3425
        %v4455 = vadd.f32 %v4447, %v3426
        %v4456 = vadd.f32 %v4448, %v3427
        %v4457 = vadd.f32 %v4449, %v3428
        %v4458 = vmul.f32 %v4450, %v3798
        %v4459 = vmul.f32 %v4451, %v3802
        %v4460 = vmul.f32 %v4452, %v3806
        %v4461 = vmul.f32 %v4453, %v3810
        %v4462 = vmul.f32 %v4454, %v3814
        %v4463 = vmul.f32 %v4455, %v3818
        %v4464 = vmul.f32 %v4456, %v3822
        %v4465 = vmul.f32 %v4457, %v3826
        %v4466 = vsel %vm652, %v4458, 0.0
        %v4467 = vsel %vm652, %v4459, 0.0
        %v4468 = vadd.f32 %v4466, %v4467
        %v4469 = vsel %vm652, %v4460, 0.0
        %v4470 = vadd.f32 %v4468, %v4469
        %v4471 = vsel %vm652, %v4461, 0.0
        %v4472 = vadd.f32 %v4470, %v4471
        %v4473 = vsel %vm652, %v4462, 0.0
        %v4474 = vadd.f32 %v4472, %v4473
        %v4475 = vsel %vm652, %v4463, 0.0
        %v4476 = vadd.f32 %v4474, %v4475
        %v4477 = vsel %vm652, %v4464, 0.0
        %v4478 = vadd.f32 %v4476, %v4477
        %v4479 = vsel %vm652, %v4465, 0.0
        %v4480 = vadd.f32 %v4478, %v4479
        %v4481 = vrot.slane %v4480, 4
        %v4482 = vadd.f32 %v4480, %v4481
        %v4483 = vrot.slane %v4482, 2
        %v4484 = vadd.f32 %v4482, %v4483
        %v4485 = vrot.slane %v4484, 1
        %v4486 = vadd.f32 %v4484, %v4485
        %v4487 = vmul.f32 %v2514, %v4450
        %v4488 = vmul.f32 %v2516, %v4451
        %v4489 = vmul.f32 %v2518, %v4452
        %v4490 = vmul.f32 %v2520, %v4453
        %v4491 = vmul.f32 %v2522, %v4454
        %v4492 = vmul.f32 %v2524, %v4455
        %v4493 = vmul.f32 %v2526, %v4456
        %v4494 = vmul.f32 %v2528, %v4457
        %v4495 = vadd.f32 %v4487, %v3429
        %v4496 = vadd.f32 %v4488, %v3430
        %v4497 = vadd.f32 %v4489, %v3431
        %v4498 = vadd.f32 %v4490, %v3432
        %v4499 = vadd.f32 %v4491, %v3433
        %v4500 = vadd.f32 %v4492, %v3434
        %v4501 = vadd.f32 %v4493, %v3435
        %v4502 = vadd.f32 %v4494, %v3436
        %v4503 = vmul.f32 %v4495, %v3833
        %v4504 = vmul.f32 %v4496, %v3837
        %v4505 = vmul.f32 %v4497, %v3841
        %v4506 = vmul.f32 %v4498, %v3845
        %v4507 = vmul.f32 %v4499, %v3849
        %v4508 = vmul.f32 %v4500, %v3853
        %v4509 = vmul.f32 %v4501, %v3857
        %v4510 = vmul.f32 %v4502, %v3861
        %v4511 = vsel %vm652, %v4503, 0.0
        %v4512 = vsel %vm652, %v4504, 0.0
        %v4513 = vadd.f32 %v4511, %v4512
        %v4514 = vsel %vm652, %v4505, 0.0
        %v4515 = vadd.f32 %v4513, %v4514
        %v4516 = vsel %vm652, %v4506, 0.0
        %v4517 = vadd.f32 %v4515, %v4516
        %v4518 = vsel %vm652, %v4507, 0.0
        %v4519 = vadd.f32 %v4517, %v4518
        %v4520 = vsel %vm652, %v4508, 0.0
        %v4521 = vadd.f32 %v4519, %v4520
        %v4522 = vsel %vm652, %v4509, 0.0
        %v4523 = vadd.f32 %v4521, %v4522
        %v4524 = vsel %vm652, %v4510, 0.0
        %v4525 = vadd.f32 %v4523, %v4524
        %v4526 = vrot.slane %v4525, 4
        %v4527 = vadd.f32 %v4525, %v4526
        %v4528 = vrot.slane %v4527, 2
        %v4529 = vadd.f32 %v4527, %v4528
        %v4530 = vrot.slane %v4529, 1
        %v4531 = vadd.f32 %v4529, %v4530
        %v4532 = vmul.f32 %v2530, %v4495
        %v4533 = vmul.f32 %v2532, %v4496
        %v4534 = vmul.f32 %v2534, %v4497
        %v4535 = vmul.f32 %v2536, %v4498
        %v4536 = vmul.f32 %v2538, %v4499
        %v4537 = vmul.f32 %v2540, %v4500
        %v4538 = vmul.f32 %v2542, %v4501
        %v4539 = vmul.f32 %v2544, %v4502
        %v4540 = vadd.f32 %v4532, %v3437
        %v4541 = vadd.f32 %v4533, %v3438
        %v4542 = vadd.f32 %v4534, %v3439
        %v4543 = vadd.f32 %v4535, %v3440
        %v4544 = vadd.f32 %v4536, %v3441
        %v4545 = vadd.f32 %v4537, %v3442
        %v4546 = vadd.f32 %v4538, %v3443
        %v4547 = vadd.f32 %v4539, %v3444
        %v4548 = vmul.f32 %v4540, %v3868
        %v4549 = vmul.f32 %v4541, %v3872
        %v4550 = vmul.f32 %v4542, %v3876
        %v4551 = vmul.f32 %v4543, %v3880
        %v4552 = vmul.f32 %v4544, %v3884
        %v4553 = vmul.f32 %v4545, %v3888
        %v4554 = vmul.f32 %v4546, %v3892
        %v4555 = vmul.f32 %v4547, %v3896
        %v4556 = vsel %vm652, %v4548, 0.0
        %v4557 = vsel %vm652, %v4549, 0.0
        %v4558 = vadd.f32 %v4556, %v4557
        %v4559 = vsel %vm652, %v4550, 0.0
        %v4560 = vadd.f32 %v4558, %v4559
        %v4561 = vsel %vm652, %v4551, 0.0
        %v4562 = vadd.f32 %v4560, %v4561
        %v4563 = vsel %vm652, %v4552, 0.0
        %v4564 = vadd.f32 %v4562, %v4563
        %v4565 = vsel %vm652, %v4553, 0.0
        %v4566 = vadd.f32 %v4564, %v4565
        %v4567 = vsel %vm652, %v4554, 0.0
        %v4568 = vadd.f32 %v4566, %v4567
        %v4569 = vsel %vm652, %v4555, 0.0
        %v4570 = vadd.f32 %v4568, %v4569
        %v4571 = vrot.slane %v4570, 4
        %v4572 = vadd.f32 %v4570, %v4571
        %v4573 = vrot.slane %v4572, 2
        %v4574 = vadd.f32 %v4572, %v4573
        %v4575 = vrot.slane %v4574, 1
        %v4576 = vadd.f32 %v4574, %v4575
        %v4577 = vmul.f32 %v2546, %v4540
        %v4578 = vmul.f32 %v2548, %v4541
        %v4579 = vmul.f32 %v2550, %v4542
        %v4580 = vmul.f32 %v2552, %v4543
        %v4581 = vmul.f32 %v2554, %v4544
        %v4582 = vmul.f32 %v2556, %v4545
        %v4583 = vmul.f32 %v2558, %v4546
        %v4584 = vmul.f32 %v2560, %v4547
        %v4585 = vadd.f32 %v4577, %v3445
        %v4586 = vadd.f32 %v4578, %v3446
        %v4587 = vadd.f32 %v4579, %v3447
        %v4588 = vadd.f32 %v4580, %v3448
        %v4589 = vadd.f32 %v4581, %v3449
        %v4590 = vadd.f32 %v4582, %v3450
        %v4591 = vadd.f32 %v4583, %v3451
        %v4592 = vadd.f32 %v4584, %v3452
        %v4593 = vmul.f32 %v4585, %v3903
        %v4594 = vmul.f32 %v4586, %v3907
        %v4595 = vmul.f32 %v4587, %v3911
        %v4596 = vmul.f32 %v4588, %v3915
        %v4597 = vmul.f32 %v4589, %v3919
        %v4598 = vmul.f32 %v4590, %v3923
        %v4599 = vmul.f32 %v4591, %v3927
        %v4600 = vmul.f32 %v4592, %v3931
        %v4601 = vsel %vm652, %v4593, 0.0
        %v4602 = vsel %vm652, %v4594, 0.0
        %v4603 = vadd.f32 %v4601, %v4602
        %v4604 = vsel %vm652, %v4595, 0.0
        %v4605 = vadd.f32 %v4603, %v4604
        %v4606 = vsel %vm652, %v4596, 0.0
        %v4607 = vadd.f32 %v4605, %v4606
        %v4608 = vsel %vm652, %v4597, 0.0
        %v4609 = vadd.f32 %v4607, %v4608
        %v4610 = vsel %vm652, %v4598, 0.0
        %v4611 = vadd.f32 %v4609, %v4610
        %v4612 = vsel %vm652, %v4599, 0.0
        %v4613 = vadd.f32 %v4611, %v4612
        %v4614 = vsel %vm652, %v4600, 0.0
        %v4615 = vadd.f32 %v4613, %v4614
        %v4616 = vrot.slane %v4615, 4
        %v4617 = vadd.f32 %v4615, %v4616
        %v4618 = vrot.slane %v4617, 2
        %v4619 = vadd.f32 %v4617, %v4618
        %v4620 = vrot.slane %v4619, 1
        %v4621 = vadd.f32 %v4619, %v4620
        %v4622 = vmul.f32 %v2562, %v4585
        %v4623 = vmul.f32 %v2564, %v4586
        %v4624 = vmul.f32 %v2566, %v4587
        %v4625 = vmul.f32 %v2568, %v4588
        %v4626 = vmul.f32 %v2570, %v4589
        %v4627 = vmul.f32 %v2572, %v4590
        %v4628 = vmul.f32 %v2574, %v4591
        %v4629 = vmul.f32 %v2576, %v4592
        %v4630 = vadd.f32 %v4622, %v3453
        %v4631 = vadd.f32 %v4623, %v3454
        %v4632 = vadd.f32 %v4624, %v3455
        %v4633 = vadd.f32 %v4625, %v3456
        %v4634 = vadd.f32 %v4626, %v3457
        %v4635 = vadd.f32 %v4627, %v3458
        %v4636 = vadd.f32 %v4628, %v3459
        %v4637 = vadd.f32 %v4629, %v3460
        %v4638 = vmul.f32 %v4630, %v3938
        %v4639 = vmul.f32 %v4631, %v3942
        %v4640 = vmul.f32 %v4632, %v3946
        %v4641 = vmul.f32 %v4633, %v3950
        %v4642 = vmul.f32 %v4634, %v3954
        %v4643 = vmul.f32 %v4635, %v3958
        %v4644 = vmul.f32 %v4636, %v3962
        %v4645 = vmul.f32 %v4637, %v3966
        %v4646 = vsel %vm652, %v4638, 0.0
        %v4647 = vsel %vm652, %v4639, 0.0
        %v4648 = vadd.f32 %v4646, %v4647
        %v4649 = vsel %vm652, %v4640, 0.0
        %v4650 = vadd.f32 %v4648, %v4649
        %v4651 = vsel %vm652, %v4641, 0.0
        %v4652 = vadd.f32 %v4650, %v4651
        %v4653 = vsel %vm652, %v4642, 0.0
        %v4654 = vadd.f32 %v4652, %v4653
        %v4655 = vsel %vm652, %v4643, 0.0
        %v4656 = vadd.f32 %v4654, %v4655
        %v4657 = vsel %vm652, %v4644, 0.0
        %v4658 = vadd.f32 %v4656, %v4657
        %v4659 = vsel %vm652, %v4645, 0.0
        %v4660 = vadd.f32 %v4658, %v4659
        %v4661 = vrot.slane %v4660, 4
        %v4662 = vadd.f32 %v4660, %v4661
        %v4663 = vrot.slane %v4662, 2
        %v4664 = vadd.f32 %v4662, %v4663
        %v4665 = vrot.slane %v4664, 1
        %v4666 = vadd.f32 %v4664, %v4665
        %v4667 = vmul.f32 %v2578, %v4630
        %v4668 = vmul.f32 %v2580, %v4631
        %v4669 = vmul.f32 %v2582, %v4632
        %v4670 = vmul.f32 %v2584, %v4633
        %v4671 = vmul.f32 %v2586, %v4634
        %v4672 = vmul.f32 %v2588, %v4635
        %v4673 = vmul.f32 %v2590, %v4636
        %v4674 = vmul.f32 %v2592, %v4637
        %v4675 = vadd.f32 %v4667, %v3461
        %v4676 = vadd.f32 %v4668, %v3462
        %v4677 = vadd.f32 %v4669, %v3463
        %v4678 = vadd.f32 %v4670, %v3464
        %v4679 = vadd.f32 %v4671, %v3465
        %v4680 = vadd.f32 %v4672, %v3466
        %v4681 = vadd.f32 %v4673, %v3467
        %v4682 = vadd.f32 %v4674, %v3468
        %v4683 = vmul.f32 %v4675, %v3973
        %v4684 = vmul.f32 %v4676, %v3977
        %v4685 = vmul.f32 %v4677, %v3981
        %v4686 = vmul.f32 %v4678, %v3985
        %v4687 = vmul.f32 %v4679, %v3989
        %v4688 = vmul.f32 %v4680, %v3993
        %v4689 = vmul.f32 %v4681, %v3997
        %v4690 = vmul.f32 %v4682, %v4001
        %v4691 = vsel %vm652, %v4683, 0.0
        %v4692 = vsel %vm652, %v4684, 0.0
        %v4693 = vadd.f32 %v4691, %v4692
        %v4694 = vsel %vm652, %v4685, 0.0
        %v4695 = vadd.f32 %v4693, %v4694
        %v4696 = vsel %vm652, %v4686, 0.0
        %v4697 = vadd.f32 %v4695, %v4696
        %v4698 = vsel %vm652, %v4687, 0.0
        %v4699 = vadd.f32 %v4697, %v4698
        %v4700 = vsel %vm652, %v4688, 0.0
        %v4701 = vadd.f32 %v4699, %v4700
        %v4702 = vsel %vm652, %v4689, 0.0
        %v4703 = vadd.f32 %v4701, %v4702
        %v4704 = vsel %vm652, %v4690, 0.0
        %v4705 = vadd.f32 %v4703, %v4704
        %v4706 = vrot.slane %v4705, 4
        %v4707 = vadd.f32 %v4705, %v4706
        %v4708 = vrot.slane %v4707, 2
        %v4709 = vadd.f32 %v4707, %v4708
        %v4710 = vrot.slane %v4709, 1
        %v4711 = vadd.f32 %v4709, %v4710
        %v4712 = vmul.f32 %v2594, %v4675
        %v4713 = vmul.f32 %v2596, %v4676
        %v4714 = vmul.f32 %v2598, %v4677
        %v4715 = vmul.f32 %v2600, %v4678
        %v4716 = vmul.f32 %v2602, %v4679
        %v4717 = vmul.f32 %v2604, %v4680
        %v4718 = vmul.f32 %v2606, %v4681
        %v4719 = vmul.f32 %v2608, %v4682
        %v4720 = vadd.f32 %v4712, %v3469
        %v4721 = vadd.f32 %v4713, %v3470
        %v4722 = vadd.f32 %v4714, %v3471
        %v4723 = vadd.f32 %v4715, %v3472
        %v4724 = vadd.f32 %v4716, %v3473
        %v4725 = vadd.f32 %v4717, %v3474
        %v4726 = vadd.f32 %v4718, %v3475
        %v4727 = vadd.f32 %v4719, %v3476
        %v4728 = vmul.f32 %v4720, %v4008
        %v4729 = vmul.f32 %v4721, %v4012
        %v4730 = vmul.f32 %v4722, %v4016
        %v4731 = vmul.f32 %v4723, %v4020
        %v4732 = vmul.f32 %v4724, %v4024
        %v4733 = vmul.f32 %v4725, %v4028
        %v4734 = vmul.f32 %v4726, %v4032
        %v4735 = vmul.f32 %v4727, %v4036
        %v4736 = vsel %vm652, %v4728, 0.0
        %v4737 = vsel %vm652, %v4729, 0.0
        %v4738 = vadd.f32 %v4736, %v4737
        %v4739 = vsel %vm652, %v4730, 0.0
        %v4740 = vadd.f32 %v4738, %v4739
        %v4741 = vsel %vm652, %v4731, 0.0
        %v4742 = vadd.f32 %v4740, %v4741
        %v4743 = vsel %vm652, %v4732, 0.0
        %v4744 = vadd.f32 %v4742, %v4743
        %v4745 = vsel %vm652, %v4733, 0.0
        %v4746 = vadd.f32 %v4744, %v4745
        %v4747 = vsel %vm652, %v4734, 0.0
        %v4748 = vadd.f32 %v4746, %v4747
        %v4749 = vsel %vm652, %v4735, 0.0
        %v4750 = vadd.f32 %v4748, %v4749
        %v4751 = vrot.slane %v4750, 4
        %v4752 = vadd.f32 %v4750, %v4751
        %v4753 = vrot.slane %v4752, 2
        %v4754 = vadd.f32 %v4752, %v4753
        %v4755 = vrot.slane %v4754, 1
        %v4756 = vadd.f32 %v4754, %v4755
        %vm4757 = vcmask 1040384
        %v4758 = vsel %vm4757, %v4081, %v4126
        %vm4759 = vcmask 1041408
        %v4760 = vsel %vm4759, %v4758, %v4171
        %vm4761 = vcmask 1042432
        %v4762 = vsel %vm4761, %v4760, %v4216
        %vm4763 = vcmask 1043456
        %v4764 = vsel %vm4763, %v4762, %v4261
        %vm4765 = vcmask 1044480
        %v4766 = vsel %vm4765, %v4764, %v4306
        %vm4767 = vcmask 1045504
        %v4768 = vsel %vm4767, %v4766, %v4351
        %vm4769 = vcmask 1046528
        %v4770 = vsel %vm4769, %v4768, %v4396
        %v4771 = vsel %vm4757, %v4441, %v4486
        %v4772 = vsel %vm4759, %v4771, %v4531
        %v4773 = vsel %vm4761, %v4772, %v4576
        %v4774 = vsel %vm4763, %v4773, %v4621
        %v4775 = vsel %vm4765, %v4774, %v4666
        %v4776 = vsel %vm4767, %v4775, %v4711
        %v4777 = vsel %vm4769, %v4776, %v4756
        %s4778 = scalar_lea.vmem [#allocation4], %s2032
        %4779 = vst.msk [vmem:[%s4778] sm:$0xff] %vm652, %v4770
        %4780 = vst.msk [vmem:[%s4778 + $0x8] sm:$0xff] %vm652, %v4777
      $region69: #{tpu_custom_call.1} parent=59 // loop_footer
        %s2023 = sadd.s32 1, %s2019
      $region70: #{tpu_custom_call.1} parent=59 // loop_footer_branch
        %2018 = sbr.rel target = $region66
      $region71: #{tpu_custom_call.1} parent=59 // loop_exit
        _
      %4781 = vst.msk [vmem:[#allocation3] sm:$0xff] %vm652, %v2024
      %4782 = vst.msk [vmem:[#allocation3 + $0x8] sm:$0xff] %vm652, %v2025
      %4783 = vst.msk [vmem:[#allocation3 + $0x10] sm:$0xff] %vm652, %v2026
      %4784 = vst.msk [vmem:[#allocation3 + $0x18] sm:$0xff] %vm652, %v2027
      %4785 = vst.msk [vmem:[#allocation3 + $0x20] sm:$0xff] %vm652, %v2028
      %4786 = vst.msk [vmem:[#allocation3 + $0x28] sm:$0xff] %vm652, %v2029
      %4787 = vst.msk [vmem:[#allocation3 + $0x30] sm:$0xff] %vm652, %v2030
      %4788 = vst.msk [vmem:[#allocation3 + $0x38] sm:$0xff] %vm652, %v2031
      %v4789 = vld [vmem:[#allocation4] sm:$0xff]
      %v4790 = vld [vmem:[#allocation4 + $0x8] sm:$0xff]
      %v4791 = vld [vmem:[#allocation4 + $0x10] sm:$0xff]
      %v4792 = vld [vmem:[#allocation4 + $0x18] sm:$0xff]
      %v4793 = vld [vmem:[#allocation4 + $0x20] sm:$0xff]
      %v4794 = vld [vmem:[#allocation4 + $0x28] sm:$0xff]
      %v4795 = vld [vmem:[#allocation4 + $0x30] sm:$0xff]
      %v4796 = vld [vmem:[#allocation4 + $0x38] sm:$0xff]
      %v4797 = vld [vmem:[#allocation4 + $0x40] sm:$0xff]
      %v4798 = vld [vmem:[#allocation4 + $0x48] sm:$0xff]
      %v4799 = vld [vmem:[#allocation4 + $0x50] sm:$0xff]
      %v4800 = vld [vmem:[#allocation4 + $0x58] sm:$0xff]
      %v4801 = vld [vmem:[#allocation4 + $0x60] sm:$0xff]
      %v4802 = vld [vmem:[#allocation4 + $0x68] sm:$0xff]
      %v4803 = vld [vmem:[#allocation4 + $0x70] sm:$0xff]
      %v4804 = vld [vmem:[#allocation4 + $0x78] sm:$0xff]
      %v4805 = vld [vmem:[#allocation4 + $0x80] sm:$0xff]
      %v4806 = vld [vmem:[#allocation4 + $0x88] sm:$0xff]
      %v4807 = vld [vmem:[#allocation4 + $0x90] sm:$0xff]
      %v4808 = vld [vmem:[#allocation4 + $0x98] sm:$0xff]
      %v4809 = vld [vmem:[#allocation4 + $0xa0] sm:$0xff]
      %v4810 = vld [vmem:[#allocation4 + $0xa8] sm:$0xff]
      %v4811 = vld [vmem:[#allocation4 + $0xb0] sm:$0xff]
      %v4812 = vld [vmem:[#allocation4 + $0xb8] sm:$0xff]
      %v4813 = vld [vmem:[%s8] sm:$0x1]
      %v4815 = vlaneseq
      %v4816 = vshrl.u32 %v4815, 7
      %v4817 = vsub.s32 0, %v4816
      %v4818 = vrot.slane %v4813, %v4817
      %v4820 = vmul.f32 %v1089, %v4818
      %v4821 = vmul.f32 %v1090, %v4818
      %v4822 = vmul.f32 %v1091, %v4818
      %v4823 = vmul.f32 %v1092, %v4818
      %v4824 = vmul.f32 %v1093, %v4818
      %v4825 = vmul.f32 %v1094, %v4818
      %v4826 = vmul.f32 %v1095, %v4818
      %v4827 = vmul.f32 %v1096, %v4818
      %v4828 = vmul.f32 %v1097, %v4818
      %v4829 = vmul.f32 %v1098, %v4818
      %v4830 = vmul.f32 %v1099, %v4818
      %v4831 = vmul.f32 %v1100, %v4818
      %v4832 = vmul.f32 %v1101, %v4818
      %v4833 = vmul.f32 %v1102, %v4818
      %v4834 = vmul.f32 %v1103, %v4818
      %v4835 = vmul.f32 %v1104, %v4818
      %v4836 = vmul.f32 %v1105, %v4818
      %v4837 = vmul.f32 %v1106, %v4818
      %v4838 = vmul.f32 %v1107, %v4818
      %v4839 = vmul.f32 %v1108, %v4818
      %v4840 = vmul.f32 %v1109, %v4818
      %v4841 = vmul.f32 %v1110, %v4818
      %v4842 = vmul.f32 %v1111, %v4818
      %v4843 = vmul.f32 %v1112, %v4818
      %v4844 = vadd.f32 %v4789, %v4820
      %v4845 = vadd.f32 %v4790, %v4821
      %v4846 = vadd.f32 %v4791, %v4822
      %v4847 = vadd.f32 %v4792, %v4823
      %v4848 = vadd.f32 %v4793, %v4824
      %v4849 = vadd.f32 %v4794, %v4825
      %v4850 = vadd.f32 %v4795, %v4826
      %v4851 = vadd.f32 %v4796, %v4827
      %v4852 = vadd.f32 %v4797, %v4828
      %v4853 = vadd.f32 %v4798, %v4829
      %v4854 = vadd.f32 %v4799, %v4830
      %v4855 = vadd.f32 %v4800, %v4831
      %v4856 = vadd.f32 %v4801, %v4832
      %v4857 = vadd.f32 %v4802, %v4833
      %v4858 = vadd.f32 %v4803, %v4834
      %v4859 = vadd.f32 %v4804, %v4835
      %v4860 = vadd.f32 %v4805, %v4836
      %v4861 = vadd.f32 %v4806, %v4837
      %v4862 = vadd.f32 %v4807, %v4838
      %v4863 = vadd.f32 %v4808, %v4839
      %v4864 = vadd.f32 %v4809, %v4840
      %v4865 = vadd.f32 %v4810, %v4841
      %v4866 = vadd.f32 %v4811, %v4842
      %v4867 = vadd.f32 %v4812, %v4843
      %v4868 = vsub.f32 0.0, %v536
      %v4869 = vsub.f32 0.0, %v540
      %v4870 = vsub.f32 0.0, %v546
      %v4871 = vsub.f32 0.0, %v550
      %v4872 = vsub.f32 0.0, %v556
      %v4873 = vsub.f32 0.0, %v560
      %v4874 = vsub.f32 0.0, %v566
      %v4875 = vsub.f32 0.0, %v570
      %v4876 = vsub.f32 0.0, %v576
      %v4877 = vsub.f32 0.0, %v580
      %v4878 = vsub.f32 0.0, %v586
      %v4879 = vsub.f32 0.0, %v590
      %v4880 = vsub.f32 0.0, %v596
      %v4881 = vsub.f32 0.0, %v600
      %v4882 = vsub.f32 0.0, %v606
      %v4883 = vsub.f32 0.0, %v610
      %v4884 = vsub.f32 0.0, %v616
      %v4885 = vsub.f32 0.0, %v620
      %v4886 = vsub.f32 0.0, %v626
      %v4887 = vsub.f32 0.0, %v630
      %v4888 = vsub.f32 0.0, %v636
      %v4889 = vsub.f32 0.0, %v640
      %v4890 = vsub.f32 0.0, %v646
      %v4891 = vsub.f32 0.0, %v650
      %v4892 = vmul.f32 %v4868, 1.442695
      %v4893 = vpow.pop %v4892
      %v4894 = vmul.f32 %v4869, 1.442695
      %v4895 = vpow.pop %v4894
      %v4896 = vmul.f32 %v4870, 1.442695
      %v4897 = vpow.pop %v4896
      %v4898 = vmul.f32 %v4871, 1.442695
      %v4899 = vpow.pop %v4898
      %v4900 = vmul.f32 %v4872, 1.442695
      %v4901 = vpow.pop %v4900
      %v4902 = vmul.f32 %v4873, 1.442695
      %v4903 = vpow.pop %v4902
      %v4904 = vmul.f32 %v4874, 1.442695
      %v4905 = vpow.pop %v4904
      %v4906 = vmul.f32 %v4875, 1.442695
      %v4907 = vpow.pop %v4906
      %v4908 = vmul.f32 %v4876, 1.442695
      %v4909 = vpow.pop %v4908
      %v4910 = vmul.f32 %v4877, 1.442695
      %v4911 = vpow.pop %v4910
      %v4912 = vmul.f32 %v4878, 1.442695
      %v4913 = vpow.pop %v4912
      %v4914 = vmul.f32 %v4879, 1.442695
      %v4915 = vpow.pop %v4914
      %v4916 = vmul.f32 %v4880, 1.442695
      %v4917 = vpow.pop %v4916
      %v4918 = vmul.f32 %v4881, 1.442695
      %v4919 = vpow.pop %v4918
      %v4920 = vmul.f32 %v4882, 1.442695
      %v4921 = vpow.pop %v4920
      %v4922 = vmul.f32 %v4883, 1.442695
      %v4923 = vpow.pop %v4922
      %v4924 = vmul.f32 %v4884, 1.442695
      %v4925 = vpow.pop %v4924
      %v4926 = vmul.f32 %v4885, 1.442695
      %v4927 = vpow.pop %v4926
      %v4928 = vmul.f32 %v4886, 1.442695
      %v4929 = vpow.pop %v4928
      %v4930 = vmul.f32 %v4887, 1.442695
      %v4931 = vpow.pop %v4930
      %v4932 = vmul.f32 %v4888, 1.442695
      %v4933 = vpow.pop %v4932
      %v4934 = vmul.f32 %v4889, 1.442695
      %v4935 = vpow.pop %v4934
      %v4936 = vmul.f32 %v4890, 1.442695
      %v4937 = vpow.pop %v4936
      %v4938 = vmul.f32 %v4891, 1.442695
      %v4939 = vpow.pop %v4938
      %v4940 = vadd.f32 %v4893, 1.0
      %v4941 = vadd.f32 %v4895, 1.0
      %v4942 = vadd.f32 %v4897, 1.0
      %v4943 = vadd.f32 %v4899, 1.0
      %v4944 = vadd.f32 %v4901, 1.0
      %v4945 = vadd.f32 %v4903, 1.0
      %v4946 = vadd.f32 %v4905, 1.0
      %v4947 = vadd.f32 %v4907, 1.0
      %v4948 = vadd.f32 %v4909, 1.0
      %v4949 = vadd.f32 %v4911, 1.0
      %v4950 = vadd.f32 %v4913, 1.0
      %v4951 = vadd.f32 %v4915, 1.0
      %v4952 = vadd.f32 %v4917, 1.0
      %v4953 = vadd.f32 %v4919, 1.0
      %v4954 = vadd.f32 %v4921, 1.0
      %v4955 = vadd.f32 %v4923, 1.0
      %v4956 = vadd.f32 %v4925, 1.0
      %v4957 = vadd.f32 %v4927, 1.0
      %v4958 = vadd.f32 %v4929, 1.0
      %v4959 = vadd.f32 %v4931, 1.0
      %v4960 = vadd.f32 %v4933, 1.0
      %v4961 = vadd.f32 %v4935, 1.0
      %v4962 = vadd.f32 %v4937, 1.0
      %v4963 = vadd.f32 %v4939, 1.0
      %v4964 = vrcp.pop %v4940
      %v4965 = vrcp.pop %v4941
      %v4966 = vrcp.pop %v4942
      %v4967 = vrcp.pop %v4943
      %v4968 = vrcp.pop %v4944
      %v4969 = vrcp.pop %v4945
      %v4970 = vrcp.pop %v4946
      %v4971 = vrcp.pop %v4947
      %v4972 = vrcp.pop %v4948
      %v4973 = vrcp.pop %v4949
      %v4974 = vrcp.pop %v4950
      %v4975 = vrcp.pop %v4951
      %v4976 = vrcp.pop %v4952
      %v4977 = vrcp.pop %v4953
      %v4978 = vrcp.pop %v4954
      %v4979 = vrcp.pop %v4955
      %v4980 = vrcp.pop %v4956
      %v4981 = vrcp.pop %v4957
      %v4982 = vrcp.pop %v4958
      %v4983 = vrcp.pop %v4959
      %v4984 = vrcp.pop %v4960
      %v4985 = vrcp.pop %v4961
      %v4986 = vrcp.pop %v4962
      %v4987 = vrcp.pop %v4963
      %v4988 = vmul.f32 %v536, %v4964
      %v4989 = vmul.f32 %v540, %v4965
      %v4990 = vmul.f32 %v546, %v4966
      %v4991 = vmul.f32 %v550, %v4967
      %v4992 = vmul.f32 %v556, %v4968
      %v4993 = vmul.f32 %v560, %v4969
      %v4994 = vmul.f32 %v566, %v4970
      %v4995 = vmul.f32 %v570, %v4971
      %v4996 = vmul.f32 %v576, %v4972
      %v4997 = vmul.f32 %v580, %v4973
      %v4998 = vmul.f32 %v586, %v4974
      %v4999 = vmul.f32 %v590, %v4975
      %v5000 = vmul.f32 %v596, %v4976
      %v5001 = vmul.f32 %v600, %v4977
      %v5002 = vmul.f32 %v606, %v4978
      %v5003 = vmul.f32 %v610, %v4979
      %v5004 = vmul.f32 %v616, %v4980
      %v5005 = vmul.f32 %v620, %v4981
      %v5006 = vmul.f32 %v626, %v4982
      %v5007 = vmul.f32 %v630, %v4983
      %v5008 = vmul.f32 %v636, %v4984
      %v5009 = vmul.f32 %v640, %v4985
      %v5010 = vmul.f32 %v646, %v4986
      %v5011 = vmul.f32 %v650, %v4987
      %v5012 = vmul.f32 %v4844, %v4988
      %v5013 = vmul.f32 %v4845, %v4989
      %v5014 = vmul.f32 %v4846, %v4990
      %v5015 = vmul.f32 %v4847, %v4991
      %v5016 = vmul.f32 %v4848, %v4992
      %v5017 = vmul.f32 %v4849, %v4993
      %v5018 = vmul.f32 %v4850, %v4994
      %v5019 = vmul.f32 %v4851, %v4995
      %v5020 = vmul.f32 %v4852, %v4996
      %v5021 = vmul.f32 %v4853, %v4997
      %v5022 = vmul.f32 %v4854, %v4998
      %v5023 = vmul.f32 %v4855, %v4999
      %v5024 = vmul.f32 %v4856, %v5000
      %v5025 = vmul.f32 %v4857, %v5001
      %v5026 = vmul.f32 %v4858, %v5002
      %v5027 = vmul.f32 %v4859, %v5003
      %v5028 = vmul.f32 %v4860, %v5004
      %v5029 = vmul.f32 %v4861, %v5005
      %v5030 = vmul.f32 %v4862, %v5006
      %v5031 = vmul.f32 %v4863, %v5007
      %v5032 = vmul.f32 %v4864, %v5008
      %v5033 = vmul.f32 %v4865, %v5009
      %v5034 = vmul.f32 %v4866, %v5010
      %v5035 = vmul.f32 %v4867, %v5011
      %v5036 = vpack.c.bf16 %v5013, %v5012
      %v5037 = vpack.c.bf16 %v5015, %v5014
      %v5038 = vpack.c.bf16 %v5017, %v5016
      %v5039 = vpack.c.bf16 %v5019, %v5018
      %v5040 = vpack.c.bf16 %v5021, %v5020
      %v5041 = vpack.c.bf16 %v5023, %v5022
      %v5042 = vpack.c.bf16 %v5025, %v5024
      %v5043 = vpack.c.bf16 %v5027, %v5026
      %v5044 = vpack.c.bf16 %v5029, %v5028
      %v5045 = vpack.c.bf16 %v5031, %v5030
      %v5046 = vpack.c.bf16 %v5033, %v5032
      %v5047 = vpack.c.bf16 %v5035, %v5034
      %v5048 = vld [vmem:[%s9] sm:$0xf]
      %v5049 = vld [vmem:[%s9 + $0x4] sm:$0xf]
      %v5050 = vld [vmem:[%s9 + $0x8] sm:$0xf]
      %v5051 = vld [vmem:[%s9 + $0xc] sm:$0xf]
      %v5056 = vunpack.c.l.b16 %v5048
      %v5057 = vunpack.c.l.b16 %v5049
      %v5058 = vunpack.c.l.b16 %v5050
      %v5059 = vunpack.c.l.b16 %v5051
      %v5060 = vpack.c.b16 %v5057, %v5056
      %v5061 = vpack.c.b16 %v5059, %v5058
      %v5065 = vsel %vm652, %v5036, 0
      %v5068 = vsel %vm652, %v5037, 0
      %v5071 = vsel %vm652, %v5038, 0
      %v5074 = vsel %vm652, %v5039, 0
      %v5077 = vsel %vm652, %v5040, 0
      %v5080 = vsel %vm652, %v5041, 0
      %v5083 = vsel %vm652, %v5042, 0
      %v5086 = vsel %vm652, %v5043, 0
      %v5089 = vsel %vm652, %v5044, 0
      %v5092 = vsel %vm652, %v5045, 0
      %v5095 = vsel %vm652, %v5046, 0
      %v5098 = vsel %vm652, %v5047, 0
      %5100 = vmatprep.subr.bf16.mxu0 0
      %5101 = vmatpush1.bf16.msra.mxu0 0
      %5102 = vmatprep.subr.bf16.mxu0 0
      %5103 = vmatpush1.bf16.msra.mxu0 0
      %5104 = vmatprep.subr.bf16.mxu0 0
      %5105 = vmatpush1.bf16.msra.mxu0 0
      %5106 = vmatprep.subr.bf16.mxu0 0
      %5107 = vmatpush1.bf16.msra.mxu0 0
      %5108 = vmatprep.subr.bf16.mxu0 0
      %5109 = vmatpush1.bf16.msra.mxu0 0
      %5110 = vmatprep.subr.bf16.mxu0 0
      %5111 = vmatpush1.bf16.msra.mxu0 0
      %5112 = vmatprep.subr.bf16.mxu0 0
      %5113 = vmatpush1.bf16.msra.mxu0 %v5061
      %5114 = vmatprep.subr.bf16.mxu0 0
      %5115 = vmatpush1.bf16.msra.mxu0 %v5060
      %5116 = vmatprep.subr.bf16.mxu0 0
      %5117 = vmatpush2.bf16.msra.mxu0 0
      %5118 = vmatprep.subr.bf16.mxu0 0
      %5119 = vmatpush2.bf16.msra.mxu0 0
      %5120 = vmatprep.subr.bf16.mxu0 0
      %5121 = vmatpush2.bf16.msra.mxu0 0
      %5122 = vmatprep.subr.bf16.mxu0 0
      %5123 = vmatpush2.bf16.msra.mxu0 0
      %5124 = vmatprep.subr.bf16.mxu0 0
      %5125 = vmatpush2.bf16.msra.mxu0 0
      %5126 = vmatprep.subr.bf16.mxu0 0
      %5127 = vmatpush2.bf16.msra.mxu0 0
      %5128 = vmatprep.subr.bf16.mxu0 0
      %5129 = vmatpush2.bf16.msra.mxu0 0
      %5130 = vmatprep.subr.bf16.mxu0 0
      %5131 = vmatpush2.bf16.msra.mxu0 0
      %5132 = vmatprep.mubr.bf16.mxu0 0
      %5133 = vmatmul.mubr.bf16.gmra.mxu0 %v5065
      %v5134 = vpop.f32.mrf.mxu0
      %v5135 = vadd.f32 0.0, %v5134
      %v5136 = vpop.f32.mrf.mxu0
      %v5137 = vpop.f32.mrf.mxu0
      %v5138 = vadd.f32 0.0, %v5137
      %v5139 = vpop.f32.mrf.mxu0
      %5140 = vmatprep.mubr.bf16.mxu0 0
      %5141 = vmatmul.mubr.bf16.gmra.mxu0 %v5068
      %v5142 = vpop.f32.mrf.mxu0
      %v5143 = vadd.f32 0.0, %v5142
      %v5144 = vpop.f32.mrf.mxu0
      %v5145 = vpop.f32.mrf.mxu0
      %v5146 = vadd.f32 0.0, %v5145
      %v5147 = vpop.f32.mrf.mxu0
      %5148 = vmatprep.mubr.bf16.mxu0 0
      %5149 = vmatmul.mubr.bf16.gmra.mxu0 %v5071
      %v5150 = vpop.f32.mrf.mxu0
      %v5151 = vadd.f32 0.0, %v5150
      %v5152 = vpop.f32.mrf.mxu0
      %v5153 = vpop.f32.mrf.mxu0
      %v5154 = vadd.f32 0.0, %v5153
      %v5155 = vpop.f32.mrf.mxu0
      %5156 = vmatprep.mubr.bf16.mxu0 0
      %5157 = vmatmul.mubr.bf16.gmra.mxu0 %v5074
      %v5158 = vpop.f32.mrf.mxu0
      %v5159 = vadd.f32 0.0, %v5158
      %v5160 = vpop.f32.mrf.mxu0
      %v5161 = vpop.f32.mrf.mxu0
      %v5162 = vadd.f32 0.0, %v5161
      %v5163 = vpop.f32.mrf.mxu0
      %5164 = vmatprep.mubr.bf16.mxu0 0
      %5165 = vmatmul.mubr.bf16.gmra.mxu0 %v5077
      %v5166 = vpop.f32.mrf.mxu0
      %v5167 = vadd.f32 0.0, %v5166
      %v5168 = vpop.f32.mrf.mxu0
      %v5169 = vpop.f32.mrf.mxu0
      %v5170 = vadd.f32 0.0, %v5169
      %v5171 = vpop.f32.mrf.mxu0
      %5172 = vmatprep.mubr.bf16.mxu0 0
      %5173 = vmatmul.mubr.bf16.gmra.mxu0 %v5080
      %v5174 = vpop.f32.mrf.mxu0
      %v5175 = vadd.f32 0.0, %v5174
      %v5176 = vpop.f32.mrf.mxu0
      %v5177 = vpop.f32.mrf.mxu0
      %v5178 = vadd.f32 0.0, %v5177
      %v5179 = vpop.f32.mrf.mxu0
      %5180 = vmatprep.mubr.bf16.mxu0 0
      %5181 = vmatmul.mubr.bf16.gmra.mxu0 %v5083
      %v5182 = vpop.f32.mrf.mxu0
      %v5183 = vadd.f32 0.0, %v5182
      %v5184 = vpop.f32.mrf.mxu0
      %v5185 = vpop.f32.mrf.mxu0
      %v5186 = vadd.f32 0.0, %v5185
      %v5187 = vpop.f32.mrf.mxu0
      %5188 = vmatprep.mubr.bf16.mxu0 0
      %5189 = vmatmul.mubr.bf16.gmra.mxu0 %v5086
      %v5190 = vpop.f32.mrf.mxu0
      %v5191 = vadd.f32 0.0, %v5190
      %v5192 = vpop.f32.mrf.mxu0
      %v5193 = vpop.f32.mrf.mxu0
      %v5194 = vadd.f32 0.0, %v5193
      %v5195 = vpop.f32.mrf.mxu0
      %5196 = vmatprep.mubr.bf16.mxu0 0
      %5197 = vmatmul.mubr.bf16.gmra.mxu0 %v5089
      %v5198 = vpop.f32.mrf.mxu0
      %v5199 = vadd.f32 0.0, %v5198
      %v5200 = vpop.f32.mrf.mxu0
      %v5201 = vpop.f32.mrf.mxu0
      %v5202 = vadd.f32 0.0, %v5201
      %v5203 = vpop.f32.mrf.mxu0
      %5204 = vmatprep.mubr.bf16.mxu0 0
      %5205 = vmatmul.mubr.bf16.gmra.mxu0 %v5092
      %v5206 = vpop.f32.mrf.mxu0
      %v5207 = vadd.f32 0.0, %v5206
      %v5208 = vpop.f32.mrf.mxu0
      %v5209 = vpop.f32.mrf.mxu0
      %v5210 = vadd.f32 0.0, %v5209
      %v5211 = vpop.f32.mrf.mxu0
      %5212 = vmatprep.mubr.bf16.mxu0 0
      %5213 = vmatmul.mubr.bf16.gmra.mxu0 %v5095
      %v5214 = vpop.f32.mrf.mxu0
      %v5215 = vadd.f32 0.0, %v5214
      %v5216 = vpop.f32.mrf.mxu0
      %v5217 = vpop.f32.mrf.mxu0
      %v5218 = vadd.f32 0.0, %v5217
      %v5219 = vpop.f32.mrf.mxu0
      %5220 = vmatprep.mubr.bf16.mxu0 0
      %5221 = vmatmul.mubr.bf16.gmra.mxu0 %v5098
      %v5222 = vpop.f32.mrf.mxu0
      %v5223 = vadd.f32 0.0, %v5222
      %v5224 = vpop.f32.mrf.mxu0
      %v5225 = vpop.f32.mrf.mxu0
      %v5226 = vadd.f32 0.0, %v5225
      %v5227 = vpop.f32.mrf.mxu0
      %5228 = vdwg.mxu0
      %5229 = vst.msk [vmem:[%s397] sm:$0xff] %vm462, %v5135
      %5230 = vst.msk [vmem:[%s397 + $0x8] sm:$0xff] %vm462, %v5138
      %5231 = vst.msk [vmem:[%s397 + $0x10] sm:$0xff] %vm462, %v5143
      %5232 = vst.msk [vmem:[%s397 + $0x18] sm:$0xff] %vm462, %v5146
      %5233 = vst.msk [vmem:[%s397 + $0x20] sm:$0xff] %vm462, %v5151
      %5234 = vst.msk [vmem:[%s397 + $0x28] sm:$0xff] %vm462, %v5154
      %5235 = vst.msk [vmem:[%s397 + $0x30] sm:$0xff] %vm462, %v5159
      %5236 = vst.msk [vmem:[%s397 + $0x38] sm:$0xff] %vm462, %v5162
      %5237 = vst.msk [vmem:[%s397 + $0x40] sm:$0xff] %vm462, %v5167
      %5238 = vst.msk [vmem:[%s397 + $0x48] sm:$0xff] %vm462, %v5170
      %5239 = vst.msk [vmem:[%s397 + $0x50] sm:$0xff] %vm462, %v5175
      %5240 = vst.msk [vmem:[%s397 + $0x58] sm:$0xff] %vm462, %v5178
      %5241 = vst.msk [vmem:[%s397 + $0x60] sm:$0xff] %vm462, %v5183
      %5242 = vst.msk [vmem:[%s397 + $0x68] sm:$0xff] %vm462, %v5186
      %5243 = vst.msk [vmem:[%s397 + $0x70] sm:$0xff] %vm462, %v5191
      %5244 = vst.msk [vmem:[%s397 + $0x78] sm:$0xff] %vm462, %v5194
      %5245 = vst.msk [vmem:[%s397 + $0x80] sm:$0xff] %vm462, %v5199
      %5246 = vst.msk [vmem:[%s397 + $0x88] sm:$0xff] %vm462, %v5202
      %5247 = vst.msk [vmem:[%s397 + $0x90] sm:$0xff] %vm462, %v5207
      %5248 = vst.msk [vmem:[%s397 + $0x98] sm:$0xff] %vm462, %v5210
      %5249 = vst.msk [vmem:[%s397 + $0xa0] sm:$0xff] %vm462, %v5215
      %5250 = vst.msk [vmem:[%s397 + $0xa8] sm:$0xff] %vm462, %v5218
      %5251 = vst.msk [vmem:[%s397 + $0xb0] sm:$0xff] %vm462, %v5223
      %5252 = vst.msk [vmem:[%s397 + $0xb8] sm:$0xff] %vm462, %v5226
      %s5253 = smul.u32 24, %s26
      %p5254 = scmp.lt.s32.totalorder %s25, 1
      %s5255 = scalar_select %p5254, %s25, 1
      %p5256 = scmp.lt.s32.totalorder %s5253, 47
      %s5257 = scalar_select %p5256, %s5253, 47
      %s5258 = smul.addr %s5255, 48
      %s5259 = sadd.s32 %s5257, %s5258
      %s5260 = smul.addr %s5259, 8
      %s5261 = scalar_lea.vmem %s10, %s5260
      // Predicated region
      $region72: #{tpu_custom_call.1} parent=59 // pred_check
        %p5262 = pneg %p270
      $region73: #{tpu_custom_call.1} parent=59 // pred_check_branch
        %5264 = sbr.rel (%p5262) target = $region75
      $region74: #{tpu_custom_call.1} parent=59 // pred_region
        %s5265 = smul.u32 24, %s26
      $region75: #{tpu_custom_call.1} parent=59 // pred_fallthru
        _
    $region60: #{tpu_custom_call.1} parent=5 // pred_fallthru
      _
    %p5266 = scmp.le.s32.totalorder 2, %s16
    // Predicated region
    $region76: #{tpu_custom_call.1} parent=5 // pred_check
      %p5267 = pneg %p5266
    $region77: #{tpu_custom_call.1} parent=5 // pred_check_branch
      %5269 = sbr.rel (%p5267) target = $region79
    $region78: #{tpu_custom_call.1} parent=5 // pred_region
      %s5270 = ssub.s32 %s16, 2
      // Predicated region
      $region80: #{tpu_custom_call.1} parent=78 // pred_check
        %p5271 = pneg %p276
      $region81: #{tpu_custom_call.1} parent=78 // pred_check_branch
        %5273 = sbr.rel (%p5271) target = $region83
      $region82: #{tpu_custom_call.1} parent=78 // pred_region
        %s5274 = smul.u32 24, %s28
        %p5275 = scmp.lt.s32.totalorder %s27, 1
        %s5276 = scalar_select %p5275, %s27, 1
        %p5277 = scmp.lt.s32.totalorder %s5274, 47
        %s5278 = scalar_select %p5277, %s5274, 47
        %s5279 = smul.addr %s5276, 48
        %s5280 = sadd.s32 %s5278, %s5279
        %s5281 = smul.addr %s5280, 8
        %s5282 = scalar_lea.vmem %s10, %s5281
      $region83: #{tpu_custom_call.1} parent=78 // pred_fallthru
        _
    $region79: #{tpu_custom_call.1} parent=5 // pred_fallthru
      _
  $region6: #{tpu_custom_call.1} parent=0 // loop_footer
    %s20 = sadd.s32 1, %s16
  $region7: #{tpu_custom_call.1} parent=0 // loop_footer_branch
    %15 = sbr.rel target = $region3
  $region8: #{tpu_custom_call.1} parent=0 // loop_exit
    _

</llo_original>
